<compile_context>
chip_gen: v5e
topology: v5e:2x2
jax: 0.10.0
libtpu: 0.0.40
codegen_flags: <defaults>
</compile_context>

<pallas_src>
import functools
from typing import NamedTuple, Tuple

import jax
import jax.numpy as jnp
from jax.experimental import pallas as pl
from jax.experimental.pallas import tpu as pltpu

LANES = 128


# ----------------------------- encoder kernel -------------------------------

def _encoder_kernel(x_ref, w_ref, b_ref, o_ref, *, n_in):
    x = x_ref[...]                       # (tile_m, C)
    w = w_ref[...]                       # (C, Fpad)
    y = b_ref[...]                       # (1, Fpad)
    for c in range(n_in):                # C broadcast FMAs on the VPU
        y = y + x[:, c:c + 1] * w[c:c + 1, :]
    o_ref[...] = jnp.maximum(y, 0.0).astype(o_ref.dtype)


def encoder_pallas(x, w, b, *, max_rows_per_block=8192):
    """relu(x @ w + b) 1x1-conv encoder; output is 128-lane padded (dense vst)."""
    M, C = x.shape
    Cw, Fp = w.shape
    assert C == Cw and Fp % LANES == 0
    # Force a single grid step at small sizes (per perf review); only split
    # the row axis when the slab is genuinely large.
    num_blocks = 1
    if M > max_rows_per_block:
        num_blocks = pl.cdiv(M, max_rows_per_block)
        while M % num_blocks or (M // num_blocks) % 8:
            num_blocks += 1
    tile_m = M // num_blocks
    return pl.pallas_call(
        functools.partial(_encoder_kernel, n_in=C),
        out_shape=jax.ShapeDtypeStruct((M, Fp), jnp.float32),
        grid=(num_blocks,),
        in_specs=[
            pl.BlockSpec((tile_m, C), lambda i: (i, 0)),
            pl.BlockSpec((C, Fp), lambda i: (0, 0)),
            pl.BlockSpec((1, Fp), lambda i: (0, 0)),
        ],
        out_specs=pl.BlockSpec((tile_m, Fp), lambda i: (i, 0)),
        compiler_params=pltpu.CompilerParams(
            dimension_semantics=("arbitrary",)),
    )(x, w, b.reshape(1, Fp))


# ------------------------- fused post-encoder kernel -------------------------

def _mlp_forward(z, weights, skip_flags):
    """MLPWithInputSkips on already-loaded VMEM values.
    concat([y, z]) @ W is rewritten as y @ W_top + z @ W_bot (no lane concat)."""
    y = z
    idx = 0
    for is_skip in skip_flags:
        if is_skip:
            wm, ws, b = weights[idx], weights[idx + 1], weights[idx + 2]
            idx += 3
            y = (jnp.dot(y, wm, preferred_element_type=jnp.float32)
                 + jnp.dot(z, ws, preferred_element_type=jnp.float32) + b)
        else:
            w, b = weights[idx], weights[idx + 1]
            idx += 2
            y = jnp.dot(y, w, preferred_element_type=jnp.float32) + b
        y = jnp.maximum(y, 0.0)
    return y


def _make_fused_kernel(n_cam, n_query, skip_flags, n_xyz, n_dir):
    def kernel(*refs):
        feats_ref, wb_ref, qp_ref, cam_ref = refs[:4]
        pos = 4
        xyz_w = [r[...] for r in refs[pos:pos + n_xyz]]
        pos += n_xyz
        dir_w = [r[...] for r in refs[pos:pos + n_dir]]
        pos += n_dir
        (w1lat_ref, w1qp_ref, w1cam_ref, b1_ref,
         w2_ref, b2_ref, w3_ref, b3_ref) = refs[pos:pos + 8]
        o_ref = refs[-1]

        # --- point / camera-center embeddings (MLPWithInputSkips, fused) ---
        qp_e = _mlp_forward(qp_ref[...], xyz_w, skip_flags)      # (P, hx)
        cam_e = _mlp_forward(cam_ref[...], dir_w, skip_flags)    # (n_cam*P, hd)

        # --- decoder layer 1, concat-free:
        #     h1 = b1 + qp_e @ sum_c(W1_qp_c)
        #          + sum_c [roi_c @ W1_lat_c + cam_c @ W1_cam_c]
        h1 = b1_ref[...] + jnp.dot(qp_e, w1qp_ref[...],
                                   preferred_element_type=jnp.float32)
        for c in range(n_cam):
            # bilinear ROI sampling as an MXU matmul against the VMEM-resident
            # 128-lane feature slab: (P, H*W) @ (H*W, 128)
            roi_c = jnp.dot(wb_ref[c], feats_ref[c],
                            preferred_element_type=jnp.float32)
            h1 = h1 + jnp.dot(roi_c, w1lat_ref[c],
                              preferred_element_type=jnp.float32)
            cam_c = cam_e[c * n_query:(c + 1) * n_query]
            h1 = h1 + jnp.dot(cam_c, w1cam_ref[c],
                              preferred_element_type=jnp.float32)
        h1 = jnp.maximum(h1, 0.0)
        h2 = jnp.maximum(
            jnp.dot(h1, w2_ref[...], preferred_element_type=jnp.float32)
            + b2_ref[...], 0.0)
        out = (jnp.dot(h2, w3_ref[...], preferred_element_type=jnp.float32)
               + b3_ref[...])
        o_ref[...] = out.astype(o_ref.dtype)      # (P, 128) lane-dense store
    return kernel


def fused_post_encoder(feats, wb, qp, cam_in, xyz_flat, dir_flat, dec, *,
                       n_cam, n_query, skip_flags):
    inputs = ([feats, wb, qp, cam_in] + list(xyz_flat) + list(dir_flat)
              + [dec["w1_lat"], dec["w1_qp"], dec["w1_cam"], dec["b1"],
                 dec["w2"], dec["b2"], dec["w3"], dec["b3"]])
    kernel = _make_fused_kernel(n_cam, n_query, skip_flags,
                                len(xyz_flat), len(dir_flat))
    # Single invocation; every operand fits comfortably in VMEM (<1 MiB total),
    # so all arrays are whole-block VMEM residents (no grid, no extra launches).
    return pl.pallas_call(
        kernel,
        out_shape=jax.ShapeDtypeStruct((n_query, LANES), jnp.float32),
    )(*inputs)


# ----------------------------- parameter init -------------------------------

def _init_linear(key, din, dout):
    k1, k2 = jax.random.split(key)
    scale = 1.0 / jnp.sqrt(jnp.float32(din))
    w = jax.random.uniform(k1, (din, dout), jnp.float32, -scale, scale)
    b = jax.random.uniform(k2, (dout,), jnp.float32, -scale, scale)
    return w, b


def _init_mlp_skips_flat(key, n_layers, din, dskip, hidden, skips):
    """Flat [w, b, ...] list; skip-layer weights pre-split into the (hidden)
    and (skip-input) halves matching concat([y, z]) order."""
    flat = []
    for li in range(n_layers):
        is_skip = (li in skips) and li > 0
        d_in = din if li == 0 else (hidden + dskip if is_skip else hidden)
        key, sub = jax.random.split(key)
        w, b = _init_linear(sub, d_in, hidden)
        if is_skip:
            flat += [w[:hidden], w[hidden:], b.reshape(1, hidden)]
        else:
            flat += [w, b.reshape(1, hidden)]
    return flat


def _init_decoder(key, latent, hx, hd, n_cam, hidden, dout):
    per_cam = latent + hx + hd
    dec_in = per_cam * n_cam
    k1, k2, k3 = jax.random.split(key, 3)
    w1, b1 = _init_linear(k1, dec_in, hidden)
    w2, b2 = _init_linear(k2, hidden, hidden)
    w3, b3 = _init_linear(k3, hidden, dout)
    # Split W1 into per-camera / per-component row blocks so the kernel never
    # materializes the per-camera concat; ROI blocks are zero-padded to 128
    # rows to match the 128-lane-padded feature slab; the query-point blocks
    # (shared input across cameras) are pre-summed.
    w1_lat = jnp.zeros((n_cam, LANES, hidden), jnp.float32)
    w1_cam = jnp.zeros((n_cam, hd, hidden), jnp.float32)
    w1_qp = jnp.zeros((hx, hidden), jnp.float32)
    for c in range(n_cam):
        base = c * per_cam
        w1_lat = w1_lat.at[c, :latent].set(w1[base:base + latent])
        w1_qp = w1_qp + w1[base + latent:base + latent + hx]
        w1_cam = w1_cam.at[c].set(w1[base + latent + hx:base + per_cam])
    # 3-wide decoder output -> 128-lane slab, padded ONCE here (not per call).
    w3p = jnp.zeros((hidden, LANES), jnp.float32).at[:, :dout].set(w3)
    b3p = jnp.zeros((LANES,), jnp.float32).at[:dout].set(b3)
    return dict(w1_lat=w1_lat, w1_qp=w1_qp, w1_cam=w1_cam,
                b1=b1.reshape(1, hidden), w2=w2, b2=b2.reshape(1, hidden),
                w3=w3p, b3=b3p.reshape(1, LANES))


def init_params(key, cfg, n_cam, in_channels):
    keys = jax.random.split(key, 4)
    latent = cfg.latent_size
    p = {}
    # image encoder: single 1x1 conv (Backbone stand-in), padded to 128 lanes.
    w_enc, b_enc = _init_linear(keys[0], in_channels, latent)
    p["enc_w"] = jnp.zeros((in_channels, LANES), jnp.float32).at[:, :latent].set(w_enc)
    p["enc_b"] = jnp.zeros((LANES,), jnp.float32).at[:latent].set(b_enc)
    p["mlp_xyz"] = _init_mlp_skips_flat(keys[1], cfg.n_layers_xyz, 3, 3,
                                        cfg.n_hidden_neurons_xyz, cfg.append_xyz)
    p["mlp_dir"] = _init_mlp_skips_flat(keys[2], cfg.n_layers_xyz, 3, 3,
                                        cfg.n_hidden_neurons_dir, cfg.append_xyz)
    p["dec"] = _init_decoder(keys[3], latent, cfg.n_hidden_neurons_xyz,
                             cfg.n_hidden_neurons_dir, n_cam,
                             cfg.decoder_hidden, cfg.decoder_out)
    return p


# ------------------------------ JAX glue -------------------------------------

def bilinear_weight_matrix(uv, H, W):
    """uv (..., 2) pixel coords -> (..., H*W) bilinear sampling-weight rows.
    Lets the ROI sampling run as a single MXU matmul inside the fused kernel
    instead of XLA row gathers (which lower poorly on TPU).
    TODO(synk): at real AirMSPI resolutions this dense matrix gets large;
    switch to scalar-prefetched in-kernel dynamic row reads instead."""
    x, y = uv[..., 0], uv[..., 1]
    x0f, y0f = jnp.floor(x), jnp.floor(y)
    x0 = jnp.clip(x0f.astype(jnp.int32), 0, W - 1)
    x1 = jnp.clip(x0 + 1, 0, W - 1)
    y0 = jnp.clip(y0f.astype(jnp.int32), 0, H - 1)
    y1 = jnp.clip(y0 + 1, 0, H - 1)
    wx = jnp.clip(x - x0f, 0.0, 1.0)
    wy = jnp.clip(y - y0f, 0.0, 1.0)
    cols = jnp.arange(H * W, dtype=jnp.int32)
    onehot = lambda idx: (idx[..., None] == cols).astype(jnp.float32)
    return (((1 - wx) * (1 - wy))[..., None] * onehot(y0 * W + x0)
            + (wx * (1 - wy))[..., None] * onehot(y0 * W + x1)
            + ((1 - wx) * wy)[..., None] * onehot(y1 * W + x0)
            + (wx * wy)[..., None] * onehot(y1 * W + x1))


def project_pointsv2(query_points, cam_pos, cam_proj, H, W):
    # TODO(synk): synthetic AirMSPI camera glue (pinhole-ish projection), not
    # the module's real AirMSPICameras.project_pointsv2.
    P = query_points.shape[0]
    ph = jnp.concatenate([query_points, jnp.ones((P, 1), jnp.float32)], axis=-1)
    uvw = jnp.einsum("cij,pj->cpi", cam_proj, ph)            # (n_cam, P, 3)
    uv = uvw[..., :2] / (jnp.abs(uvw[..., 2:3]) + 1e-3)
    uv = jax.nn.sigmoid(uv) * jnp.array([W - 1, H - 1], jnp.float32)
    dirs = query_points[None, :, :] - cam_pos[:, None, :]     # (n_cam, P, 3)
    cam_centers = dirs / (jnp.linalg.norm(dirs, axis=-1, keepdims=True) + 1e-6)
    return uv, cam_centers


def nemf_forward(params, cfg, image, volume, masks, cam_pos, cam_proj, rng):
    """Training-mode forward of NeMFnetAirMSPI (Vbatch = 1)."""
    if image.ndim == 4:
        image = image[:, :, None, ...]
    Vbatch, n_cam, C, H, W = image.shape
    assert Vbatch == 1  # mirrors the module's eval-path assert

    skip_flags = tuple((li in cfg.append_xyz) and li > 0
                       for li in range(cfg.n_layers_xyz))

    # ---- image encoder (Pallas kernel #1); NHWC, 128-lane feature slab ----
    img_nhwc = image.reshape(n_cam, C, H, W).transpose(0, 2, 3, 1)
    x2d = img_nhwc.reshape(-1, C)                              # (n_cam*H*W, C)
    feats = encoder_pallas(x2d, params["enc_w"], params["enc_b"])
    feats = feats.reshape(n_cam, H * W, LANES)                 # stays NHWC

    # ---- query points from the volume (mask-weighted top-k selection) ----
    Nx, Ny, Nz = volume.shape[1:]
    m = masks[0].reshape(-1).astype(jnp.float32)
    score = m * jax.random.uniform(rng, (Nx * Ny * Nz,), jnp.float32) - (1.0 - m)
    # TODO(synk): PyTorch samples strictly inside the mask with a dynamic
    # count; a static top-k over mask-weighted scores keeps shapes static.
    _, flat_idx = jax.lax.top_k(score, cfg.n_query)
    ix = flat_idx // (Ny * Nz)
    iy = (flat_idx // Nz) % Ny
    iz = flat_idx % Nz
    query_points = jnp.stack(
        [(ix + 0.5) / Nx, (iy + 0.5) / Ny, (iz + 0.5) / Nz], axis=-1
    ).astype(jnp.float32)                                      # (P, 3)
    volume_vals = [volume[0].reshape(-1)[flat_idx]]

    # ---- camera projection glue + bilinear weight rows ----
    uv, cam_centers = project_pointsv2(query_points, cam_pos, cam_proj, H, W)
    wb = bilinear_weight_matrix(uv, H, W)                      # (n_cam, P, H*W)
    cam_in = cam_centers.reshape(-1, 3)                        # (n_cam*P, 3)

    # ---- Pallas kernel #2: mlp_xyz + mlp_cam_center + ROI sample + concat
    #      + 3-layer decoder, all fused with VMEM-resident intermediates ----
    out_slab = fused_post_encoder(
        feats, wb, query_points, cam_in,
        params["mlp_xyz"], params["mlp_dir"], params["dec"],
        n_cam=n_cam, n_query=cfg.n_query, skip_flags=skip_flags)
    output = out_slab[:, :cfg.decoder_out]                     # (P, 3)

    return {"output": [output], "volume": volume_vals, "query_indices": [flat_idx]}


# ---------------------------------- main -------------------------------------

class Config(NamedTuple):
    n_layers_xyz: int = 4
    append_xyz: Tuple[int, ...] = (2,)
    n_hidden_neurons_xyz: int = 32
    n_hidden_neurons_dir: int = 32
    latent_size: int = 32
    n_query: int = 64
    decoder_hidden: int = 64
    decoder_out: int = 3


if __name__ == "__main__":
    cfg = Config()
    n_cam, C, H, W = 4, 3, 16, 16
    Nx = Ny = Nz = 8
    Vbatch = 1

    key = jax.random.PRNGKey(0)
    k_param, k_img, k_vol, k_mask, k_cam, k_proj, k_q = jax.random.split(key, 7)

    params = init_params(k_param, cfg, n_cam, C)
    image = jax.random.normal(k_img, (Vbatch, n_cam, C, H, W), jnp.float32)
    volume = jax.random.uniform(k_vol, (Vbatch, Nx, Ny, Nz), jnp.float32)
    masks = jax.random.uniform(k_mask, (Vbatch, Nx, Ny, Nz)) > 0.3
    cam_pos = jax.random.normal(k_cam, (n_cam, 3), jnp.float32) * 2.0
    cam_proj = jax.random.normal(k_proj, (n_cam, 3, 4), jnp.float32)

    forward = jax.jit(nemf_forward, static_argnums=(1,))
    out = forward(params, cfg, image, volume, masks, cam_pos, cam_proj, k_q)
    jax.block_until_ready(out["output"][0])
    assert out["output"][0].shape == (cfg.n_query, cfg.decoder_out)
    assert out["volume"][0].shape == (cfg.n_query,)
    print("KERNEL_OK")
</pallas_src>

<mosaic_0001>
module attributes {stable_mosaic.version = 11 : i64} {
  func.func @_encoder_kernel(%arg0: i32, %arg1: memref<1024x3xf32, #tpu.memory_space<vmem>>, %arg2: memref<3x128xf32, #tpu.memory_space<vmem>>, %arg3: memref<1x128xf32, #tpu.memory_space<vmem>>, %arg4: memref<1024x128xf32, #tpu.memory_space<vmem>>) attributes {dimension_semantics = [#tpu.dimension_semantics<arbitrary>], iteration_bounds = array<i64: 1>, scalar_prefetch = 0 : i64, scratch_operands = 0 : i64, tpu.core_type = #tpu.core_type<tc>, window_params = [{transform_indices = @transform_0, window_bounds = array<i64: 1024, 3>}, {pipeline_mode = #tpu.pipeline_mode<synchronous>, transform_indices = @transform_1, window_bounds = array<i64: 3, 128>}, {pipeline_mode = #tpu.pipeline_mode<synchronous>, transform_indices = @transform_2, window_bounds = array<i64: 1, 128>}, {transform_indices = @transform_3, window_bounds = array<i64: 1024, 128>}]} {
    %c0 = arith.constant 0 : index
    %c0_0 = arith.constant 0 : index
    %0 = vector.load %arg1[%c0, %c0_0] : memref<1024x3xf32, #tpu.memory_space<vmem>>, vector<1024x3xf32>
    %c0_1 = arith.constant 0 : index
    %c0_2 = arith.constant 0 : index
    %1 = vector.load %arg2[%c0_1, %c0_2] : memref<3x128xf32, #tpu.memory_space<vmem>>, vector<3x128xf32>
    %c0_3 = arith.constant 0 : index
    %c0_4 = arith.constant 0 : index
    %2 = vector.load %arg3[%c0_3, %c0_4] : memref<1x128xf32, #tpu.memory_space<vmem>>, vector<1x128xf32>
    %3 = vector.extract_strided_slice %0 {offsets = [0, 0], sizes = [1024, 1], strides = [1, 1]} : vector<1024x3xf32> to vector<1024x1xf32>
    %4 = vector.extract_strided_slice %1 {offsets = [0, 0], sizes = [1, 128], strides = [1, 1]} : vector<3x128xf32> to vector<1x128xf32>
    %5 = vector.broadcast %3 : vector<1024x1xf32> to vector<1024x128xf32>
    %6 = vector.broadcast %4 : vector<1x128xf32> to vector<1024x128xf32>
    %7 = arith.mulf %5, %6 : vector<1024x128xf32>
    %8 = vector.broadcast %2 : vector<1x128xf32> to vector<1024x128xf32>
    %9 = arith.addf %8, %7 : vector<1024x128xf32>
    %10 = vector.extract_strided_slice %0 {offsets = [0, 1], sizes = [1024, 1], strides = [1, 1]} : vector<1024x3xf32> to vector<1024x1xf32>
    %11 = vector.extract_strided_slice %1 {offsets = [1, 0], sizes = [1, 128], strides = [1, 1]} : vector<3x128xf32> to vector<1x128xf32>
    %12 = vector.broadcast %10 : vector<1024x1xf32> to vector<1024x128xf32>
    %13 = vector.broadcast %11 : vector<1x128xf32> to vector<1024x128xf32>
    %14 = arith.mulf %12, %13 : vector<1024x128xf32>
    %15 = arith.addf %9, %14 : vector<1024x128xf32>
    %16 = vector.extract_strided_slice %0 {offsets = [0, 2], sizes = [1024, 1], strides = [1, 1]} : vector<1024x3xf32> to vector<1024x1xf32>
    %17 = vector.extract_strided_slice %1 {offsets = [2, 0], sizes = [1, 128], strides = [1, 1]} : vector<3x128xf32> to vector<1x128xf32>
    %18 = vector.broadcast %16 : vector<1024x1xf32> to vector<1024x128xf32>
    %19 = vector.broadcast %17 : vector<1x128xf32> to vector<1024x128xf32>
    %20 = arith.mulf %18, %19 : vector<1024x128xf32>
    %21 = arith.addf %15, %20 : vector<1024x128xf32>
    %cst = arith.constant 0.000000e+00 : f32
    %22 = vector.broadcast %cst : f32 to vector<1024x128xf32>
    %23 = arith.maximumf %21, %22 : vector<1024x128xf32>
    %c0_5 = arith.constant 0 : index
    %c0_6 = arith.constant 0 : index
    %24 = vector.load %arg4[%c0_5, %c0_6] : memref<1024x128xf32, #tpu.memory_space<vmem>>, vector<1024x128xf32>
    tpu.vector_store %arg4[%c0_5, %c0_6], %23 {strides = array<i32>} : memref<1024x128xf32, #tpu.memory_space<vmem>>, vector<1024x128xf32>,
    return
  }
  func.func @transform_0(%arg0: i32) -> (i32, i32) {
    %c0_i32 = arith.constant 0 : i32
    %c0_i32_0 = arith.constant 0 : i32
    return %arg0, %c0_i32 : i32, i32
  }
  func.func @transform_1(%arg0: i32) -> (i32, i32) {
    %c0_i32 = arith.constant 0 : i32
    %c0_i32_0 = arith.constant 0 : i32
    %c0_i32_1 = arith.constant 0 : i32
    return %c0_i32, %c0_i32_0 : i32, i32
  }
  func.func @transform_2(%arg0: i32) -> (i32, i32) {
    %c0_i32 = arith.constant 0 : i32
    %c0_i32_0 = arith.constant 0 : i32
    %c0_i32_1 = arith.constant 0 : i32
    return %c0_i32, %c0_i32_0 : i32, i32
  }
  func.func @transform_3(%arg0: i32) -> (i32, i32) {
    %c0_i32 = arith.constant 0 : i32
    %c0_i32_0 = arith.constant 0 : i32
    return %arg0, %c0_i32 : i32, i32
  }
}

module attributes {stable_mosaic.version = 11 : i64} {
  func.func @kernel(%arg0: memref<4x256x128xf32, #tpu.memory_space<vmem>>, %arg1: memref<4x64x256xf32, #tpu.memory_space<vmem>>, %arg2: memref<64x3xf32, #tpu.memory_space<vmem>>, %arg3: memref<256x3xf32, #tpu.memory_space<vmem>>, %arg4: memref<3x32xf32, #tpu.memory_space<vmem>>, %arg5: memref<1x32xf32, #tpu.memory_space<vmem>>, %arg6: memref<32x32xf32, #tpu.memory_space<vmem>>, %arg7: memref<1x32xf32, #tpu.memory_space<vmem>>, %arg8: memref<32x32xf32, #tpu.memory_space<vmem>>, %arg9: memref<3x32xf32, #tpu.memory_space<vmem>>, %arg10: memref<1x32xf32, #tpu.memory_space<vmem>>, %arg11: memref<32x32xf32, #tpu.memory_space<vmem>>, %arg12: memref<1x32xf32, #tpu.memory_space<vmem>>, %arg13: memref<3x32xf32, #tpu.memory_space<vmem>>, %arg14: memref<1x32xf32, #tpu.memory_space<vmem>>, %arg15: memref<32x32xf32, #tpu.memory_space<vmem>>, %arg16: memref<1x32xf32, #tpu.memory_space<vmem>>, %arg17: memref<32x32xf32, #tpu.memory_space<vmem>>, %arg18: memref<3x32xf32, #tpu.memory_space<vmem>>, %arg19: memref<1x32xf32, #tpu.memory_space<vmem>>, %arg20: memref<32x32xf32, #tpu.memory_space<vmem>>, %arg21: memref<1x32xf32, #tpu.memory_space<vmem>>, %arg22: memref<4x128x64xf32, #tpu.memory_space<vmem>>, %arg23: memref<32x64xf32, #tpu.memory_space<vmem>>, %arg24: memref<4x32x64xf32, #tpu.memory_space<vmem>>, %arg25: memref<1x64xf32, #tpu.memory_space<vmem>>, %arg26: memref<64x64xf32, #tpu.memory_space<vmem>>, %arg27: memref<1x64xf32, #tpu.memory_space<vmem>>, %arg28: memref<64x128xf32, #tpu.memory_space<vmem>>, %arg29: memref<1x128xf32, #tpu.memory_space<vmem>>, %arg30: memref<64x128xf32, #tpu.memory_space<vmem>>) attributes {dimension_semantics = [], scalar_prefetch = 0 : i64, scratch_operands = 0 : i64, tpu.core_type = #tpu.core_type<tc>} {
    %c0 = arith.constant 0 : index
    %c0_0 = arith.constant 0 : index
    %0 = vector.load %arg4[%c0, %c0_0] : memref<3x32xf32, #tpu.memory_space<vmem>>, vector<3x32xf32>
    %c0_1 = arith.constant 0 : index
    %c0_2 = arith.constant 0 : index
    %1 = vector.load %arg5[%c0_1, %c0_2] : memref<1x32xf32, #tpu.memory_space<vmem>>, vector<1x32xf32>
    %c0_3 = arith.constant 0 : index
    %c0_4 = arith.constant 0 : index
    %2 = vector.load %arg6[%c0_3, %c0_4] : memref<32x32xf32, #tpu.memory_space<vmem>>, vector<32x32xf32>
    %c0_5 = arith.constant 0 : index
    %c0_6 = arith.constant 0 : index
    %3 = vector.load %arg7[%c0_5, %c0_6] : memref<1x32xf32, #tpu.memory_space<vmem>>, vector<1x32xf32>
    %c0_7 = arith.constant 0 : index
    %c0_8 = arith.constant 0 : index
    %4 = vector.load %arg8[%c0_7, %c0_8] : memref<32x32xf32, #tpu.memory_space<vmem>>, vector<32x32xf32>
    %c0_9 = arith.constant 0 : index
    %c0_10 = arith.constant 0 : index
    %5 = vector.load %arg9[%c0_9, %c0_10] : memref<3x32xf32, #tpu.memory_space<vmem>>, vector<3x32xf32>
    %c0_11 = arith.constant 0 : index
    %c0_12 = arith.constant 0 : index
    %6 = vector.load %arg10[%c0_11, %c0_12] : memref<1x32xf32, #tpu.memory_space<vmem>>, vector<1x32xf32>
    %c0_13 = arith.constant 0 : index
    %c0_14 = arith.constant 0 : index
    %7 = vector.load %arg11[%c0_13, %c0_14] : memref<32x32xf32, #tpu.memory_space<vmem>>, vector<32x32xf32>
    %c0_15 = arith.constant 0 : index
    %c0_16 = arith.constant 0 : index
    %8 = vector.load %arg12[%c0_15, %c0_16] : memref<1x32xf32, #tpu.memory_space<vmem>>, vector<1x32xf32>
    %c0_17 = arith.constant 0 : index
    %c0_18 = arith.constant 0 : index
    %9 = vector.load %arg13[%c0_17, %c0_18] : memref<3x32xf32, #tpu.memory_space<vmem>>, vector<3x32xf32>
    %c0_19 = arith.constant 0 : index
    %c0_20 = arith.constant 0 : index
    %10 = vector.load %arg14[%c0_19, %c0_20] : memref<1x32xf32, #tpu.memory_space<vmem>>, vector<1x32xf32>
    %c0_21 = arith.constant 0 : index
    %c0_22 = arith.constant 0 : index
    %11 = vector.load %arg15[%c0_21, %c0_22] : memref<32x32xf32, #tpu.memory_space<vmem>>, vector<32x32xf32>
    %c0_23 = arith.constant 0 : index
    %c0_24 = arith.constant 0 : index
    %12 = vector.load %arg16[%c0_23, %c0_24] : memref<1x32xf32, #tpu.memory_space<vmem>>, vector<1x32xf32>
    %c0_25 = arith.constant 0 : index
    %c0_26 = arith.constant 0 : index
    %13 = vector.load %arg17[%c0_25, %c0_26] : memref<32x32xf32, #tpu.memory_space<vmem>>, vector<32x32xf32>
    %c0_27 = arith.constant 0 : index
    %c0_28 = arith.constant 0 : index
    %14 = vector.load %arg18[%c0_27, %c0_28] : memref<3x32xf32, #tpu.memory_space<vmem>>, vector<3x32xf32>
    %c0_29 = arith.constant 0 : index
    %c0_30 = arith.constant 0 : index
    %15 = vector.load %arg19[%c0_29, %c0_30] : memref<1x32xf32, #tpu.memory_space<vmem>>, vector<1x32xf32>
    %c0_31 = arith.constant 0 : index
    %c0_32 = arith.constant 0 : index
    %16 = vector.load %arg20[%c0_31, %c0_32] : memref<32x32xf32, #tpu.memory_space<vmem>>, vector<32x32xf32>
    %c0_33 = arith.constant 0 : index
    %c0_34 = arith.constant 0 : index
    %17 = vector.load %arg21[%c0_33, %c0_34] : memref<1x32xf32, #tpu.memory_space<vmem>>, vector<1x32xf32>
    %c0_35 = arith.constant 0 : index
    %c0_36 = arith.constant 0 : index
    %18 = vector.load %arg2[%c0_35, %c0_36] : memref<64x3xf32, #tpu.memory_space<vmem>>, vector<64x3xf32>
    %cst = arith.constant dense<0.000000e+00> : vector<64x32xf32>
    %19 = tpu.matmul %18, %0, %cst {dimension_numbers = #tpu.dot_dimension_numbers<[1], [0], [0], [1], [0, 0, 1, 1], [], []>} : vector<64x3xf32>, vector<3x32xf32>, vector<64x32xf32> -> vector<64x32xf32>
    %20 = vector.broadcast %1 : vector<1x32xf32> to vector<64x32xf32>
    %21 = arith.addf %19, %20 : vector<64x32xf32>
    %cst_37 = arith.constant 0.000000e+00 : f32
    %22 = vector.broadcast %cst_37 : f32 to vector<64x32xf32>
    %23 = arith.maximumf %21, %22 : vector<64x32xf32>
    %cst_38 = arith.constant dense<0.000000e+00> : vector<64x32xf32>
    %24 = tpu.matmul %23, %2, %cst_38 {dimension_numbers = #tpu.dot_dimension_numbers<[1], [0], [0], [1], [0, 0, 1, 1], [], []>} : vector<64x32xf32>, vector<32x32xf32>, vector<64x32xf32> -> vector<64x32xf32>
    %25 = vector.broadcast %3 : vector<1x32xf32> to vector<64x32xf32>
    %26 = arith.addf %24, %25 : vector<64x32xf32>
    %cst_39 = arith.constant 0.000000e+00 : f32
    %27 = vector.broadcast %cst_39 : f32 to vector<64x32xf32>
    %28 = arith.maximumf %26, %27 : vector<64x32xf32>
    %cst_40 = arith.constant dense<0.000000e+00> : vector<64x32xf32>
    %29 = tpu.matmul %28, %4, %cst_40 {dimension_numbers = #tpu.dot_dimension_numbers<[1], [0], [0], [1], [0, 0, 1, 1], [], []>} : vector<64x32xf32>, vector<32x32xf32>, vector<64x32xf32> -> vector<64x32xf32>
    %cst_41 = arith.constant dense<0.000000e+00> : vector<64x32xf32>
    %30 = tpu.matmul %18, %5, %cst_41 {dimension_numbers = #tpu.dot_dimension_numbers<[1], [0], [0], [1], [0, 0, 1, 1], [], []>} : vector<64x3xf32>, vector<3x32xf32>, vector<64x32xf32> -> vector<64x32xf32>
    %31 = arith.addf %29, %30 : vector<64x32xf32>
    %32 = vector.broadcast %6 : vector<1x32xf32> to vector<64x32xf32>
    %33 = arith.addf %31, %32 : vector<64x32xf32>
    %cst_42 = arith.constant 0.000000e+00 : f32
    %34 = vector.broadcast %cst_42 : f32 to vector<64x32xf32>
    %35 = arith.maximumf %33, %34 : vector<64x32xf32>
    %cst_43 = arith.constant dense<0.000000e+00> : vector<64x32xf32>
    %36 = tpu.matmul %35, %7, %cst_43 {dimension_numbers = #tpu.dot_dimension_numbers<[1], [0], [0], [1], [0, 0, 1, 1], [], []>} : vector<64x32xf32>, vector<32x32xf32>, vector<64x32xf32> -> vector<64x32xf32>
    %37 = vector.broadcast %8 : vector<1x32xf32> to vector<64x32xf32>
    %38 = arith.addf %36, %37 : vector<64x32xf32>
    %cst_44 = arith.constant 0.000000e+00 : f32
    %39 = vector.broadcast %cst_44 : f32 to vector<64x32xf32>
    %40 = arith.maximumf %38, %39 : vector<64x32xf32>
    %c0_45 = arith.constant 0 : index
    %c0_46 = arith.constant 0 : index
    %41 = vector.load %arg3[%c0_45, %c0_46] : memref<256x3xf32, #tpu.memory_space<vmem>>, vector<256x3xf32>
    %cst_47 = arith.constant dense<0.000000e+00> : vector<256x32xf32>
    %42 = tpu.matmul %41, %9, %cst_47 {dimension_numbers = #tpu.dot_dimension_numbers<[1], [0], [0], [1], [0, 0, 1, 1], [], []>} : vector<256x3xf32>, vector<3x32xf32>, vector<256x32xf32> -> vector<256x32xf32>
    %43 = vector.broadcast %10 : vector<1x32xf32> to vector<256x32xf32>
    %44 = arith.addf %42, %43 : vector<256x32xf32>
    %cst_48 = arith.constant 0.000000e+00 : f32
    %45 = vector.broadcast %cst_48 : f32 to vector<256x32xf32>
    %46 = arith.maximumf %44, %45 : vector<256x32xf32>
    %cst_49 = arith.constant dense<0.000000e+00> : vector<256x32xf32>
    %47 = tpu.matmul %46, %11, %cst_49 {dimension_numbers = #tpu.dot_dimension_numbers<[1], [0], [0], [1], [0, 0, 1, 1], [], []>} : vector<256x32xf32>, vector<32x32xf32>, vector<256x32xf32> -> vector<256x32xf32>
    %48 = vector.broadcast %12 : vector<1x32xf32> to vector<256x32xf32>
    %49 = arith.addf %47, %48 : vector<256x32xf32>
    %cst_50 = arith.constant 0.000000e+00 : f32
    %50 = vector.broadcast %cst_50 : f32 to vector<256x32xf32>
    %51 = arith.maximumf %49, %50 : vector<256x32xf32>
    %cst_51 = arith.constant dense<0.000000e+00> : vector<256x32xf32>
    %52 = tpu.matmul %51, %13, %cst_51 {dimension_numbers = #tpu.dot_dimension_numbers<[1], [0], [0], [1], [0, 0, 1, 1], [], []>} : vector<256x32xf32>, vector<32x32xf32>, vector<256x32xf32> -> vector<256x32xf32>
    %cst_52 = arith.constant dense<0.000000e+00> : vector<256x32xf32>
    %53 = tpu.matmul %41, %14, %cst_52 {dimension_numbers = #tpu.dot_dimension_numbers<[1], [0], [0], [1], [0, 0, 1, 1], [], []>} : vector<256x3xf32>, vector<3x32xf32>, vector<256x32xf32> -> vector<256x32xf32>
    %54 = arith.addf %52, %53 : vector<256x32xf32>
    %55 = vector.broadcast %15 : vector<1x32xf32> to vector<256x32xf32>
    %56 = arith.addf %54, %55 : vector<256x32xf32>
    %cst_53 = arith.constant 0.000000e+00 : f32
    %57 = vector.broadcast %cst_53 : f32 to vector<256x32xf32>
    %58 = arith.maximumf %56, %57 : vector<256x32xf32>
    %cst_54 = arith.constant dense<0.000000e+00> : vector<256x32xf32>
    %59 = tpu.matmul %58, %16, %cst_54 {dimension_numbers = #tpu.dot_dimension_numbers<[1], [0], [0], [1], [0, 0, 1, 1], [], []>} : vector<256x32xf32>, vector<32x32xf32>, vector<256x32xf32> -> vector<256x32xf32>
    %60 = vector.broadcast %17 : vector<1x32xf32> to vector<256x32xf32>
    %61 = arith.addf %59, %60 : vector<256x32xf32>
    %cst_55 = arith.constant 0.000000e+00 : f32
    %62 = vector.broadcast %cst_55 : f32 to vector<256x32xf32>
    %63 = arith.maximumf %61, %62 : vector<256x32xf32>
    %c0_56 = arith.constant 0 : index
    %c0_57 = arith.constant 0 : index
    %64 = vector.load %arg25[%c0_56, %c0_57] : memref<1x64xf32, #tpu.memory_space<vmem>>, vector<1x64xf32>
    %c0_58 = arith.constant 0 : index
    %c0_59 = arith.constant 0 : index
    %65 = vector.load %arg23[%c0_58, %c0_59] : memref<32x64xf32, #tpu.memory_space<vmem>>, vector<32x64xf32>
    %cst_60 = arith.constant dense<0.000000e+00> : vector<64x64xf32>
    %66 = tpu.matmul %40, %65, %cst_60 {dimension_numbers = #tpu.dot_dimension_numbers<[1], [0], [0], [1], [0, 0, 1, 1], [], []>} : vector<64x32xf32>, vector<32x64xf32>, vector<64x64xf32> -> vector<64x64xf32>
    %67 = vector.broadcast %64 : vector<1x64xf32> to vector<64x64xf32>
    %68 = arith.addf %67, %66 : vector<64x64xf32>
    %c0_61 = arith.constant 0 : index
    %c0_62 = arith.constant 0 : index
    %c0_63 = arith.constant 0 : index
    %69 = vector.load %arg1[%c0_61, %c0_62, %c0_63] : memref<4x64x256xf32, #tpu.memory_space<vmem>>, vector<1x64x256xf32>
    %70 = vector.shape_cast %69 : vector<1x64x256xf32> to vector<64x256xf32>
    %c0_64 = arith.constant 0 : index
    %c0_65 = arith.constant 0 : index
    %c0_66 = arith.constant 0 : index
    %71 = vector.load %arg0[%c0_64, %c0_65, %c0_66] : memref<4x256x128xf32, #tpu.memory_space<vmem>>, vector<1x256x128xf32>
    %72 = vector.shape_cast %71 : vector<1x256x128xf32> to vector<256x128xf32>
    %cst_67 = arith.constant dense<0.000000e+00> : vector<64x128xf32>
    %73 = tpu.matmul %70, %72, %cst_67 {dimension_numbers = #tpu.dot_dimension_numbers<[1], [0], [0], [1], [0, 0, 1, 1], [], []>} : vector<64x256xf32>, vector<256x128xf32>, vector<64x128xf32> -> vector<64x128xf32>
    %c0_68 = arith.constant 0 : index
    %c0_69 = arith.constant 0 : index
    %c0_70 = arith.constant 0 : index
    %74 = vector.load %arg22[%c0_68, %c0_69, %c0_70] : memref<4x128x64xf32, #tpu.memory_space<vmem>>, vector<1x128x64xf32>
    %75 = vector.shape_cast %74 : vector<1x128x64xf32> to vector<128x64xf32>
    %cst_71 = arith.constant dense<0.000000e+00> : vector<64x64xf32>
    %76 = tpu.matmul %73, %75, %cst_71 {dimension_numbers = #tpu.dot_dimension_numbers<[1], [0], [0], [1], [0, 0, 1, 1], [], []>} : vector<64x128xf32>, vector<128x64xf32>, vector<64x64xf32> -> vector<64x64xf32>
    %77 = arith.addf %68, %76 : vector<64x64xf32>
    %78 = vector.extract_strided_slice %63 {offsets = [0, 0], sizes = [64, 32], strides = [1, 1]} : vector<256x32xf32> to vector<64x32xf32>
    %c0_72 = arith.constant 0 : index
    %c0_73 = arith.constant 0 : index
    %c0_74 = arith.constant 0 : index
    %79 = vector.load %arg24[%c0_72, %c0_73, %c0_74] : memref<4x32x64xf32, #tpu.memory_space<vmem>>, vector<1x32x64xf32>
    %80 = vector.shape_cast %79 : vector<1x32x64xf32> to vector<32x64xf32>
    %cst_75 = arith.constant dense<0.000000e+00> : vector<64x64xf32>
    %81 = tpu.matmul %78, %80, %cst_75 {dimension_numbers = #tpu.dot_dimension_numbers<[1], [0], [0], [1], [0, 0, 1, 1], [], []>} : vector<64x32xf32>, vector<32x64xf32>, vector<64x64xf32> -> vector<64x64xf32>
    %82 = arith.addf %77, %81 : vector<64x64xf32>
    %c1 = arith.constant 1 : index
    %c0_76 = arith.constant 0 : index
    %c0_77 = arith.constant 0 : index
    %83 = vector.load %arg1[%c1, %c0_76, %c0_77] : memref<4x64x256xf32, #tpu.memory_space<vmem>>, vector<1x64x256xf32>
    %84 = vector.shape_cast %83 : vector<1x64x256xf32> to vector<64x256xf32>
    %c1_78 = arith.constant 1 : index
    %c0_79 = arith.constant 0 : index
    %c0_80 = arith.constant 0 : index
    %85 = vector.load %arg0[%c1_78, %c0_79, %c0_80] : memref<4x256x128xf32, #tpu.memory_space<vmem>>, vector<1x256x128xf32>
    %86 = vector.shape_cast %85 : vector<1x256x128xf32> to vector<256x128xf32>
    %cst_81 = arith.constant dense<0.000000e+00> : vector<64x128xf32>
    %87 = tpu.matmul %84, %86, %cst_81 {dimension_numbers = #tpu.dot_dimension_numbers<[1], [0], [0], [1], [0, 0, 1, 1], [], []>} : vector<64x256xf32>, vector<256x128xf32>, vector<64x128xf32> -> vector<64x128xf32>
    %c1_82 = arith.constant 1 : index
    %c0_83 = arith.constant 0 : index
    %c0_84 = arith.constant 0 : index
    %88 = vector.load %arg22[%c1_82, %c0_83, %c0_84] : memref<4x128x64xf32, #tpu.memory_space<vmem>>, vector<1x128x64xf32>
    %89 = vector.shape_cast %88 : vector<1x128x64xf32> to vector<128x64xf32>
    %cst_85 = arith.constant dense<0.000000e+00> : vector<64x64xf32>
    %90 = tpu.matmul %87, %89, %cst_85 {dimension_numbers = #tpu.dot_dimension_numbers<[1], [0], [0], [1], [0, 0, 1, 1], [], []>} : vector<64x128xf32>, vector<128x64xf32>, vector<64x64xf32> -> vector<64x64xf32>
    %91 = arith.addf %82, %90 : vector<64x64xf32>
    %92 = vector.extract_strided_slice %63 {offsets = [64, 0], sizes = [64, 32], strides = [1, 1]} : vector<256x32xf32> to vector<64x32xf32>
    %c1_86 = arith.constant 1 : index
    %c0_87 = arith.constant 0 : index
    %c0_88 = arith.constant 0 : index
    %93 = vector.load %arg24[%c1_86, %c0_87, %c0_88] : memref<4x32x64xf32, #tpu.memory_space<vmem>>, vector<1x32x64xf32>
    %94 = vector.shape_cast %93 : vector<1x32x64xf32> to vector<32x64xf32>
    %cst_89 = arith.constant dense<0.000000e+00> : vector<64x64xf32>
    %95 = tpu.matmul %92, %94, %cst_89 {dimension_numbers = #tpu.dot_dimension_numbers<[1], [0], [0], [1], [0, 0, 1, 1], [], []>} : vector<64x32xf32>, vector<32x64xf32>, vector<64x64xf32> -> vector<64x64xf32>
    %96 = arith.addf %91, %95 : vector<64x64xf32>
    %c2 = arith.constant 2 : index
    %c0_90 = arith.constant 0 : index
    %c0_91 = arith.constant 0 : index
    %97 = vector.load %arg1[%c2, %c0_90, %c0_91] : memref<4x64x256xf32, #tpu.memory_space<vmem>>, vector<1x64x256xf32>
    %98 = vector.shape_cast %97 : vector<1x64x256xf32> to vector<64x256xf32>
    %c2_92 = arith.constant 2 : index
    %c0_93 = arith.constant 0 : index
    %c0_94 = arith.constant 0 : index
    %99 = vector.load %arg0[%c2_92, %c0_93, %c0_94] : memref<4x256x128xf32, #tpu.memory_space<vmem>>, vector<1x256x128xf32>
    %100 = vector.shape_cast %99 : vector<1x256x128xf32> to vector<256x128xf32>
    %cst_95 = arith.constant dense<0.000000e+00> : vector<64x128xf32>
    %101 = tpu.matmul %98, %100, %cst_95 {dimension_numbers = #tpu.dot_dimension_numbers<[1], [0], [0], [1], [0, 0, 1, 1], [], []>} : vector<64x256xf32>, vector<256x128xf32>, vector<64x128xf32> -> vector<64x128xf32>
    %c2_96 = arith.constant 2 : index
    %c0_97 = arith.constant 0 : index
    %c0_98 = arith.constant 0 : index
    %102 = vector.load %arg22[%c2_96, %c0_97, %c0_98] : memref<4x128x64xf32, #tpu.memory_space<vmem>>, vector<1x128x64xf32>
    %103 = vector.shape_cast %102 : vector<1x128x64xf32> to vector<128x64xf32>
    %cst_99 = arith.constant dense<0.000000e+00> : vector<64x64xf32>
    %104 = tpu.matmul %101, %103, %cst_99 {dimension_numbers = #tpu.dot_dimension_numbers<[1], [0], [0], [1], [0, 0, 1, 1], [], []>} : vector<64x128xf32>, vector<128x64xf32>, vector<64x64xf32> -> vector<64x64xf32>
    %105 = arith.addf %96, %104 : vector<64x64xf32>
    %106 = vector.extract_strided_slice %63 {offsets = [128, 0], sizes = [64, 32], strides = [1, 1]} : vector<256x32xf32> to vector<64x32xf32>
    %c2_100 = arith.constant 2 : index
    %c0_101 = arith.constant 0 : index
    %c0_102 = arith.constant 0 : index
    %107 = vector.load %arg24[%c2_100, %c0_101, %c0_102] : memref<4x32x64xf32, #tpu.memory_space<vmem>>, vector<1x32x64xf32>
    %108 = vector.shape_cast %107 : vector<1x32x64xf32> to vector<32x64xf32>
    %cst_103 = arith.constant dense<0.000000e+00> : vector<64x64xf32>
    %109 = tpu.matmul %106, %108, %cst_103 {dimension_numbers = #tpu.dot_dimension_numbers<[1], [0], [0], [1], [0, 0, 1, 1], [], []>} : vector<64x32xf32>, vector<32x64xf32>, vector<64x64xf32> -> vector<64x64xf32>
    %110 = arith.addf %105, %109 : vector<64x64xf32>
    %c3 = arith.constant 3 : index
    %c0_104 = arith.constant 0 : index
    %c0_105 = arith.constant 0 : index
    %111 = vector.load %arg1[%c3, %c0_104, %c0_105] : memref<4x64x256xf32, #tpu.memory_space<vmem>>, vector<1x64x256xf32>
    %112 = vector.shape_cast %111 : vector<1x64x256xf32> to vector<64x256xf32>
    %c3_106 = arith.constant 3 : index
    %c0_107 = arith.constant 0 : index
    %c0_108 = arith.constant 0 : index
    %113 = vector.load %arg0[%c3_106, %c0_107, %c0_108] : memref<4x256x128xf32, #tpu.memory_space<vmem>>, vector<1x256x128xf32>
    %114 = vector.shape_cast %113 : vector<1x256x128xf32> to vector<256x128xf32>
    %cst_109 = arith.constant dense<0.000000e+00> : vector<64x128xf32>
    %115 = tpu.matmul %112, %114, %cst_109 {dimension_numbers = #tpu.dot_dimension_numbers<[1], [0], [0], [1], [0, 0, 1, 1], [], []>} : vector<64x256xf32>, vector<256x128xf32>, vector<64x128xf32> -> vector<64x128xf32>
    %c3_110 = arith.constant 3 : index
    %c0_111 = arith.constant 0 : index
    %c0_112 = arith.constant 0 : index
    %116 = vector.load %arg22[%c3_110, %c0_111, %c0_112] : memref<4x128x64xf32, #tpu.memory_space<vmem>>, vector<1x128x64xf32>
    %117 = vector.shape_cast %116 : vector<1x128x64xf32> to vector<128x64xf32>
    %cst_113 = arith.constant dense<0.000000e+00> : vector<64x64xf32>
    %118 = tpu.matmul %115, %117, %cst_113 {dimension_numbers = #tpu.dot_dimension_numbers<[1], [0], [0], [1], [0, 0, 1, 1], [], []>} : vector<64x128xf32>, vector<128x64xf32>, vector<64x64xf32> -> vector<64x64xf32>
    %119 = arith.addf %110, %118 : vector<64x64xf32>
    %120 = vector.extract_strided_slice %63 {offsets = [192, 0], sizes = [64, 32], strides = [1, 1]} : vector<256x32xf32> to vector<64x32xf32>
    %c3_114 = arith.constant 3 : index
    %c0_115 = arith.constant 0 : index
    %c0_116 = arith.constant 0 : index
    %121 = vector.load %arg24[%c3_114, %c0_115, %c0_116] : memref<4x32x64xf32, #tpu.memory_space<vmem>>, vector<1x32x64xf32>
    %122 = vector.shape_cast %121 : vector<1x32x64xf32> to vector<32x64xf32>
    %cst_117 = arith.constant dense<0.000000e+00> : vector<64x64xf32>
    %123 = tpu.matmul %120, %122, %cst_117 {dimension_numbers = #tpu.dot_dimension_numbers<[1], [0], [0], [1], [0, 0, 1, 1], [], []>} : vector<64x32xf32>, vector<32x64xf32>, vector<64x64xf32> -> vector<64x64xf32>
    %124 = arith.addf %119, %123 : vector<64x64xf32>
    %cst_118 = arith.constant 0.000000e+00 : f32
    %125 = vector.broadcast %cst_118 : f32 to vector<64x64xf32>
    %126 = arith.maximumf %124, %125 : vector<64x64xf32>
    %c0_119 = arith.constant 0 : index
    %c0_120 = arith.constant 0 : index
    %127 = vector.load %arg26[%c0_119, %c0_120] : memref<64x64xf32, #tpu.memory_space<vmem>>, vector<64x64xf32>
    %cst_121 = arith.constant dense<0.000000e+00> : vector<64x64xf32>
    %128 = tpu.matmul %126, %127, %cst_121 {dimension_numbers = #tpu.dot_dimension_numbers<[1], [0], [0], [1], [0, 0, 1, 1], [], []>} : vector<64x64xf32>, vector<64x64xf32>, vector<64x64xf32> -> vector<64x64xf32>
    %c0_122 = arith.constant 0 : index
    %c0_123 = arith.constant 0 : index
    %129 = vector.load %arg27[%c0_122, %c0_123] : memref<1x64xf32, #tpu.memory_space<vmem>>, vector<1x64xf32>
    %130 = vector.broadcast %129 : vector<1x64xf32> to vector<64x64xf32>
    %131 = arith.addf %128, %130 : vector<64x64xf32>
    %cst_124 = arith.constant 0.000000e+00 : f32
    %132 = vector.broadcast %cst_124 : f32 to vector<64x64xf32>
    %133 = arith.maximumf %131, %132 : vector<64x64xf32>
    %c0_125 = arith.constant 0 : index
    %c0_126 = arith.constant 0 : index
    %134 = vector.load %arg28[%c0_125, %c0_126] : memref<64x128xf32, #tpu.memory_space<vmem>>, vector<64x128xf32>
    %cst_127 = arith.constant dense<0.000000e+00> : vector<64x128xf32>
    %135 = tpu.matmul %133, %134, %cst_127 {dimension_numbers = #tpu.dot_dimension_numbers<[1], [0], [0], [1], [0, 0, 1, 1], [], []>} : vector<64x64xf32>, vector<64x128xf32>, vector<64x128xf32> -> vector<64x128xf32>
    %c0_128 = arith.constant 0 : index
    %c0_129 = arith.constant 0 : index
    %136 = vector.load %arg29[%c0_128, %c0_129] : memref<1x128xf32, #tpu.memory_space<vmem>>, vector<1x128xf32>
    %137 = vector.broadcast %136 : vector<1x128xf32> to vector<64x128xf32>
    %138 = arith.addf %135, %137 : vector<64x128xf32>
    %c0_130 = arith.constant 0 : index
    %c0_131 = arith.constant 0 : index
    %139 = vector.load %arg30[%c0_130, %c0_131] : memref<64x128xf32, #tpu.memory_space<vmem>>, vector<64x128xf32>
    tpu.vector_store %arg30[%c0_130, %c0_131], %138 {strides = array<i32>} : memref<64x128xf32, #tpu.memory_space<vmem>>, vector<64x128xf32>,
    return
  }
}

</mosaic_0001>

<llo_original>
// kernel: squeeze.8
$region0: #{squeeze.8}
  %s0 = inlined_call_operand.vmem [shape: pred[1,8,8,8], index: 0, kind: input, shape index: {}]
  %s1 = inlined_call_operand.vmem [shape: pred[512], index: 1, kind: output, shape index: {}]
  $region1: #{squeeze.8} parent=0
    #allocation0 [shape = 'u8[4096]{0}', space=vmem, size = 0x1000, scoped, tag = 'scoped mem for output reshape']
    #allocation1 [shape = 'u8[32768]{0}', space=vmem, size = 0x8000, scoped, tag = 'scoped mem for input reshape']
    %s3 = ssub.s32 256, 1
    %s4 = sand.u32 %s3, 15
    %p5 = scmp.ne.s32.totalorder %s4, 0
    %s6 = scalar_select %p5, 1, 0
    %s7 = sand.u32 %s3, 240
    %p8 = scmp.ne.s32.totalorder %s7, 0
    %s9 = scalar_select %p8, 2, 0
    %s10 = sor.u32 %s6, %s9
    %s11 = scalar_lea.vmem %s0, 14
    %v12 = vld [vmem:[%s11] sm:%s10]
    %v13 = vunpack.c.0.s8 %v12
    %v14 = vunpack.c.1.s8 %v12
    %v15 = vunpack.c.2.s8 %v12
    %v16 = vunpack.c.3.s8 %v12
    %s17 = scalar_lea.vmem [#allocation1], 56
    %18 = vst [vmem:[%s17] sm:%s3] %v13
    %s19 = sand.u32 %s3, 15
    %p20 = scmp.ne.s32.totalorder %s19, 0
    %s21 = scalar_select %p20, 1, 0
    %s22 = sand.u32 %s3, 240
    %p23 = scmp.ne.s32.totalorder %s22, 0
    %s24 = scalar_select %p23, 2, 0
    %s25 = sor.u32 %s21, %s24
    %s26 = scalar_lea.vmem %s0, 12
    %v27 = vld [vmem:[%s26] sm:%s25]
    %v28 = vunpack.c.0.s8 %v27
    %v29 = vunpack.c.1.s8 %v27
    %v30 = vunpack.c.2.s8 %v27
    %v31 = vunpack.c.3.s8 %v27
    %s32 = scalar_lea.vmem [#allocation1], 48
    %33 = vst [vmem:[%s32] sm:%s3] %v28
    %s34 = sand.u32 %s3, 15
    %p35 = scmp.ne.s32.totalorder %s34, 0
    %s36 = scalar_select %p35, 1, 0
    %s37 = sand.u32 %s3, 240
    %p38 = scmp.ne.s32.totalorder %s37, 0
    %s39 = scalar_select %p38, 2, 0
    %s40 = sor.u32 %s36, %s39
    %s41 = scalar_lea.vmem %s0, 10
    %v42 = vld [vmem:[%s41] sm:%s40]
    %v43 = vunpack.c.0.s8 %v42
    %v44 = vunpack.c.1.s8 %v42
    %v45 = vunpack.c.2.s8 %v42
    %v46 = vunpack.c.3.s8 %v42
    %s47 = scalar_lea.vmem [#allocation1], 40
    %48 = vst [vmem:[%s47] sm:%s3] %v43
    %s49 = sand.u32 %s3, 15
    %p50 = scmp.ne.s32.totalorder %s49, 0
    %s51 = scalar_select %p50, 1, 0
    %s52 = sand.u32 %s3, 240
    %p53 = scmp.ne.s32.totalorder %s52, 0
    %s54 = scalar_select %p53, 2, 0
    %s55 = sor.u32 %s51, %s54
    %s56 = scalar_lea.vmem %s0, 8
    %v57 = vld [vmem:[%s56] sm:%s55]
    %v58 = vunpack.c.0.s8 %v57
    %v59 = vunpack.c.1.s8 %v57
    %v60 = vunpack.c.2.s8 %v57
    %v61 = vunpack.c.3.s8 %v57
    %s62 = scalar_lea.vmem [#allocation1], 32
    %63 = vst [vmem:[%s62] sm:%s3] %v58
    %s64 = sand.u32 %s3, 15
    %p65 = scmp.ne.s32.totalorder %s64, 0
    %s66 = scalar_select %p65, 1, 0
    %s67 = sand.u32 %s3, 240
    %p68 = scmp.ne.s32.totalorder %s67, 0
    %s69 = scalar_select %p68, 2, 0
    %s70 = sor.u32 %s66, %s69
    %s71 = scalar_lea.vmem %s0, 6
    %v72 = vld [vmem:[%s71] sm:%s70]
    %v73 = vunpack.c.0.s8 %v72
    %v74 = vunpack.c.1.s8 %v72
    %v75 = vunpack.c.2.s8 %v72
    %v76 = vunpack.c.3.s8 %v72
    %s77 = scalar_lea.vmem [#allocation1], 24
    %78 = vst [vmem:[%s77] sm:%s3] %v73
    %s79 = sand.u32 %s3, 15
    %p80 = scmp.ne.s32.totalorder %s79, 0
    %s81 = scalar_select %p80, 1, 0
    %s82 = sand.u32 %s3, 240
    %p83 = scmp.ne.s32.totalorder %s82, 0
    %s84 = scalar_select %p83, 2, 0
    %s85 = sor.u32 %s81, %s84
    %s86 = scalar_lea.vmem %s0, 4
    %v87 = vld [vmem:[%s86] sm:%s85]
    %v88 = vunpack.c.0.s8 %v87
    %v89 = vunpack.c.1.s8 %v87
    %v90 = vunpack.c.2.s8 %v87
    %v91 = vunpack.c.3.s8 %v87
    %s92 = scalar_lea.vmem [#allocation1], 16
    %93 = vst [vmem:[%s92] sm:%s3] %v88
    %s94 = sand.u32 %s3, 15
    %p95 = scmp.ne.s32.totalorder %s94, 0
    %s96 = scalar_select %p95, 1, 0
    %s97 = sand.u32 %s3, 240
    %p98 = scmp.ne.s32.totalorder %s97, 0
    %s99 = scalar_select %p98, 2, 0
    %s100 = sor.u32 %s96, %s99
    %s101 = scalar_lea.vmem %s0, 2
    %v102 = vld [vmem:[%s101] sm:%s100]
    %v103 = vunpack.c.0.s8 %v102
    %v104 = vunpack.c.1.s8 %v102
    %v105 = vunpack.c.2.s8 %v102
    %v106 = vunpack.c.3.s8 %v102
    %s107 = scalar_lea.vmem [#allocation1], 8
    %108 = vst [vmem:[%s107] sm:%s3] %v103
    %s109 = sand.u32 %s3, 15
    %p110 = scmp.ne.s32.totalorder %s109, 0
    %s111 = scalar_select %p110, 1, 0
    %s112 = sand.u32 %s3, 240
    %p113 = scmp.ne.s32.totalorder %s112, 0
    %s114 = scalar_select %p113, 2, 0
    %s115 = sor.u32 %s111, %s114
    %v116 = vld [vmem:[%s0] sm:%s115]
    %v117 = vunpack.c.0.s8 %v116
    %v118 = vunpack.c.1.s8 %v116
    %v119 = vunpack.c.2.s8 %v116
    %v120 = vunpack.c.3.s8 %v116
    %121 = vst [vmem:[#allocation1] sm:%s3] %v117
    %s122 = smov 3
    %v123 = vld [vmem:[#allocation1] ss:$16 sm:%s122]
    %s124 = smov 12
    %v125 = vld [vmem:[#allocation1] ss:$16 sm:%s124]
    %vm126 = vcmask 1043458
    %v127 = vsel %vm126, %v125, %v123
    %vm128 = vcmask 64512
    %129 = vst.msk [vmem:[#allocation0] sm:$0xf] %vm128, %v127
    %s130 = scalar_lea.vmem [#allocation1], 15
    %s131 = smov 3
    %v132 = vld [vmem:[%s130] ss:$16 sm:%s131]
    %s133 = scalar_lea.vmem [#allocation1], 15
    %s134 = smov 12
    %v135 = vld [vmem:[%s133] ss:$16 sm:%s134]
    %vm136 = vcmask 1043458
    %v137 = vsel %vm136, %v135, %v132
    %138 = vrot.lane.b32.xlu0 %v137, 120
    %v139 = vpop.permute.xlu0 %138
    %vm140 = vcmask 1048512
    %141 = vst.msk [vmem:[#allocation0] sm:$0xf] %vm140, %v139
    %s142 = scalar_lea.vmem [#allocation1], 14
    %s143 = smov 3
    %v144 = vld [vmem:[%s142] ss:$16 sm:%s143]
    %s145 = scalar_lea.vmem [#allocation1], 14
    %s146 = smov 12
    %v147 = vld [vmem:[%s145] ss:$16 sm:%s146]
    %vm148 = vcmask 1043458
    %v149 = vsel %vm148, %v147, %v144
    %150 = vrot.lane.b32.xlu0 %v149, 112
    %v151 = vpop.permute.xlu0 %150
    %vm152 = vcmask 982912
    %153 = vst.msk [vmem:[#allocation0] sm:$0xf] %vm152, %v151
    %s154 = scalar_lea.vmem [#allocation1], 13
    %s155 = smov 3
    %v156 = vld [vmem:[%s154] ss:$16 sm:%s155]
    %s157 = scalar_lea.vmem [#allocation1], 13
    %s158 = smov 12
    %v159 = vld [vmem:[%s157] ss:$16 sm:%s158]
    %vm160 = vcmask 1043458
    %v161 = vsel %vm160, %v159, %v156
    %162 = vrot.lane.b32.xlu0 %v161, 104
    %v163 = vpop.permute.xlu0 %162
    %vm164 = vcmask 917312
    %165 = vst.msk [vmem:[#allocation0] sm:$0xf] %vm164, %v163
    %s166 = scalar_lea.vmem [#allocation1], 12
    %s167 = smov 3
    %v168 = vld [vmem:[%s166] ss:$16 sm:%s167]
    %s169 = scalar_lea.vmem [#allocation1], 12
    %s170 = smov 12
    %v171 = vld [vmem:[%s169] ss:$16 sm:%s170]
    %vm172 = vcmask 1043458
    %v173 = vsel %vm172, %v171, %v168
    %174 = vrot.lane.b32.xlu0 %v173, 96
    %v175 = vpop.permute.xlu0 %174
    %vm176 = vcmask 851712
    %177 = vst.msk [vmem:[#allocation0] sm:$0xf] %vm176, %v175
    %s178 = scalar_lea.vmem [#allocation1], 11
    %s179 = smov 3
    %v180 = vld [vmem:[%s178] ss:$16 sm:%s179]
    %s181 = scalar_lea.vmem [#allocation1], 11
    %s182 = smov 12
    %v183 = vld [vmem:[%s181] ss:$16 sm:%s182]
    %vm184 = vcmask 1043458
    %v185 = vsel %vm184, %v183, %v180
    %186 = vrot.lane.b32.xlu0 %v185, 88
    %v187 = vpop.permute.xlu0 %186
    %vm188 = vcmask 786112
    %189 = vst.msk [vmem:[#allocation0] sm:$0xf] %vm188, %v187
    %s190 = scalar_lea.vmem [#allocation1], 10
    %s191 = smov 3
    %v192 = vld [vmem:[%s190] ss:$16 sm:%s191]
    %s193 = scalar_lea.vmem [#allocation1], 10
    %s194 = smov 12
    %v195 = vld [vmem:[%s193] ss:$16 sm:%s194]
    %vm196 = vcmask 1043458
    %v197 = vsel %vm196, %v195, %v192
    %198 = vrot.lane.b32.xlu0 %v197, 80
    %v199 = vpop.permute.xlu0 %198
    %vm200 = vcmask 720512
    %201 = vst.msk [vmem:[#allocation0] sm:$0xf] %vm200, %v199
    %s202 = scalar_lea.vmem [#allocation1], 9
    %s203 = smov 3
    %v204 = vld [vmem:[%s202] ss:$16 sm:%s203]
    %s205 = scalar_lea.vmem [#allocation1], 9
    %s206 = smov 12
    %v207 = vld [vmem:[%s205] ss:$16 sm:%s206]
    %vm208 = vcmask 1043458
    %v209 = vsel %vm208, %v207, %v204
    %210 = vrot.lane.b32.xlu0 %v209, 72
    %v211 = vpop.permute.xlu0 %210
    %vm212 = vcmask 654912
    %213 = vst.msk [vmem:[#allocation0] sm:$0xf] %vm212, %v211
    %s214 = scalar_lea.vmem [#allocation1], 8
    %s215 = smov 3
    %v216 = vld [vmem:[%s214] ss:$16 sm:%s215]
    %s217 = scalar_lea.vmem [#allocation1], 8
    %s218 = smov 12
    %v219 = vld [vmem:[%s217] ss:$16 sm:%s218]
    %vm220 = vcmask 1043458
    %v221 = vsel %vm220, %v219, %v216
    %222 = vrot.lane.b32.xlu0 %v221, 64
    %v223 = vpop.permute.xlu0 %222
    %vm224 = vcmask 589312
    %225 = vst.msk [vmem:[#allocation0] sm:$0xf] %vm224, %v223
    %s226 = scalar_lea.vmem [#allocation1], 7
    %s227 = smov 3
    %v228 = vld [vmem:[%s226] ss:$16 sm:%s227]
    %s229 = scalar_lea.vmem [#allocation1], 7
    %s230 = smov 12
    %v231 = vld [vmem:[%s229] ss:$16 sm:%s230]
    %vm232 = vcmask 1043458
    %v233 = vsel %vm232, %v231, %v228
    %234 = vrot.lane.b32.xlu0 %v233, 56
    %v235 = vpop.permute.xlu0 %234
    %vm236 = vcmask 523712
    %237 = vst.msk [vmem:[#allocation0] sm:$0xf] %vm236, %v235
    %s238 = scalar_lea.vmem [#allocation1], 6
    %s239 = smov 3
    %v240 = vld [vmem:[%s238] ss:$16 sm:%s239]
    %s241 = scalar_lea.vmem [#allocation1], 6
    %s242 = smov 12
    %v243 = vld [vmem:[%s241] ss:$16 sm:%s242]
    %vm244 = vcmask 1043458
    %v245 = vsel %vm244, %v243, %v240
    %246 = vrot.lane.b32.xlu0 %v245, 48
    %v247 = vpop.permute.xlu0 %246
    %vm248 = vcmask 458112
    %249 = vst.msk [vmem:[#allocation0] sm:$0xf] %vm248, %v247
    %s250 = scalar_lea.vmem [#allocation1], 5
    %s251 = smov 3
    %v252 = vld [vmem:[%s250] ss:$16 sm:%s251]
    %s253 = scalar_lea.vmem [#allocation1], 5
    %s254 = smov 12
    %v255 = vld [vmem:[%s253] ss:$16 sm:%s254]
    %vm256 = vcmask 1043458
    %v257 = vsel %vm256, %v255, %v252
    %258 = vrot.lane.b32.xlu0 %v257, 40
    %v259 = vpop.permute.xlu0 %258
    %vm260 = vcmask 392512
    %261 = vst.msk [vmem:[#allocation0] sm:$0xf] %vm260, %v259
    %s262 = scalar_lea.vmem [#allocation1], 4
    %s263 = smov 3
    %v264 = vld [vmem:[%s262] ss:$16 sm:%s263]
    %s265 = scalar_lea.vmem [#allocation1], 4
    %s266 = smov 12
    %v267 = vld [vmem:[%s265] ss:$16 sm:%s266]
    %vm268 = vcmask 1043458
    %v269 = vsel %vm268, %v267, %v264
    %270 = vrot.lane.b32.xlu0 %v269, 32
    %v271 = vpop.permute.xlu0 %270
    %vm272 = vcmask 326912
    %273 = vst.msk [vmem:[#allocation0] sm:$0xf] %vm272, %v271
    %s274 = scalar_lea.vmem [#allocation1], 3
    %s275 = smov 3
    %v276 = vld [vmem:[%s274] ss:$16 sm:%s275]
    %s277 = scalar_lea.vmem [#allocation1], 3
    %s278 = smov 12
    %v279 = vld [vmem:[%s277] ss:$16 sm:%s278]
    %vm280 = vcmask 1043458
    %v281 = vsel %vm280, %v279, %v276
    %282 = vrot.lane.b32.xlu0 %v281, 24
    %v283 = vpop.permute.xlu0 %282
    %vm284 = vcmask 261312
    %285 = vst.msk [vmem:[#allocation0] sm:$0xf] %vm284, %v283
    %s286 = scalar_lea.vmem [#allocation1], 2
    %s287 = smov 3
    %v288 = vld [vmem:[%s286] ss:$16 sm:%s287]
    %s289 = scalar_lea.vmem [#allocation1], 2
    %s290 = smov 12
    %v291 = vld [vmem:[%s289] ss:$16 sm:%s290]
    %vm292 = vcmask 1043458
    %v293 = vsel %vm292, %v291, %v288
    %294 = vrot.lane.b32.xlu0 %v293, 16
    %v295 = vpop.permute.xlu0 %294
    %vm296 = vcmask 195712
    %297 = vst.msk [vmem:[#allocation0] sm:$0xf] %vm296, %v295
    %s298 = scalar_lea.vmem [#allocation1], 1
    %s299 = smov 3
    %v300 = vld [vmem:[%s298] ss:$16 sm:%s299]
    %s301 = scalar_lea.vmem [#allocation1], 1
    %s302 = smov 12
    %v303 = vld [vmem:[%s301] ss:$16 sm:%s302]
    %vm304 = vcmask 1043458
    %v305 = vsel %vm304, %v303, %v300
    %306 = vrot.lane.b32.xlu0 %v305, 8
    %v307 = vpop.permute.xlu0 %306
    %vm308 = vcmask 130112
    %309 = vst.msk [vmem:[#allocation0] sm:$0xf] %vm308, %v307
    %s311 = ssub.s32 16, 1
    %v312 = vld [vmem:[#allocation0] sm:%s311]
    %s314 = ssub.s32 2, 1
    %v315 = vpack.c.b16 0, %v312
    %v316 = vpack.c.b8 0, %v315
    %317 = vst [vmem:[%s1] sm:%s314] %v316

// kernel: squeeze.9
$region0: #{squeeze.9}
  %s0 = inlined_call_operand.vmem [shape: f32[1,8,8,8], index: 0, kind: input, shape index: {}]
  %s1 = inlined_call_operand.vmem [shape: f32[512], index: 1, kind: output, shape index: {}]
  $region1: #{squeeze.9} parent=0
    #allocation0 [shape = 'u8[4096]{0}', space=vmem, size = 0x1000, scoped, tag = 'scoped mem for output reshape']
    %s2 = smov 3
    %v3 = vld [vmem:[%s0] ss:$16 sm:%s2]
    %s4 = smov 12
    %v5 = vld [vmem:[%s0] ss:$16 sm:%s4]
    %vm6 = vcmask 1043458
    %v7 = vsel %vm6, %v5, %v3
    %vm8 = vcmask 64512
    %9 = vst.msk [vmem:[#allocation0] sm:$0xf] %vm8, %v7
    %s10 = scalar_lea.vmem %s0, 15
    %s11 = smov 3
    %v12 = vld [vmem:[%s10] ss:$16 sm:%s11]
    %s13 = scalar_lea.vmem %s0, 15
    %s14 = smov 12
    %v15 = vld [vmem:[%s13] ss:$16 sm:%s14]
    %vm16 = vcmask 1043458
    %v17 = vsel %vm16, %v15, %v12
    %18 = vrot.lane.b32.xlu0 %v17, 120
    %v19 = vpop.permute.xlu0 %18
    %vm20 = vcmask 1048512
    %21 = vst.msk [vmem:[#allocation0] sm:$0xf] %vm20, %v19
    %s22 = scalar_lea.vmem %s0, 14
    %s23 = smov 3
    %v24 = vld [vmem:[%s22] ss:$16 sm:%s23]
    %s25 = scalar_lea.vmem %s0, 14
    %s26 = smov 12
    %v27 = vld [vmem:[%s25] ss:$16 sm:%s26]
    %vm28 = vcmask 1043458
    %v29 = vsel %vm28, %v27, %v24
    %30 = vrot.lane.b32.xlu0 %v29, 112
    %v31 = vpop.permute.xlu0 %30
    %vm32 = vcmask 982912
    %33 = vst.msk [vmem:[#allocation0] sm:$0xf] %vm32, %v31
    %s34 = scalar_lea.vmem %s0, 13
    %s35 = smov 3
    %v36 = vld [vmem:[%s34] ss:$16 sm:%s35]
    %s37 = scalar_lea.vmem %s0, 13
    %s38 = smov 12
    %v39 = vld [vmem:[%s37] ss:$16 sm:%s38]
    %vm40 = vcmask 1043458
    %v41 = vsel %vm40, %v39, %v36
    %42 = vrot.lane.b32.xlu0 %v41, 104
    %v43 = vpop.permute.xlu0 %42
    %vm44 = vcmask 917312
    %45 = vst.msk [vmem:[#allocation0] sm:$0xf] %vm44, %v43
    %s46 = scalar_lea.vmem %s0, 12
    %s47 = smov 3
    %v48 = vld [vmem:[%s46] ss:$16 sm:%s47]
    %s49 = scalar_lea.vmem %s0, 12
    %s50 = smov 12
    %v51 = vld [vmem:[%s49] ss:$16 sm:%s50]
    %vm52 = vcmask 1043458
    %v53 = vsel %vm52, %v51, %v48
    %54 = vrot.lane.b32.xlu0 %v53, 96
    %v55 = vpop.permute.xlu0 %54
    %vm56 = vcmask 851712
    %57 = vst.msk [vmem:[#allocation0] sm:$0xf] %vm56, %v55
    %s58 = scalar_lea.vmem %s0, 11
    %s59 = smov 3
    %v60 = vld [vmem:[%s58] ss:$16 sm:%s59]
    %s61 = scalar_lea.vmem %s0, 11
    %s62 = smov 12
    %v63 = vld [vmem:[%s61] ss:$16 sm:%s62]
    %vm64 = vcmask 1043458
    %v65 = vsel %vm64, %v63, %v60
    %66 = vrot.lane.b32.xlu0 %v65, 88
    %v67 = vpop.permute.xlu0 %66
    %vm68 = vcmask 786112
    %69 = vst.msk [vmem:[#allocation0] sm:$0xf] %vm68, %v67
    %s70 = scalar_lea.vmem %s0, 10
    %s71 = smov 3
    %v72 = vld [vmem:[%s70] ss:$16 sm:%s71]
    %s73 = scalar_lea.vmem %s0, 10
    %s74 = smov 12
    %v75 = vld [vmem:[%s73] ss:$16 sm:%s74]
    %vm76 = vcmask 1043458
    %v77 = vsel %vm76, %v75, %v72
    %78 = vrot.lane.b32.xlu0 %v77, 80
    %v79 = vpop.permute.xlu0 %78
    %vm80 = vcmask 720512
    %81 = vst.msk [vmem:[#allocation0] sm:$0xf] %vm80, %v79
    %s82 = scalar_lea.vmem %s0, 9
    %s83 = smov 3
    %v84 = vld [vmem:[%s82] ss:$16 sm:%s83]
    %s85 = scalar_lea.vmem %s0, 9
    %s86 = smov 12
    %v87 = vld [vmem:[%s85] ss:$16 sm:%s86]
    %vm88 = vcmask 1043458
    %v89 = vsel %vm88, %v87, %v84
    %90 = vrot.lane.b32.xlu0 %v89, 72
    %v91 = vpop.permute.xlu0 %90
    %vm92 = vcmask 654912
    %93 = vst.msk [vmem:[#allocation0] sm:$0xf] %vm92, %v91
    %s94 = scalar_lea.vmem %s0, 8
    %s95 = smov 3
    %v96 = vld [vmem:[%s94] ss:$16 sm:%s95]
    %s97 = scalar_lea.vmem %s0, 8
    %s98 = smov 12
    %v99 = vld [vmem:[%s97] ss:$16 sm:%s98]
    %vm100 = vcmask 1043458
    %v101 = vsel %vm100, %v99, %v96
    %102 = vrot.lane.b32.xlu0 %v101, 64
    %v103 = vpop.permute.xlu0 %102
    %vm104 = vcmask 589312
    %105 = vst.msk [vmem:[#allocation0] sm:$0xf] %vm104, %v103
    %s106 = scalar_lea.vmem %s0, 7
    %s107 = smov 3
    %v108 = vld [vmem:[%s106] ss:$16 sm:%s107]
    %s109 = scalar_lea.vmem %s0, 7
    %s110 = smov 12
    %v111 = vld [vmem:[%s109] ss:$16 sm:%s110]
    %vm112 = vcmask 1043458
    %v113 = vsel %vm112, %v111, %v108
    %114 = vrot.lane.b32.xlu0 %v113, 56
    %v115 = vpop.permute.xlu0 %114
    %vm116 = vcmask 523712
    %117 = vst.msk [vmem:[#allocation0] sm:$0xf] %vm116, %v115
    %s118 = scalar_lea.vmem %s0, 6
    %s119 = smov 3
    %v120 = vld [vmem:[%s118] ss:$16 sm:%s119]
    %s121 = scalar_lea.vmem %s0, 6
    %s122 = smov 12
    %v123 = vld [vmem:[%s121] ss:$16 sm:%s122]
    %vm124 = vcmask 1043458
    %v125 = vsel %vm124, %v123, %v120
    %126 = vrot.lane.b32.xlu0 %v125, 48
    %v127 = vpop.permute.xlu0 %126
    %vm128 = vcmask 458112
    %129 = vst.msk [vmem:[#allocation0] sm:$0xf] %vm128, %v127
    %s130 = scalar_lea.vmem %s0, 5
    %s131 = smov 3
    %v132 = vld [vmem:[%s130] ss:$16 sm:%s131]
    %s133 = scalar_lea.vmem %s0, 5
    %s134 = smov 12
    %v135 = vld [vmem:[%s133] ss:$16 sm:%s134]
    %vm136 = vcmask 1043458
    %v137 = vsel %vm136, %v135, %v132
    %138 = vrot.lane.b32.xlu0 %v137, 40
    %v139 = vpop.permute.xlu0 %138
    %vm140 = vcmask 392512
    %141 = vst.msk [vmem:[#allocation0] sm:$0xf] %vm140, %v139
    %s142 = scalar_lea.vmem %s0, 4
    %s143 = smov 3
    %v144 = vld [vmem:[%s142] ss:$16 sm:%s143]
    %s145 = scalar_lea.vmem %s0, 4
    %s146 = smov 12
    %v147 = vld [vmem:[%s145] ss:$16 sm:%s146]
    %vm148 = vcmask 1043458
    %v149 = vsel %vm148, %v147, %v144
    %150 = vrot.lane.b32.xlu0 %v149, 32
    %v151 = vpop.permute.xlu0 %150
    %vm152 = vcmask 326912
    %153 = vst.msk [vmem:[#allocation0] sm:$0xf] %vm152, %v151
    %s154 = scalar_lea.vmem %s0, 3
    %s155 = smov 3
    %v156 = vld [vmem:[%s154] ss:$16 sm:%s155]
    %s157 = scalar_lea.vmem %s0, 3
    %s158 = smov 12
    %v159 = vld [vmem:[%s157] ss:$16 sm:%s158]
    %vm160 = vcmask 1043458
    %v161 = vsel %vm160, %v159, %v156
    %162 = vrot.lane.b32.xlu0 %v161, 24
    %v163 = vpop.permute.xlu0 %162
    %vm164 = vcmask 261312
    %165 = vst.msk [vmem:[#allocation0] sm:$0xf] %vm164, %v163
    %s166 = scalar_lea.vmem %s0, 2
    %s167 = smov 3
    %v168 = vld [vmem:[%s166] ss:$16 sm:%s167]
    %s169 = scalar_lea.vmem %s0, 2
    %s170 = smov 12
    %v171 = vld [vmem:[%s169] ss:$16 sm:%s170]
    %vm172 = vcmask 1043458
    %v173 = vsel %vm172, %v171, %v168
    %174 = vrot.lane.b32.xlu0 %v173, 16
    %v175 = vpop.permute.xlu0 %174
    %vm176 = vcmask 195712
    %177 = vst.msk [vmem:[#allocation0] sm:$0xf] %vm176, %v175
    %s178 = scalar_lea.vmem %s0, 1
    %s179 = smov 3
    %v180 = vld [vmem:[%s178] ss:$16 sm:%s179]
    %s181 = scalar_lea.vmem %s0, 1
    %s182 = smov 12
    %v183 = vld [vmem:[%s181] ss:$16 sm:%s182]
    %vm184 = vcmask 1043458
    %v185 = vsel %vm184, %v183, %v180
    %186 = vrot.lane.b32.xlu0 %v185, 8
    %v187 = vpop.permute.xlu0 %186
    %vm188 = vcmask 130112
    %189 = vst.msk [vmem:[#allocation0] sm:$0xf] %vm188, %v187
    %s191 = ssub.s32 16, 1
    %v192 = vld [vmem:[#allocation0] sm:%s191]
    %s194 = ssub.s32 16, 1
    %195 = vst [vmem:[%s1] sm:%s194] %v192

// kernel: nemf_forward.2
$region0: #{nemf_forward.2}
  #allocation0 [shape = 'u32[]', space=smem, size = 0x4, offset = 0x4, fixed_abs, tag = 'smem constant byte address 0x4 - core index']
  #allocation1 [shape = 'u32[72,128]{1,0:T(1,128)}', space=vmem, size = 0x9000, scoped, tag = 'internal scratch']
  %s0 = inlined_call_operand.vmem [shape: f32[1024,3], index: 0, kind: input, shape index: {}]
  %s1 = inlined_call_operand.vmem [shape: f32[3,128], index: 1, kind: input, shape index: {}]
  %s2 = inlined_call_operand.vmem [shape: f32[1,128], index: 2, kind: input, shape index: {}]
  %s3 = inlined_call_operand.vmem [shape: f32[1024,128], index: 3, kind: output, shape index: {}]
  %s4 = sld [smem:[#allocation0]]
  $region22: #{nemf_forward.2} parent=0
    _
  %s6 = ssub.s32 1, %s4
  %s7 = scalar_select 0, %s6, %s4
  // Predicated region
  $region2: #{nemf_forward.2} parent=0 // pred_check
    _
  $region3: #{nemf_forward.2} parent=0 // pred_check_branch
    %9 = sbr.rel (0) target = $region5
  $region4: #{nemf_forward.2} parent=0 // pred_region
    _
  $region5: #{nemf_forward.2} parent=0 // pred_fallthru
    _
  // Predicated region
  $region6: #{nemf_forward.2} parent=0 // pred_check
    _
  $region7: #{nemf_forward.2} parent=0 // pred_check_branch
    %11 = sbr.rel (0) target = $region9
  $region8: #{nemf_forward.2} parent=0 // pred_region
    _
  $region9: #{nemf_forward.2} parent=0 // pred_fallthru
    _
  // Predicated region
  $region10: #{nemf_forward.2} parent=0 // pred_check
    _
  $region11: #{nemf_forward.2} parent=0 // pred_check_branch
    %13 = sbr.rel (0) target = $region13
  $region12: #{nemf_forward.2} parent=0 // pred_region
    _
  $region13: #{nemf_forward.2} parent=0 // pred_fallthru
    _
  %v14 = vld [vmem:[%s0] sm:$0xff]
  %v15 = vld [vmem:[%s0 + $0x8] sm:$0xff]
  %v16 = vld [vmem:[%s0 + $0x10] sm:$0xff]
  %v17 = vld [vmem:[%s0 + $0x18] sm:$0xff]
  %v18 = vld [vmem:[%s0 + $0x20] sm:$0xff]
  %v19 = vld [vmem:[%s0 + $0x28] sm:$0xff]
  %v20 = vld [vmem:[%s0 + $0x30] sm:$0xff]
  %v21 = vld [vmem:[%s0 + $0x38] sm:$0xff]
  %v22 = vld [vmem:[%s0 + $0x40] sm:$0xff]
  %v23 = vld [vmem:[%s0 + $0x48] sm:$0xff]
  %v24 = vld [vmem:[%s0 + $0x50] sm:$0xff]
  %v25 = vld [vmem:[%s0 + $0x58] sm:$0xff]
  %v26 = vld [vmem:[%s0 + $0x60] sm:$0xff]
  %v27 = vld [vmem:[%s0 + $0x68] sm:$0xff]
  %v28 = vld [vmem:[%s0 + $0x70] sm:$0xff]
  %v29 = vld [vmem:[%s0 + $0x78] sm:$0xff]
  %v30 = vld [vmem:[%s0 + $0x80] sm:$0xff]
  %v31 = vld [vmem:[%s0 + $0x88] sm:$0xff]
  %v32 = vld [vmem:[%s0 + $0x90] sm:$0xff]
  %v33 = vld [vmem:[%s0 + $0x98] sm:$0xff]
  %v34 = vld [vmem:[%s0 + $0xa0] sm:$0xff]
  %v35 = vld [vmem:[%s0 + $0xa8] sm:$0xff]
  %v36 = vld [vmem:[%s0 + $0xb0] sm:$0xff]
  %v37 = vld [vmem:[%s0 + $0xb8] sm:$0xff]
  %v38 = vld [vmem:[%s0 + $0xc0] sm:$0xff]
  %v39 = vld [vmem:[%s0 + $0xc8] sm:$0xff]
  %v40 = vld [vmem:[%s0 + $0xd0] sm:$0xff]
  %v41 = vld [vmem:[%s0 + $0xd8] sm:$0xff]
  %v42 = vld [vmem:[%s0 + $0xe0] sm:$0xff]
  %v43 = vld [vmem:[%s0 + $0xe8] sm:$0xff]
  %v44 = vld [vmem:[%s0 + $0xf0] sm:$0xff]
  %v45 = vld [vmem:[%s0 + $0xf8] sm:$0xff]
  %v46 = vld [vmem:[%s0 + $0x100] sm:$0xff]
  %v47 = vld [vmem:[%s0 + $0x108] sm:$0xff]
  %v48 = vld [vmem:[%s0 + $0x110] sm:$0xff]
  %v49 = vld [vmem:[%s0 + $0x118] sm:$0xff]
  %v50 = vld [vmem:[%s0 + $0x120] sm:$0xff]
  %v51 = vld [vmem:[%s0 + $0x128] sm:$0xff]
  %v52 = vld [vmem:[%s0 + $0x130] sm:$0xff]
  %v53 = vld [vmem:[%s0 + $0x138] sm:$0xff]
  %v54 = vld [vmem:[%s0 + $0x140] sm:$0xff]
  %v55 = vld [vmem:[%s0 + $0x148] sm:$0xff]
  %v56 = vld [vmem:[%s0 + $0x150] sm:$0xff]
  %v57 = vld [vmem:[%s0 + $0x158] sm:$0xff]
  %v58 = vld [vmem:[%s0 + $0x160] sm:$0xff]
  %v59 = vld [vmem:[%s0 + $0x168] sm:$0xff]
  %v60 = vld [vmem:[%s0 + $0x170] sm:$0xff]
  %v61 = vld [vmem:[%s0 + $0x178] sm:$0xff]
  %v62 = vld [vmem:[%s0 + $0x180] sm:$0xff]
  %v63 = vld [vmem:[%s0 + $0x188] sm:$0xff]
  %v64 = vld [vmem:[%s0 + $0x190] sm:$0xff]
  %v65 = vld [vmem:[%s0 + $0x198] sm:$0xff]
  %v66 = vld [vmem:[%s0 + $0x1a0] sm:$0xff]
  %v67 = vld [vmem:[%s0 + $0x1a8] sm:$0xff]
  %v68 = vld [vmem:[%s0 + $0x1b0] sm:$0xff]
  %v69 = vld [vmem:[%s0 + $0x1b8] sm:$0xff]
  %v70 = vld [vmem:[%s0 + $0x1c0] sm:$0xff]
  %v71 = vld [vmem:[%s0 + $0x1c8] sm:$0xff]
  %v72 = vld [vmem:[%s0 + $0x1d0] sm:$0xff]
  %v73 = vld [vmem:[%s0 + $0x1d8] sm:$0xff]
  %v74 = vld [vmem:[%s0 + $0x1e0] sm:$0xff]
  %v75 = vld [vmem:[%s0 + $0x1e8] sm:$0xff]
  %v76 = vld [vmem:[%s0 + $0x1f0] sm:$0xff]
  %v77 = vld [vmem:[%s0 + $0x1f8] sm:$0xff]
  %v78 = vld [vmem:[%s0 + $0x200] sm:$0xff]
  %v79 = vld [vmem:[%s0 + $0x208] sm:$0xff]
  %v80 = vld [vmem:[%s0 + $0x210] sm:$0xff]
  %v81 = vld [vmem:[%s0 + $0x218] sm:$0xff]
  %v82 = vld [vmem:[%s0 + $0x220] sm:$0xff]
  %v83 = vld [vmem:[%s0 + $0x228] sm:$0xff]
  %v84 = vld [vmem:[%s0 + $0x230] sm:$0xff]
  %v85 = vld [vmem:[%s0 + $0x238] sm:$0xff]
  %v86 = vld [vmem:[%s0 + $0x240] sm:$0xff]
  %v87 = vld [vmem:[%s0 + $0x248] sm:$0xff]
  %v88 = vld [vmem:[%s0 + $0x250] sm:$0xff]
  %v89 = vld [vmem:[%s0 + $0x258] sm:$0xff]
  %v90 = vld [vmem:[%s0 + $0x260] sm:$0xff]
  %v91 = vld [vmem:[%s0 + $0x268] sm:$0xff]
  %v92 = vld [vmem:[%s0 + $0x270] sm:$0xff]
  %v93 = vld [vmem:[%s0 + $0x278] sm:$0xff]
  %v94 = vld [vmem:[%s0 + $0x280] sm:$0xff]
  %v95 = vld [vmem:[%s0 + $0x288] sm:$0xff]
  %v96 = vld [vmem:[%s0 + $0x290] sm:$0xff]
  %v97 = vld [vmem:[%s0 + $0x298] sm:$0xff]
  %v98 = vld [vmem:[%s0 + $0x2a0] sm:$0xff]
  %v99 = vld [vmem:[%s0 + $0x2a8] sm:$0xff]
  %v100 = vld [vmem:[%s0 + $0x2b0] sm:$0xff]
  %v101 = vld [vmem:[%s0 + $0x2b8] sm:$0xff]
  %v102 = vld [vmem:[%s0 + $0x2c0] sm:$0xff]
  %v103 = vld [vmem:[%s0 + $0x2c8] sm:$0xff]
  %v104 = vld [vmem:[%s0 + $0x2d0] sm:$0xff]
  %v105 = vld [vmem:[%s0 + $0x2d8] sm:$0xff]
  %v106 = vld [vmem:[%s0 + $0x2e0] sm:$0xff]
  %v107 = vld [vmem:[%s0 + $0x2e8] sm:$0xff]
  %v108 = vld [vmem:[%s0 + $0x2f0] sm:$0xff]
  %v109 = vld [vmem:[%s0 + $0x2f8] sm:$0xff]
  %v110 = vld [vmem:[%s0 + $0x300] sm:$0xff]
  %v111 = vld [vmem:[%s0 + $0x308] sm:$0xff]
  %v112 = vld [vmem:[%s0 + $0x310] sm:$0xff]
  %v113 = vld [vmem:[%s0 + $0x318] sm:$0xff]
  %v114 = vld [vmem:[%s0 + $0x320] sm:$0xff]
  %v115 = vld [vmem:[%s0 + $0x328] sm:$0xff]
  %v116 = vld [vmem:[%s0 + $0x330] sm:$0xff]
  %v117 = vld [vmem:[%s0 + $0x338] sm:$0xff]
  %v118 = vld [vmem:[%s0 + $0x340] sm:$0xff]
  %v119 = vld [vmem:[%s0 + $0x348] sm:$0xff]
  %v120 = vld [vmem:[%s0 + $0x350] sm:$0xff]
  %v121 = vld [vmem:[%s0 + $0x358] sm:$0xff]
  %v122 = vld [vmem:[%s0 + $0x360] sm:$0xff]
  %v123 = vld [vmem:[%s0 + $0x368] sm:$0xff]
  %v124 = vld [vmem:[%s0 + $0x370] sm:$0xff]
  %v125 = vld [vmem:[%s0 + $0x378] sm:$0xff]
  %v126 = vld [vmem:[%s0 + $0x380] sm:$0xff]
  %v127 = vld [vmem:[%s0 + $0x388] sm:$0xff]
  %v128 = vld [vmem:[%s0 + $0x390] sm:$0xff]
  %v129 = vld [vmem:[%s0 + $0x398] sm:$0xff]
  %v130 = vld [vmem:[%s0 + $0x3a0] sm:$0xff]
  %v131 = vld [vmem:[%s0 + $0x3a8] sm:$0xff]
  %v132 = vld [vmem:[%s0 + $0x3b0] sm:$0xff]
  %v133 = vld [vmem:[%s0 + $0x3b8] sm:$0xff]
  %v134 = vld [vmem:[%s0 + $0x3c0] sm:$0xff]
  %v135 = vld [vmem:[%s0 + $0x3c8] sm:$0xff]
  %v136 = vld [vmem:[%s0 + $0x3d0] sm:$0xff]
  %v137 = vld [vmem:[%s0 + $0x3d8] sm:$0xff]
  %v138 = vld [vmem:[%s0 + $0x3e0] sm:$0xff]
  %v139 = vld [vmem:[%s0 + $0x3e8] sm:$0xff]
  %v140 = vld [vmem:[%s0 + $0x3f0] sm:$0xff]
  %v141 = vld [vmem:[%s0 + $0x3f8] sm:$0xff]
  %v142 = vld [vmem:[%s1] sm:$0x7]
  %v143 = vld [vmem:[%s2] sm:$0x1]
  %145 = vset.pattern.permute.xlu0 0
  %146 = vperm.xlu0 %145, %v14
  %v147 = vpop.permute.xlu0 %146
  %150 = vset.pattern.permute.xlu0 0
  %151 = vperm.xlu0 %150, %v15
  %v152 = vpop.permute.xlu0 %151
  %155 = vset.pattern.permute.xlu0 0
  %156 = vperm.xlu0 %155, %v16
  %v157 = vpop.permute.xlu0 %156
  %160 = vset.pattern.permute.xlu0 0
  %161 = vperm.xlu0 %160, %v17
  %v162 = vpop.permute.xlu0 %161
  %165 = vset.pattern.permute.xlu0 0
  %166 = vperm.xlu0 %165, %v18
  %v167 = vpop.permute.xlu0 %166
  %170 = vset.pattern.permute.xlu0 0
  %171 = vperm.xlu0 %170, %v19
  %v172 = vpop.permute.xlu0 %171
  %175 = vset.pattern.permute.xlu0 0
  %176 = vperm.xlu0 %175, %v20
  %v177 = vpop.permute.xlu0 %176
  %180 = vset.pattern.permute.xlu0 0
  %181 = vperm.xlu0 %180, %v21
  %v182 = vpop.permute.xlu0 %181
  %185 = vset.pattern.permute.xlu0 0
  %186 = vperm.xlu0 %185, %v22
  %v187 = vpop.permute.xlu0 %186
  %190 = vset.pattern.permute.xlu0 0
  %191 = vperm.xlu0 %190, %v23
  %v192 = vpop.permute.xlu0 %191
  %195 = vset.pattern.permute.xlu0 0
  %196 = vperm.xlu0 %195, %v24
  %v197 = vpop.permute.xlu0 %196
  %200 = vset.pattern.permute.xlu0 0
  %201 = vperm.xlu0 %200, %v25
  %v202 = vpop.permute.xlu0 %201
  %205 = vset.pattern.permute.xlu0 0
  %206 = vperm.xlu0 %205, %v26
  %v207 = vpop.permute.xlu0 %206
  %210 = vset.pattern.permute.xlu0 0
  %211 = vperm.xlu0 %210, %v27
  %v212 = vpop.permute.xlu0 %211
  %215 = vset.pattern.permute.xlu0 0
  %216 = vperm.xlu0 %215, %v28
  %v217 = vpop.permute.xlu0 %216
  %220 = vset.pattern.permute.xlu0 0
  %221 = vperm.xlu0 %220, %v29
  %v222 = vpop.permute.xlu0 %221
  %225 = vset.pattern.permute.xlu0 0
  %226 = vperm.xlu0 %225, %v30
  %v227 = vpop.permute.xlu0 %226
  %230 = vset.pattern.permute.xlu0 0
  %231 = vperm.xlu0 %230, %v31
  %v232 = vpop.permute.xlu0 %231
  %235 = vset.pattern.permute.xlu0 0
  %236 = vperm.xlu0 %235, %v32
  %v237 = vpop.permute.xlu0 %236
  %240 = vset.pattern.permute.xlu0 0
  %241 = vperm.xlu0 %240, %v33
  %v242 = vpop.permute.xlu0 %241
  %245 = vset.pattern.permute.xlu0 0
  %246 = vperm.xlu0 %245, %v34
  %v247 = vpop.permute.xlu0 %246
  %250 = vset.pattern.permute.xlu0 0
  %251 = vperm.xlu0 %250, %v35
  %v252 = vpop.permute.xlu0 %251
  %255 = vset.pattern.permute.xlu0 0
  %256 = vperm.xlu0 %255, %v36
  %v257 = vpop.permute.xlu0 %256
  %260 = vset.pattern.permute.xlu0 0
  %261 = vperm.xlu0 %260, %v37
  %v262 = vpop.permute.xlu0 %261
  %265 = vset.pattern.permute.xlu0 0
  %266 = vperm.xlu0 %265, %v38
  %v267 = vpop.permute.xlu0 %266
  %270 = vset.pattern.permute.xlu0 0
  %271 = vperm.xlu0 %270, %v39
  %v272 = vpop.permute.xlu0 %271
  %275 = vset.pattern.permute.xlu0 0
  %276 = vperm.xlu0 %275, %v40
  %v277 = vpop.permute.xlu0 %276
  %280 = vset.pattern.permute.xlu0 0
  %281 = vperm.xlu0 %280, %v41
  %v282 = vpop.permute.xlu0 %281
  %285 = vset.pattern.permute.xlu0 0
  %286 = vperm.xlu0 %285, %v42
  %v287 = vpop.permute.xlu0 %286
  %290 = vset.pattern.permute.xlu0 0
  %291 = vperm.xlu0 %290, %v43
  %v292 = vpop.permute.xlu0 %291
  %295 = vset.pattern.permute.xlu0 0
  %296 = vperm.xlu0 %295, %v44
  %v297 = vpop.permute.xlu0 %296
  %300 = vset.pattern.permute.xlu0 0
  %301 = vperm.xlu0 %300, %v45
  %v302 = vpop.permute.xlu0 %301
  %305 = vset.pattern.permute.xlu0 0
  %306 = vperm.xlu0 %305, %v46
  %v307 = vpop.permute.xlu0 %306
  %310 = vset.pattern.permute.xlu0 0
  %311 = vperm.xlu0 %310, %v47
  %v312 = vpop.permute.xlu0 %311
  %315 = vset.pattern.permute.xlu0 0
  %316 = vperm.xlu0 %315, %v48
  %v317 = vpop.permute.xlu0 %316
  %320 = vset.pattern.permute.xlu0 0
  %321 = vperm.xlu0 %320, %v49
  %v322 = vpop.permute.xlu0 %321
  %325 = vset.pattern.permute.xlu0 0
  %326 = vperm.xlu0 %325, %v50
  %v327 = vpop.permute.xlu0 %326
  %330 = vset.pattern.permute.xlu0 0
  %331 = vperm.xlu0 %330, %v51
  %v332 = vpop.permute.xlu0 %331
  %335 = vset.pattern.permute.xlu0 0
  %336 = vperm.xlu0 %335, %v52
  %v337 = vpop.permute.xlu0 %336
  %340 = vset.pattern.permute.xlu0 0
  %341 = vperm.xlu0 %340, %v53
  %v342 = vpop.permute.xlu0 %341
  %345 = vset.pattern.permute.xlu0 0
  %346 = vperm.xlu0 %345, %v54
  %v347 = vpop.permute.xlu0 %346
  %350 = vset.pattern.permute.xlu0 0
  %351 = vperm.xlu0 %350, %v55
  %v352 = vpop.permute.xlu0 %351
  %355 = vset.pattern.permute.xlu0 0
  %356 = vperm.xlu0 %355, %v56
  %v357 = vpop.permute.xlu0 %356
  %360 = vset.pattern.permute.xlu0 0
  %361 = vperm.xlu0 %360, %v57
  %v362 = vpop.permute.xlu0 %361
  %365 = vset.pattern.permute.xlu0 0
  %366 = vperm.xlu0 %365, %v58
  %v367 = vpop.permute.xlu0 %366
  %370 = vset.pattern.permute.xlu0 0
  %371 = vperm.xlu0 %370, %v59
  %v372 = vpop.permute.xlu0 %371
  %375 = vset.pattern.permute.xlu0 0
  %376 = vperm.xlu0 %375, %v60
  %v377 = vpop.permute.xlu0 %376
  %380 = vset.pattern.permute.xlu0 0
  %381 = vperm.xlu0 %380, %v61
  %v382 = vpop.permute.xlu0 %381
  %385 = vset.pattern.permute.xlu0 0
  %386 = vperm.xlu0 %385, %v62
  %v387 = vpop.permute.xlu0 %386
  %390 = vset.pattern.permute.xlu0 0
  %391 = vperm.xlu0 %390, %v63
  %v392 = vpop.permute.xlu0 %391
  %395 = vset.pattern.permute.xlu0 0
  %396 = vperm.xlu0 %395, %v64
  %v397 = vpop.permute.xlu0 %396
  %400 = vset.pattern.permute.xlu0 0
  %401 = vperm.xlu0 %400, %v65
  %v402 = vpop.permute.xlu0 %401
  %405 = vset.pattern.permute.xlu0 0
  %406 = vperm.xlu0 %405, %v66
  %v407 = vpop.permute.xlu0 %406
  %410 = vset.pattern.permute.xlu0 0
  %411 = vperm.xlu0 %410, %v67
  %v412 = vpop.permute.xlu0 %411
  %415 = vset.pattern.permute.xlu0 0
  %416 = vperm.xlu0 %415, %v68
  %v417 = vpop.permute.xlu0 %416
  %420 = vset.pattern.permute.xlu0 0
  %421 = vperm.xlu0 %420, %v69
  %v422 = vpop.permute.xlu0 %421
  %425 = vset.pattern.permute.xlu0 0
  %426 = vperm.xlu0 %425, %v70
  %v427 = vpop.permute.xlu0 %426
  %430 = vset.pattern.permute.xlu0 0
  %431 = vperm.xlu0 %430, %v71
  %v432 = vpop.permute.xlu0 %431
  %435 = vset.pattern.permute.xlu0 0
  %436 = vperm.xlu0 %435, %v72
  %v437 = vpop.permute.xlu0 %436
  %440 = vset.pattern.permute.xlu0 0
  %441 = vperm.xlu0 %440, %v73
  %v442 = vpop.permute.xlu0 %441
  %445 = vset.pattern.permute.xlu0 0
  %446 = vperm.xlu0 %445, %v74
  %v447 = vpop.permute.xlu0 %446
  %450 = vset.pattern.permute.xlu0 0
  %451 = vperm.xlu0 %450, %v75
  %v452 = vpop.permute.xlu0 %451
  %455 = vset.pattern.permute.xlu0 0
  %456 = vperm.xlu0 %455, %v76
  %v457 = vpop.permute.xlu0 %456
  %460 = vset.pattern.permute.xlu0 0
  %461 = vperm.xlu0 %460, %v77
  %v462 = vpop.permute.xlu0 %461
  %465 = vset.pattern.permute.xlu0 0
  %466 = vperm.xlu0 %465, %v78
  %v467 = vpop.permute.xlu0 %466
  %470 = vset.pattern.permute.xlu0 0
  %471 = vperm.xlu0 %470, %v79
  %v472 = vpop.permute.xlu0 %471
  %475 = vset.pattern.permute.xlu0 0
  %476 = vperm.xlu0 %475, %v80
  %v477 = vpop.permute.xlu0 %476
  %480 = vset.pattern.permute.xlu0 0
  %481 = vperm.xlu0 %480, %v81
  %v482 = vpop.permute.xlu0 %481
  %485 = vset.pattern.permute.xlu0 0
  %486 = vperm.xlu0 %485, %v82
  %v487 = vpop.permute.xlu0 %486
  %490 = vset.pattern.permute.xlu0 0
  %491 = vperm.xlu0 %490, %v83
  %v492 = vpop.permute.xlu0 %491
  %495 = vset.pattern.permute.xlu0 0
  %496 = vperm.xlu0 %495, %v84
  %v497 = vpop.permute.xlu0 %496
  %500 = vset.pattern.permute.xlu0 0
  %501 = vperm.xlu0 %500, %v85
  %v502 = vpop.permute.xlu0 %501
  %505 = vset.pattern.permute.xlu0 0
  %506 = vperm.xlu0 %505, %v86
  %v507 = vpop.permute.xlu0 %506
  %510 = vset.pattern.permute.xlu0 0
  %511 = vperm.xlu0 %510, %v87
  %v512 = vpop.permute.xlu0 %511
  %515 = vset.pattern.permute.xlu0 0
  %516 = vperm.xlu0 %515, %v88
  %v517 = vpop.permute.xlu0 %516
  %520 = vset.pattern.permute.xlu0 0
  %521 = vperm.xlu0 %520, %v89
  %v522 = vpop.permute.xlu0 %521
  %525 = vset.pattern.permute.xlu0 0
  %526 = vperm.xlu0 %525, %v90
  %v527 = vpop.permute.xlu0 %526
  %530 = vset.pattern.permute.xlu0 0
  %531 = vperm.xlu0 %530, %v91
  %v532 = vpop.permute.xlu0 %531
  %535 = vset.pattern.permute.xlu0 0
  %536 = vperm.xlu0 %535, %v92
  %v537 = vpop.permute.xlu0 %536
  %540 = vset.pattern.permute.xlu0 0
  %541 = vperm.xlu0 %540, %v93
  %v542 = vpop.permute.xlu0 %541
  %545 = vset.pattern.permute.xlu0 0
  %546 = vperm.xlu0 %545, %v94
  %v547 = vpop.permute.xlu0 %546
  %550 = vset.pattern.permute.xlu0 0
  %551 = vperm.xlu0 %550, %v95
  %v552 = vpop.permute.xlu0 %551
  %555 = vset.pattern.permute.xlu0 0
  %556 = vperm.xlu0 %555, %v96
  %v557 = vpop.permute.xlu0 %556
  %560 = vset.pattern.permute.xlu0 0
  %561 = vperm.xlu0 %560, %v97
  %v562 = vpop.permute.xlu0 %561
  %565 = vset.pattern.permute.xlu0 0
  %566 = vperm.xlu0 %565, %v98
  %v567 = vpop.permute.xlu0 %566
  %570 = vset.pattern.permute.xlu0 0
  %571 = vperm.xlu0 %570, %v99
  %v572 = vpop.permute.xlu0 %571
  %575 = vset.pattern.permute.xlu0 0
  %576 = vperm.xlu0 %575, %v100
  %v577 = vpop.permute.xlu0 %576
  %580 = vset.pattern.permute.xlu0 0
  %581 = vperm.xlu0 %580, %v101
  %v582 = vpop.permute.xlu0 %581
  %585 = vset.pattern.permute.xlu0 0
  %586 = vperm.xlu0 %585, %v102
  %v587 = vpop.permute.xlu0 %586
  %590 = vset.pattern.permute.xlu0 0
  %591 = vperm.xlu0 %590, %v103
  %v592 = vpop.permute.xlu0 %591
  %595 = vset.pattern.permute.xlu0 0
  %596 = vperm.xlu0 %595, %v104
  %v597 = vpop.permute.xlu0 %596
  %600 = vset.pattern.permute.xlu0 0
  %601 = vperm.xlu0 %600, %v105
  %v602 = vpop.permute.xlu0 %601
  %605 = vset.pattern.permute.xlu0 0
  %606 = vperm.xlu0 %605, %v106
  %v607 = vpop.permute.xlu0 %606
  %610 = vset.pattern.permute.xlu0 0
  %611 = vperm.xlu0 %610, %v107
  %v612 = vpop.permute.xlu0 %611
  %615 = vset.pattern.permute.xlu0 0
  %616 = vperm.xlu0 %615, %v108
  %v617 = vpop.permute.xlu0 %616
  %620 = vset.pattern.permute.xlu0 0
  %621 = vperm.xlu0 %620, %v109
  %v622 = vpop.permute.xlu0 %621
  %625 = vset.pattern.permute.xlu0 0
  %626 = vperm.xlu0 %625, %v110
  %v627 = vpop.permute.xlu0 %626
  %630 = vset.pattern.permute.xlu0 0
  %631 = vperm.xlu0 %630, %v111
  %v632 = vpop.permute.xlu0 %631
  %635 = vset.pattern.permute.xlu0 0
  %636 = vperm.xlu0 %635, %v112
  %v637 = vpop.permute.xlu0 %636
  %640 = vset.pattern.permute.xlu0 0
  %641 = vperm.xlu0 %640, %v113
  %v642 = vpop.permute.xlu0 %641
  %645 = vset.pattern.permute.xlu0 0
  %646 = vperm.xlu0 %645, %v114
  %v647 = vpop.permute.xlu0 %646
  %650 = vset.pattern.permute.xlu0 0
  %651 = vperm.xlu0 %650, %v115
  %v652 = vpop.permute.xlu0 %651
  %655 = vset.pattern.permute.xlu0 0
  %656 = vperm.xlu0 %655, %v116
  %v657 = vpop.permute.xlu0 %656
  %660 = vset.pattern.permute.xlu0 0
  %661 = vperm.xlu0 %660, %v117
  %v662 = vpop.permute.xlu0 %661
  %665 = vset.pattern.permute.xlu0 0
  %666 = vperm.xlu0 %665, %v118
  %v667 = vpop.permute.xlu0 %666
  %670 = vset.pattern.permute.xlu0 0
  %671 = vperm.xlu0 %670, %v119
  %v672 = vpop.permute.xlu0 %671
  %675 = vset.pattern.permute.xlu0 0
  %676 = vperm.xlu0 %675, %v120
  %v677 = vpop.permute.xlu0 %676
  %680 = vset.pattern.permute.xlu0 0
  %681 = vperm.xlu0 %680, %v121
  %v682 = vpop.permute.xlu0 %681
  %685 = vset.pattern.permute.xlu0 0
  %686 = vperm.xlu0 %685, %v122
  %v687 = vpop.permute.xlu0 %686
  %690 = vset.pattern.permute.xlu0 0
  %691 = vperm.xlu0 %690, %v123
  %v692 = vpop.permute.xlu0 %691
  %695 = vset.pattern.permute.xlu0 0
  %696 = vperm.xlu0 %695, %v124
  %v697 = vpop.permute.xlu0 %696
  %700 = vset.pattern.permute.xlu0 0
  %701 = vperm.xlu0 %700, %v125
  %v702 = vpop.permute.xlu0 %701
  %705 = vset.pattern.permute.xlu0 0
  %706 = vperm.xlu0 %705, %v126
  %v707 = vpop.permute.xlu0 %706
  %710 = vset.pattern.permute.xlu0 0
  %711 = vperm.xlu0 %710, %v127
  %v712 = vpop.permute.xlu0 %711
  %715 = vset.pattern.permute.xlu0 0
  %716 = vperm.xlu0 %715, %v128
  %v717 = vpop.permute.xlu0 %716
  %720 = vset.pattern.permute.xlu0 0
  %721 = vperm.xlu0 %720, %v129
  %v722 = vpop.permute.xlu0 %721
  %725 = vset.pattern.permute.xlu0 0
  %726 = vperm.xlu0 %725, %v130
  %v727 = vpop.permute.xlu0 %726
  %730 = vset.pattern.permute.xlu0 0
  %731 = vperm.xlu0 %730, %v131
  %v732 = vpop.permute.xlu0 %731
  %735 = vset.pattern.permute.xlu0 0
  %736 = vperm.xlu0 %735, %v132
  %v737 = vpop.permute.xlu0 %736
  %740 = vset.pattern.permute.xlu0 0
  %741 = vperm.xlu0 %740, %v133
  %v742 = vpop.permute.xlu0 %741
  %745 = vset.pattern.permute.xlu0 0
  %746 = vperm.xlu0 %745, %v134
  %v747 = vpop.permute.xlu0 %746
  %750 = vset.pattern.permute.xlu0 0
  %751 = vperm.xlu0 %750, %v135
  %v752 = vpop.permute.xlu0 %751
  %755 = vset.pattern.permute.xlu0 0
  %756 = vperm.xlu0 %755, %v136
  %v757 = vpop.permute.xlu0 %756
  %760 = vset.pattern.permute.xlu0 0
  %761 = vperm.xlu0 %760, %v137
  %v762 = vpop.permute.xlu0 %761
  %765 = vset.pattern.permute.xlu0 0
  %766 = vperm.xlu0 %765, %v138
  %v767 = vpop.permute.xlu0 %766
  %770 = vset.pattern.permute.xlu0 0
  %771 = vperm.xlu0 %770, %v139
  %v772 = vpop.permute.xlu0 %771
  %775 = vset.pattern.permute.xlu0 0
  %776 = vperm.xlu0 %775, %v140
  %v777 = vpop.permute.xlu0 %776
  %780 = vset.pattern.permute.xlu0 0
  %781 = vperm.xlu0 %780, %v141
  %v782 = vpop.permute.xlu0 %781
  %v784 = vperm.slane %v142, 0
  %v785 = vmul.f32 %v147, %v784
  %v786 = vmul.f32 %v152, %v784
  %v787 = vmul.f32 %v157, %v784
  %v788 = vmul.f32 %v162, %v784
  %v789 = vmul.f32 %v167, %v784
  %v790 = vmul.f32 %v172, %v784
  %v791 = vmul.f32 %v177, %v784
  %v792 = vmul.f32 %v182, %v784
  %v793 = vmul.f32 %v187, %v784
  %v794 = vmul.f32 %v192, %v784
  %v795 = vmul.f32 %v197, %v784
  %v796 = vmul.f32 %v202, %v784
  %v797 = vmul.f32 %v207, %v784
  %v798 = vmul.f32 %v212, %v784
  %v799 = vmul.f32 %v217, %v784
  %v800 = vmul.f32 %v222, %v784
  %v801 = vmul.f32 %v227, %v784
  %v802 = vmul.f32 %v232, %v784
  %v803 = vmul.f32 %v237, %v784
  %v804 = vmul.f32 %v242, %v784
  %v805 = vmul.f32 %v247, %v784
  %v806 = vmul.f32 %v252, %v784
  %v807 = vmul.f32 %v257, %v784
  %v808 = vmul.f32 %v262, %v784
  %v809 = vmul.f32 %v267, %v784
  %v810 = vmul.f32 %v272, %v784
  %v811 = vmul.f32 %v277, %v784
  %v812 = vmul.f32 %v282, %v784
  %v813 = vmul.f32 %v287, %v784
  %v814 = vmul.f32 %v292, %v784
  %v815 = vmul.f32 %v297, %v784
  %v816 = vmul.f32 %v302, %v784
  %v817 = vmul.f32 %v307, %v784
  %v818 = vmul.f32 %v312, %v784
  %v819 = vmul.f32 %v317, %v784
  %v820 = vmul.f32 %v322, %v784
  %v821 = vmul.f32 %v327, %v784
  %v822 = vmul.f32 %v332, %v784
  %v823 = vmul.f32 %v337, %v784
  %v824 = vmul.f32 %v342, %v784
  %v825 = vmul.f32 %v347, %v784
  %v826 = vmul.f32 %v352, %v784
  %v827 = vmul.f32 %v357, %v784
  %v828 = vmul.f32 %v362, %v784
  %v829 = vmul.f32 %v367, %v784
  %v830 = vmul.f32 %v372, %v784
  %v831 = vmul.f32 %v377, %v784
  %v832 = vmul.f32 %v382, %v784
  %v833 = vmul.f32 %v387, %v784
  %v834 = vmul.f32 %v392, %v784
  %v835 = vmul.f32 %v397, %v784
  %v836 = vmul.f32 %v402, %v784
  %v837 = vmul.f32 %v407, %v784
  %v838 = vmul.f32 %v412, %v784
  %v839 = vmul.f32 %v417, %v784
  %v840 = vmul.f32 %v422, %v784
  %v841 = vmul.f32 %v427, %v784
  %v842 = vmul.f32 %v432, %v784
  %v843 = vmul.f32 %v437, %v784
  %v844 = vmul.f32 %v442, %v784
  %v845 = vmul.f32 %v447, %v784
  %v846 = vmul.f32 %v452, %v784
  %v847 = vmul.f32 %v457, %v784
  %v848 = vmul.f32 %v462, %v784
  %v849 = vmul.f32 %v467, %v784
  %v850 = vmul.f32 %v472, %v784
  %v851 = vmul.f32 %v477, %v784
  %v852 = vmul.f32 %v482, %v784
  %v853 = vmul.f32 %v487, %v784
  %v854 = vmul.f32 %v492, %v784
  %v855 = vmul.f32 %v497, %v784
  %v856 = vmul.f32 %v502, %v784
  %v857 = vmul.f32 %v507, %v784
  %v858 = vmul.f32 %v512, %v784
  %v859 = vmul.f32 %v517, %v784
  %v860 = vmul.f32 %v522, %v784
  %v861 = vmul.f32 %v527, %v784
  %v862 = vmul.f32 %v532, %v784
  %v863 = vmul.f32 %v537, %v784
  %v864 = vmul.f32 %v542, %v784
  %v865 = vmul.f32 %v547, %v784
  %v866 = vmul.f32 %v552, %v784
  %v867 = vmul.f32 %v557, %v784
  %v868 = vmul.f32 %v562, %v784
  %v869 = vmul.f32 %v567, %v784
  %v870 = vmul.f32 %v572, %v784
  %v871 = vmul.f32 %v577, %v784
  %v872 = vmul.f32 %v582, %v784
  %v873 = vmul.f32 %v587, %v784
  %v874 = vmul.f32 %v592, %v784
  %v875 = vmul.f32 %v597, %v784
  %v876 = vmul.f32 %v602, %v784
  %v877 = vmul.f32 %v607, %v784
  %v878 = vmul.f32 %v612, %v784
  %v879 = vmul.f32 %v617, %v784
  %v880 = vmul.f32 %v622, %v784
  %v881 = vmul.f32 %v627, %v784
  %v882 = vmul.f32 %v632, %v784
  %v883 = vmul.f32 %v637, %v784
  %v884 = vmul.f32 %v642, %v784
  %v885 = vmul.f32 %v647, %v784
  %v886 = vmul.f32 %v652, %v784
  %v887 = vmul.f32 %v657, %v784
  %v888 = vmul.f32 %v662, %v784
  %v889 = vmul.f32 %v667, %v784
  %v890 = vmul.f32 %v672, %v784
  %v891 = vmul.f32 %v677, %v784
  %v892 = vmul.f32 %v682, %v784
  %v893 = vmul.f32 %v687, %v784
  %v894 = vmul.f32 %v692, %v784
  %v895 = vmul.f32 %v697, %v784
  %v896 = vmul.f32 %v702, %v784
  %v897 = vmul.f32 %v707, %v784
  %v898 = vmul.f32 %v712, %v784
  %v899 = vmul.f32 %v717, %v784
  %v900 = vmul.f32 %v722, %v784
  %v901 = vmul.f32 %v727, %v784
  %v902 = vmul.f32 %v732, %v784
  %v903 = vmul.f32 %v737, %v784
  %v904 = vmul.f32 %v742, %v784
  %v905 = vmul.f32 %v747, %v784
  %v906 = vmul.f32 %v752, %v784
  %v907 = vmul.f32 %v757, %v784
  %v908 = vmul.f32 %v762, %v784
  %v909 = vmul.f32 %v767, %v784
  %v910 = vmul.f32 %v772, %v784
  %v911 = vmul.f32 %v777, %v784
  %v912 = vmul.f32 %v782, %v784
  %v914 = vperm.slane %v143, 0
  %v916 = vadd.f32 %v914, %v785
  %v917 = vadd.f32 %v914, %v786
  %v918 = vadd.f32 %v914, %v787
  %v919 = vadd.f32 %v914, %v788
  %v920 = vadd.f32 %v914, %v789
  %v921 = vadd.f32 %v914, %v790
  %v922 = vadd.f32 %v914, %v791
  %v923 = vadd.f32 %v914, %v792
  %v924 = vadd.f32 %v914, %v793
  %v925 = vadd.f32 %v914, %v794
  %v926 = vadd.f32 %v914, %v795
  %v927 = vadd.f32 %v914, %v796
  %v928 = vadd.f32 %v914, %v797
  %v929 = vadd.f32 %v914, %v798
  %v930 = vadd.f32 %v914, %v799
  %v931 = vadd.f32 %v914, %v800
  %v932 = vadd.f32 %v914, %v801
  %v933 = vadd.f32 %v914, %v802
  %v934 = vadd.f32 %v914, %v803
  %v935 = vadd.f32 %v914, %v804
  %v936 = vadd.f32 %v914, %v805
  %v937 = vadd.f32 %v914, %v806
  %v938 = vadd.f32 %v914, %v807
  %v939 = vadd.f32 %v914, %v808
  %v940 = vadd.f32 %v914, %v809
  %v941 = vadd.f32 %v914, %v810
  %v942 = vadd.f32 %v914, %v811
  %v943 = vadd.f32 %v914, %v812
  %v944 = vadd.f32 %v914, %v813
  %v945 = vadd.f32 %v914, %v814
  %v946 = vadd.f32 %v914, %v815
  %v947 = vadd.f32 %v914, %v816
  %v948 = vadd.f32 %v914, %v817
  %v949 = vadd.f32 %v914, %v818
  %v950 = vadd.f32 %v914, %v819
  %v951 = vadd.f32 %v914, %v820
  %v952 = vadd.f32 %v914, %v821
  %v953 = vadd.f32 %v914, %v822
  %v954 = vadd.f32 %v914, %v823
  %v955 = vadd.f32 %v914, %v824
  %v956 = vadd.f32 %v914, %v825
  %v957 = vadd.f32 %v914, %v826
  %v958 = vadd.f32 %v914, %v827
  %v959 = vadd.f32 %v914, %v828
  %v960 = vadd.f32 %v914, %v829
  %v961 = vadd.f32 %v914, %v830
  %v962 = vadd.f32 %v914, %v831
  %v963 = vadd.f32 %v914, %v832
  %v964 = vadd.f32 %v914, %v833
  %v965 = vadd.f32 %v914, %v834
  %v966 = vadd.f32 %v914, %v835
  %v967 = vadd.f32 %v914, %v836
  %v968 = vadd.f32 %v914, %v837
  %v969 = vadd.f32 %v914, %v838
  %v970 = vadd.f32 %v914, %v839
  %v971 = vadd.f32 %v914, %v840
  %v972 = vadd.f32 %v914, %v841
  %v973 = vadd.f32 %v914, %v842
  %v974 = vadd.f32 %v914, %v843
  %v975 = vadd.f32 %v914, %v844
  %v976 = vadd.f32 %v914, %v845
  %v977 = vadd.f32 %v914, %v846
  %v978 = vadd.f32 %v914, %v847
  %v979 = vadd.f32 %v914, %v848
  %v980 = vadd.f32 %v914, %v849
  %v981 = vadd.f32 %v914, %v850
  %v982 = vadd.f32 %v914, %v851
  %v983 = vadd.f32 %v914, %v852
  %v984 = vadd.f32 %v914, %v853
  %v985 = vadd.f32 %v914, %v854
  %v986 = vadd.f32 %v914, %v855
  %v987 = vadd.f32 %v914, %v856
  %v988 = vadd.f32 %v914, %v857
  %v989 = vadd.f32 %v914, %v858
  %v990 = vadd.f32 %v914, %v859
  %v991 = vadd.f32 %v914, %v860
  %v992 = vadd.f32 %v914, %v861
  %v993 = vadd.f32 %v914, %v862
  %v994 = vadd.f32 %v914, %v863
  %v995 = vadd.f32 %v914, %v864
  %v996 = vadd.f32 %v914, %v865
  %v997 = vadd.f32 %v914, %v866
  %v998 = vadd.f32 %v914, %v867
  %v999 = vadd.f32 %v914, %v868
  %v1000 = vadd.f32 %v914, %v869
  %v1001 = vadd.f32 %v914, %v870
  %v1002 = vadd.f32 %v914, %v871
  %v1003 = vadd.f32 %v914, %v872
  %v1004 = vadd.f32 %v914, %v873
  %v1005 = vadd.f32 %v914, %v874
  %v1006 = vadd.f32 %v914, %v875
  %v1007 = vadd.f32 %v914, %v876
  %v1008 = vadd.f32 %v914, %v877
  %v1009 = vadd.f32 %v914, %v878
  %v1010 = vadd.f32 %v914, %v879
  %v1011 = vadd.f32 %v914, %v880
  %v1012 = vadd.f32 %v914, %v881
  %v1013 = vadd.f32 %v914, %v882
  %v1014 = vadd.f32 %v914, %v883
  %v1015 = vadd.f32 %v914, %v884
  %v1016 = vadd.f32 %v914, %v885
  %v1017 = vadd.f32 %v914, %v886
  %v1018 = vadd.f32 %v914, %v887
  %v1019 = vadd.f32 %v914, %v888
  %v1020 = vadd.f32 %v914, %v889
  %v1021 = vadd.f32 %v914, %v890
  %v1022 = vadd.f32 %v914, %v891
  %v1023 = vadd.f32 %v914, %v892
  %v1024 = vadd.f32 %v914, %v893
  %v1025 = vadd.f32 %v914, %v894
  %v1026 = vadd.f32 %v914, %v895
  %v1027 = vadd.f32 %v914, %v896
  %v1028 = vadd.f32 %v914, %v897
  %v1029 = vadd.f32 %v914, %v898
  %v1030 = vadd.f32 %v914, %v899
  %v1031 = vadd.f32 %v914, %v900
  %v1032 = vadd.f32 %v914, %v901
  %v1033 = vadd.f32 %v914, %v902
  %v1034 = vadd.f32 %v914, %v903
  %v1035 = vadd.f32 %v914, %v904
  %v1036 = vadd.f32 %v914, %v905
  %v1037 = vadd.f32 %v914, %v906
  %v1038 = vadd.f32 %v914, %v907
  %v1039 = vadd.f32 %v914, %v908
  %v1040 = vadd.f32 %v914, %v909
  %v1041 = vadd.f32 %v914, %v910
  %v1042 = vadd.f32 %v914, %v911
  %v1043 = vadd.f32 %v914, %v912
  %1044 = vset.pattern.permute.xlu0 1
  %1045 = vperm.xlu0 %1044, %v14
  %v1046 = vpop.permute.xlu0 %1045
  %1048 = vset.pattern.permute.xlu0 1
  %1049 = vperm.xlu0 %1048, %v15
  %v1050 = vpop.permute.xlu0 %1049
  %1052 = vset.pattern.permute.xlu0 1
  %1053 = vperm.xlu0 %1052, %v16
  %v1054 = vpop.permute.xlu0 %1053
  %1056 = vset.pattern.permute.xlu0 1
  %1057 = vperm.xlu0 %1056, %v17
  %v1058 = vpop.permute.xlu0 %1057
  %1060 = vset.pattern.permute.xlu0 1
  %1061 = vperm.xlu0 %1060, %v18
  %v1062 = vpop.permute.xlu0 %1061
  %1064 = vset.pattern.permute.xlu0 1
  %1065 = vperm.xlu0 %1064, %v19
  %v1066 = vpop.permute.xlu0 %1065
  %1068 = vset.pattern.permute.xlu0 1
  %1069 = vperm.xlu0 %1068, %v20
  %v1070 = vpop.permute.xlu0 %1069
  %1072 = vset.pattern.permute.xlu0 1
  %1073 = vperm.xlu0 %1072, %v21
  %v1074 = vpop.permute.xlu0 %1073
  %1076 = vset.pattern.permute.xlu0 1
  %1077 = vperm.xlu0 %1076, %v22
  %v1078 = vpop.permute.xlu0 %1077
  %1080 = vset.pattern.permute.xlu0 1
  %1081 = vperm.xlu0 %1080, %v23
  %v1082 = vpop.permute.xlu0 %1081
  %1084 = vset.pattern.permute.xlu0 1
  %1085 = vperm.xlu0 %1084, %v24
  %v1086 = vpop.permute.xlu0 %1085
  %1088 = vset.pattern.permute.xlu0 1
  %1089 = vperm.xlu0 %1088, %v25
  %v1090 = vpop.permute.xlu0 %1089
  %1092 = vset.pattern.permute.xlu0 1
  %1093 = vperm.xlu0 %1092, %v26
  %v1094 = vpop.permute.xlu0 %1093
  %1096 = vset.pattern.permute.xlu0 1
  %1097 = vperm.xlu0 %1096, %v27
  %v1098 = vpop.permute.xlu0 %1097
  %1100 = vset.pattern.permute.xlu0 1
  %1101 = vperm.xlu0 %1100, %v28
  %v1102 = vpop.permute.xlu0 %1101
  %1104 = vset.pattern.permute.xlu0 1
  %1105 = vperm.xlu0 %1104, %v29
  %v1106 = vpop.permute.xlu0 %1105
  %1108 = vset.pattern.permute.xlu0 1
  %1109 = vperm.xlu0 %1108, %v30
  %v1110 = vpop.permute.xlu0 %1109
  %1112 = vset.pattern.permute.xlu0 1
  %1113 = vperm.xlu0 %1112, %v31
  %v1114 = vpop.permute.xlu0 %1113
  %1116 = vset.pattern.permute.xlu0 1
  %1117 = vperm.xlu0 %1116, %v32
  %v1118 = vpop.permute.xlu0 %1117
  %1120 = vset.pattern.permute.xlu0 1
  %1121 = vperm.xlu0 %1120, %v33
  %v1122 = vpop.permute.xlu0 %1121
  %1124 = vset.pattern.permute.xlu0 1
  %1125 = vperm.xlu0 %1124, %v34
  %v1126 = vpop.permute.xlu0 %1125
  %1128 = vset.pattern.permute.xlu0 1
  %1129 = vperm.xlu0 %1128, %v35
  %v1130 = vpop.permute.xlu0 %1129
  %1132 = vset.pattern.permute.xlu0 1
  %1133 = vperm.xlu0 %1132, %v36
  %v1134 = vpop.permute.xlu0 %1133
  %1136 = vset.pattern.permute.xlu0 1
  %1137 = vperm.xlu0 %1136, %v37
  %v1138 = vpop.permute.xlu0 %1137
  %1140 = vset.pattern.permute.xlu0 1
  %1141 = vperm.xlu0 %1140, %v38
  %v1142 = vpop.permute.xlu0 %1141
  %1144 = vset.pattern.permute.xlu0 1
  %1145 = vperm.xlu0 %1144, %v39
  %v1146 = vpop.permute.xlu0 %1145
  %1148 = vset.pattern.permute.xlu0 1
  %1149 = vperm.xlu0 %1148, %v40
  %v1150 = vpop.permute.xlu0 %1149
  %1152 = vset.pattern.permute.xlu0 1
  %1153 = vperm.xlu0 %1152, %v41
  %v1154 = vpop.permute.xlu0 %1153
  %1156 = vset.pattern.permute.xlu0 1
  %1157 = vperm.xlu0 %1156, %v42
  %v1158 = vpop.permute.xlu0 %1157
  %1160 = vset.pattern.permute.xlu0 1
  %1161 = vperm.xlu0 %1160, %v43
  %v1162 = vpop.permute.xlu0 %1161
  %1164 = vset.pattern.permute.xlu0 1
  %1165 = vperm.xlu0 %1164, %v44
  %v1166 = vpop.permute.xlu0 %1165
  %1168 = vset.pattern.permute.xlu0 1
  %1169 = vperm.xlu0 %1168, %v45
  %v1170 = vpop.permute.xlu0 %1169
  %1172 = vset.pattern.permute.xlu0 1
  %1173 = vperm.xlu0 %1172, %v46
  %v1174 = vpop.permute.xlu0 %1173
  %1176 = vset.pattern.permute.xlu0 1
  %1177 = vperm.xlu0 %1176, %v47
  %v1178 = vpop.permute.xlu0 %1177
  %1180 = vset.pattern.permute.xlu0 1
  %1181 = vperm.xlu0 %1180, %v48
  %v1182 = vpop.permute.xlu0 %1181
  %1184 = vset.pattern.permute.xlu0 1
  %1185 = vperm.xlu0 %1184, %v49
  %v1186 = vpop.permute.xlu0 %1185
  %1188 = vset.pattern.permute.xlu0 1
  %1189 = vperm.xlu0 %1188, %v50
  %v1190 = vpop.permute.xlu0 %1189
  %1192 = vset.pattern.permute.xlu0 1
  %1193 = vperm.xlu0 %1192, %v51
  %v1194 = vpop.permute.xlu0 %1193
  %1196 = vset.pattern.permute.xlu0 1
  %1197 = vperm.xlu0 %1196, %v52
  %v1198 = vpop.permute.xlu0 %1197
  %1200 = vset.pattern.permute.xlu0 1
  %1201 = vperm.xlu0 %1200, %v53
  %v1202 = vpop.permute.xlu0 %1201
  %1204 = vset.pattern.permute.xlu0 1
  %1205 = vperm.xlu0 %1204, %v54
  %v1206 = vpop.permute.xlu0 %1205
  %1208 = vset.pattern.permute.xlu0 1
  %1209 = vperm.xlu0 %1208, %v55
  %v1210 = vpop.permute.xlu0 %1209
  %1212 = vset.pattern.permute.xlu0 1
  %1213 = vperm.xlu0 %1212, %v56
  %v1214 = vpop.permute.xlu0 %1213
  %1216 = vset.pattern.permute.xlu0 1
  %1217 = vperm.xlu0 %1216, %v57
  %v1218 = vpop.permute.xlu0 %1217
  %1220 = vset.pattern.permute.xlu0 1
  %1221 = vperm.xlu0 %1220, %v58
  %v1222 = vpop.permute.xlu0 %1221
  %1224 = vset.pattern.permute.xlu0 1
  %1225 = vperm.xlu0 %1224, %v59
  %v1226 = vpop.permute.xlu0 %1225
  %1228 = vset.pattern.permute.xlu0 1
  %1229 = vperm.xlu0 %1228, %v60
  %v1230 = vpop.permute.xlu0 %1229
  %1232 = vset.pattern.permute.xlu0 1
  %1233 = vperm.xlu0 %1232, %v61
  %v1234 = vpop.permute.xlu0 %1233
  %1236 = vset.pattern.permute.xlu0 1
  %1237 = vperm.xlu0 %1236, %v62
  %v1238 = vpop.permute.xlu0 %1237
  %1240 = vset.pattern.permute.xlu0 1
  %1241 = vperm.xlu0 %1240, %v63
  %v1242 = vpop.permute.xlu0 %1241
  %1244 = vset.pattern.permute.xlu0 1
  %1245 = vperm.xlu0 %1244, %v64
  %v1246 = vpop.permute.xlu0 %1245
  %1248 = vset.pattern.permute.xlu0 1
  %1249 = vperm.xlu0 %1248, %v65
  %v1250 = vpop.permute.xlu0 %1249
  %1252 = vset.pattern.permute.xlu0 1
  %1253 = vperm.xlu0 %1252, %v66
  %v1254 = vpop.permute.xlu0 %1253
  %1256 = vset.pattern.permute.xlu0 1
  %1257 = vperm.xlu0 %1256, %v67
  %v1258 = vpop.permute.xlu0 %1257
  %1260 = vset.pattern.permute.xlu0 1
  %1261 = vperm.xlu0 %1260, %v68
  %v1262 = vpop.permute.xlu0 %1261
  %1264 = vset.pattern.permute.xlu0 1
  %1265 = vperm.xlu0 %1264, %v69
  %v1266 = vpop.permute.xlu0 %1265
  %1268 = vset.pattern.permute.xlu0 1
  %1269 = vperm.xlu0 %1268, %v70
  %v1270 = vpop.permute.xlu0 %1269
  %1272 = vset.pattern.permute.xlu0 1
  %1273 = vperm.xlu0 %1272, %v71
  %v1274 = vpop.permute.xlu0 %1273
  %1276 = vset.pattern.permute.xlu0 1
  %1277 = vperm.xlu0 %1276, %v72
  %v1278 = vpop.permute.xlu0 %1277
  %1280 = vset.pattern.permute.xlu0 1
  %1281 = vperm.xlu0 %1280, %v73
  %v1282 = vpop.permute.xlu0 %1281
  %1284 = vset.pattern.permute.xlu0 1
  %1285 = vperm.xlu0 %1284, %v74
  %v1286 = vpop.permute.xlu0 %1285
  %1288 = vset.pattern.permute.xlu0 1
  %1289 = vperm.xlu0 %1288, %v75
  %v1290 = vpop.permute.xlu0 %1289
  %1292 = vset.pattern.permute.xlu0 1
  %1293 = vperm.xlu0 %1292, %v76
  %v1294 = vpop.permute.xlu0 %1293
  %1296 = vset.pattern.permute.xlu0 1
  %1297 = vperm.xlu0 %1296, %v77
  %v1298 = vpop.permute.xlu0 %1297
  %1300 = vset.pattern.permute.xlu0 1
  %1301 = vperm.xlu0 %1300, %v78
  %v1302 = vpop.permute.xlu0 %1301
  %1304 = vset.pattern.permute.xlu0 1
  %1305 = vperm.xlu0 %1304, %v79
  %v1306 = vpop.permute.xlu0 %1305
  %1308 = vset.pattern.permute.xlu0 1
  %1309 = vperm.xlu0 %1308, %v80
  %v1310 = vpop.permute.xlu0 %1309
  %1312 = vset.pattern.permute.xlu0 1
  %1313 = vperm.xlu0 %1312, %v81
  %v1314 = vpop.permute.xlu0 %1313
  %1316 = vset.pattern.permute.xlu0 1
  %1317 = vperm.xlu0 %1316, %v82
  %v1318 = vpop.permute.xlu0 %1317
  %1320 = vset.pattern.permute.xlu0 1
  %1321 = vperm.xlu0 %1320, %v83
  %v1322 = vpop.permute.xlu0 %1321
  %1324 = vset.pattern.permute.xlu0 1
  %1325 = vperm.xlu0 %1324, %v84
  %v1326 = vpop.permute.xlu0 %1325
  %1328 = vset.pattern.permute.xlu0 1
  %1329 = vperm.xlu0 %1328, %v85
  %v1330 = vpop.permute.xlu0 %1329
  %1332 = vset.pattern.permute.xlu0 1
  %1333 = vperm.xlu0 %1332, %v86
  %v1334 = vpop.permute.xlu0 %1333
  %1336 = vset.pattern.permute.xlu0 1
  %1337 = vperm.xlu0 %1336, %v87
  %v1338 = vpop.permute.xlu0 %1337
  %1340 = vset.pattern.permute.xlu0 1
  %1341 = vperm.xlu0 %1340, %v88
  %v1342 = vpop.permute.xlu0 %1341
  %1344 = vset.pattern.permute.xlu0 1
  %1345 = vperm.xlu0 %1344, %v89
  %v1346 = vpop.permute.xlu0 %1345
  %1348 = vset.pattern.permute.xlu0 1
  %1349 = vperm.xlu0 %1348, %v90
  %v1350 = vpop.permute.xlu0 %1349
  %1352 = vset.pattern.permute.xlu0 1
  %1353 = vperm.xlu0 %1352, %v91
  %v1354 = vpop.permute.xlu0 %1353
  %1356 = vset.pattern.permute.xlu0 1
  %1357 = vperm.xlu0 %1356, %v92
  %v1358 = vpop.permute.xlu0 %1357
  %1360 = vset.pattern.permute.xlu0 1
  %1361 = vperm.xlu0 %1360, %v93
  %v1362 = vpop.permute.xlu0 %1361
  %1364 = vset.pattern.permute.xlu0 1
  %1365 = vperm.xlu0 %1364, %v94
  %v1366 = vpop.permute.xlu0 %1365
  %1368 = vset.pattern.permute.xlu0 1
  %1369 = vperm.xlu0 %1368, %v95
  %v1370 = vpop.permute.xlu0 %1369
  %1372 = vset.pattern.permute.xlu0 1
  %1373 = vperm.xlu0 %1372, %v96
  %v1374 = vpop.permute.xlu0 %1373
  %1376 = vset.pattern.permute.xlu0 1
  %1377 = vperm.xlu0 %1376, %v97
  %v1378 = vpop.permute.xlu0 %1377
  %1380 = vset.pattern.permute.xlu0 1
  %1381 = vperm.xlu0 %1380, %v98
  %v1382 = vpop.permute.xlu0 %1381
  %1384 = vset.pattern.permute.xlu0 1
  %1385 = vperm.xlu0 %1384, %v99
  %v1386 = vpop.permute.xlu0 %1385
  %1388 = vset.pattern.permute.xlu0 1
  %1389 = vperm.xlu0 %1388, %v100
  %v1390 = vpop.permute.xlu0 %1389
  %1392 = vset.pattern.permute.xlu0 1
  %1393 = vperm.xlu0 %1392, %v101
  %v1394 = vpop.permute.xlu0 %1393
  %1396 = vset.pattern.permute.xlu0 1
  %1397 = vperm.xlu0 %1396, %v102
  %v1398 = vpop.permute.xlu0 %1397
  %1400 = vset.pattern.permute.xlu0 1
  %1401 = vperm.xlu0 %1400, %v103
  %v1402 = vpop.permute.xlu0 %1401
  %1404 = vset.pattern.permute.xlu0 1
  %1405 = vperm.xlu0 %1404, %v104
  %v1406 = vpop.permute.xlu0 %1405
  %1408 = vset.pattern.permute.xlu0 1
  %1409 = vperm.xlu0 %1408, %v105
  %v1410 = vpop.permute.xlu0 %1409
  %1412 = vset.pattern.permute.xlu0 1
  %1413 = vperm.xlu0 %1412, %v106
  %v1414 = vpop.permute.xlu0 %1413
  %1416 = vset.pattern.permute.xlu0 1
  %1417 = vperm.xlu0 %1416, %v107
  %v1418 = vpop.permute.xlu0 %1417
  %1420 = vset.pattern.permute.xlu0 1
  %1421 = vperm.xlu0 %1420, %v108
  %v1422 = vpop.permute.xlu0 %1421
  %1424 = vset.pattern.permute.xlu0 1
  %1425 = vperm.xlu0 %1424, %v109
  %v1426 = vpop.permute.xlu0 %1425
  %1428 = vset.pattern.permute.xlu0 1
  %1429 = vperm.xlu0 %1428, %v110
  %v1430 = vpop.permute.xlu0 %1429
  %1432 = vset.pattern.permute.xlu0 1
  %1433 = vperm.xlu0 %1432, %v111
  %v1434 = vpop.permute.xlu0 %1433
  %1436 = vset.pattern.permute.xlu0 1
  %1437 = vperm.xlu0 %1436, %v112
  %v1438 = vpop.permute.xlu0 %1437
  %1440 = vset.pattern.permute.xlu0 1
  %1441 = vperm.xlu0 %1440, %v113
  %v1442 = vpop.permute.xlu0 %1441
  %1444 = vset.pattern.permute.xlu0 1
  %1445 = vperm.xlu0 %1444, %v114
  %v1446 = vpop.permute.xlu0 %1445
  %1448 = vset.pattern.permute.xlu0 1
  %1449 = vperm.xlu0 %1448, %v115
  %v1450 = vpop.permute.xlu0 %1449
  %1452 = vset.pattern.permute.xlu0 1
  %1453 = vperm.xlu0 %1452, %v116
  %v1454 = vpop.permute.xlu0 %1453
  %1456 = vset.pattern.permute.xlu0 1
  %1457 = vperm.xlu0 %1456, %v117
  %v1458 = vpop.permute.xlu0 %1457
  %1460 = vset.pattern.permute.xlu0 1
  %1461 = vperm.xlu0 %1460, %v118
  %v1462 = vpop.permute.xlu0 %1461
  %1464 = vset.pattern.permute.xlu0 1
  %1465 = vperm.xlu0 %1464, %v119
  %v1466 = vpop.permute.xlu0 %1465
  %1468 = vset.pattern.permute.xlu0 1
  %1469 = vperm.xlu0 %1468, %v120
  %v1470 = vpop.permute.xlu0 %1469
  %1472 = vset.pattern.permute.xlu0 1
  %1473 = vperm.xlu0 %1472, %v121
  %v1474 = vpop.permute.xlu0 %1473
  %1476 = vset.pattern.permute.xlu0 1
  %1477 = vperm.xlu0 %1476, %v122
  %v1478 = vpop.permute.xlu0 %1477
  %1480 = vset.pattern.permute.xlu0 1
  %1481 = vperm.xlu0 %1480, %v123
  %v1482 = vpop.permute.xlu0 %1481
  %1484 = vset.pattern.permute.xlu0 1
  %1485 = vperm.xlu0 %1484, %v124
  %v1486 = vpop.permute.xlu0 %1485
  %1488 = vset.pattern.permute.xlu0 1
  %1489 = vperm.xlu0 %1488, %v125
  %v1490 = vpop.permute.xlu0 %1489
  %1492 = vset.pattern.permute.xlu0 1
  %1493 = vperm.xlu0 %1492, %v126
  %v1494 = vpop.permute.xlu0 %1493
  %1496 = vset.pattern.permute.xlu0 1
  %1497 = vperm.xlu0 %1496, %v127
  %v1498 = vpop.permute.xlu0 %1497
  %1500 = vset.pattern.permute.xlu0 1
  %1501 = vperm.xlu0 %1500, %v128
  %v1502 = vpop.permute.xlu0 %1501
  %1504 = vset.pattern.permute.xlu0 1
  %1505 = vperm.xlu0 %1504, %v129
  %v1506 = vpop.permute.xlu0 %1505
  %1508 = vset.pattern.permute.xlu0 1
  %1509 = vperm.xlu0 %1508, %v130
  %v1510 = vpop.permute.xlu0 %1509
  %1512 = vset.pattern.permute.xlu0 1
  %1513 = vperm.xlu0 %1512, %v131
  %v1514 = vpop.permute.xlu0 %1513
  %1516 = vset.pattern.permute.xlu0 1
  %1517 = vperm.xlu0 %1516, %v132
  %v1518 = vpop.permute.xlu0 %1517
  %1520 = vset.pattern.permute.xlu0 1
  %1521 = vperm.xlu0 %1520, %v133
  %v1522 = vpop.permute.xlu0 %1521
  %1524 = vset.pattern.permute.xlu0 1
  %1525 = vperm.xlu0 %1524, %v134
  %v1526 = vpop.permute.xlu0 %1525
  %1528 = vset.pattern.permute.xlu0 1
  %1529 = vperm.xlu0 %1528, %v135
  %v1530 = vpop.permute.xlu0 %1529
  %1532 = vset.pattern.permute.xlu0 1
  %1533 = vperm.xlu0 %1532, %v136
  %v1534 = vpop.permute.xlu0 %1533
  %1536 = vset.pattern.permute.xlu0 1
  %1537 = vperm.xlu0 %1536, %v137
  %v1538 = vpop.permute.xlu0 %1537
  %1540 = vset.pattern.permute.xlu0 1
  %1541 = vperm.xlu0 %1540, %v138
  %v1542 = vpop.permute.xlu0 %1541
  %1544 = vset.pattern.permute.xlu0 1
  %1545 = vperm.xlu0 %1544, %v139
  %v1546 = vpop.permute.xlu0 %1545
  %1548 = vset.pattern.permute.xlu0 1
  %1549 = vperm.xlu0 %1548, %v140
  %v1550 = vpop.permute.xlu0 %1549
  %1552 = vset.pattern.permute.xlu0 1
  %1553 = vperm.xlu0 %1552, %v141
  %v1554 = vpop.permute.xlu0 %1553
  %v1556 = vperm.slane %v142, 1
  %v1557 = vmul.f32 %v1046, %v1556
  %v1558 = vmul.f32 %v1050, %v1556
  %v1559 = vmul.f32 %v1054, %v1556
  %v1560 = vmul.f32 %v1058, %v1556
  %v1561 = vmul.f32 %v1062, %v1556
  %v1562 = vmul.f32 %v1066, %v1556
  %v1563 = vmul.f32 %v1070, %v1556
  %v1564 = vmul.f32 %v1074, %v1556
  %v1565 = vmul.f32 %v1078, %v1556
  %v1566 = vmul.f32 %v1082, %v1556
  %v1567 = vmul.f32 %v1086, %v1556
  %v1568 = vmul.f32 %v1090, %v1556
  %v1569 = vmul.f32 %v1094, %v1556
  %v1570 = vmul.f32 %v1098, %v1556
  %v1571 = vmul.f32 %v1102, %v1556
  %v1572 = vmul.f32 %v1106, %v1556
  %v1573 = vmul.f32 %v1110, %v1556
  %v1574 = vmul.f32 %v1114, %v1556
  %v1575 = vmul.f32 %v1118, %v1556
  %v1576 = vmul.f32 %v1122, %v1556
  %v1577 = vmul.f32 %v1126, %v1556
  %v1578 = vmul.f32 %v1130, %v1556
  %v1579 = vmul.f32 %v1134, %v1556
  %v1580 = vmul.f32 %v1138, %v1556
  %v1581 = vmul.f32 %v1142, %v1556
  %v1582 = vmul.f32 %v1146, %v1556
  %v1583 = vmul.f32 %v1150, %v1556
  %v1584 = vmul.f32 %v1154, %v1556
  %v1585 = vmul.f32 %v1158, %v1556
  %v1586 = vmul.f32 %v1162, %v1556
  %v1587 = vmul.f32 %v1166, %v1556
  %v1588 = vmul.f32 %v1170, %v1556
  %v1589 = vmul.f32 %v1174, %v1556
  %v1590 = vmul.f32 %v1178, %v1556
  %v1591 = vmul.f32 %v1182, %v1556
  %v1592 = vmul.f32 %v1186, %v1556
  %v1593 = vmul.f32 %v1190, %v1556
  %v1594 = vmul.f32 %v1194, %v1556
  %v1595 = vmul.f32 %v1198, %v1556
  %v1596 = vmul.f32 %v1202, %v1556
  %v1597 = vmul.f32 %v1206, %v1556
  %v1598 = vmul.f32 %v1210, %v1556
  %v1599 = vmul.f32 %v1214, %v1556
  %v1600 = vmul.f32 %v1218, %v1556
  %v1601 = vmul.f32 %v1222, %v1556
  %v1602 = vmul.f32 %v1226, %v1556
  %v1603 = vmul.f32 %v1230, %v1556
  %v1604 = vmul.f32 %v1234, %v1556
  %v1605 = vmul.f32 %v1238, %v1556
  %v1606 = vmul.f32 %v1242, %v1556
  %v1607 = vmul.f32 %v1246, %v1556
  %v1608 = vmul.f32 %v1250, %v1556
  %v1609 = vmul.f32 %v1254, %v1556
  %v1610 = vmul.f32 %v1258, %v1556
  %v1611 = vmul.f32 %v1262, %v1556
  %v1612 = vmul.f32 %v1266, %v1556
  %v1613 = vmul.f32 %v1270, %v1556
  %v1614 = vmul.f32 %v1274, %v1556
  %v1615 = vmul.f32 %v1278, %v1556
  %v1616 = vmul.f32 %v1282, %v1556
  %v1617 = vmul.f32 %v1286, %v1556
  %v1618 = vmul.f32 %v1290, %v1556
  %v1619 = vmul.f32 %v1294, %v1556
  %v1620 = vmul.f32 %v1298, %v1556
  %v1621 = vmul.f32 %v1302, %v1556
  %v1622 = vmul.f32 %v1306, %v1556
  %v1623 = vmul.f32 %v1310, %v1556
  %v1624 = vmul.f32 %v1314, %v1556
  %v1625 = vmul.f32 %v1318, %v1556
  %v1626 = vmul.f32 %v1322, %v1556
  %v1627 = vmul.f32 %v1326, %v1556
  %v1628 = vmul.f32 %v1330, %v1556
  %v1629 = vmul.f32 %v1334, %v1556
  %v1630 = vmul.f32 %v1338, %v1556
  %v1631 = vmul.f32 %v1342, %v1556
  %v1632 = vmul.f32 %v1346, %v1556
  %v1633 = vmul.f32 %v1350, %v1556
  %v1634 = vmul.f32 %v1354, %v1556
  %v1635 = vmul.f32 %v1358, %v1556
  %v1636 = vmul.f32 %v1362, %v1556
  %v1637 = vmul.f32 %v1366, %v1556
  %v1638 = vmul.f32 %v1370, %v1556
  %v1639 = vmul.f32 %v1374, %v1556
  %v1640 = vmul.f32 %v1378, %v1556
  %v1641 = vmul.f32 %v1382, %v1556
  %v1642 = vmul.f32 %v1386, %v1556
  %v1643 = vmul.f32 %v1390, %v1556
  %v1644 = vmul.f32 %v1394, %v1556
  %v1645 = vmul.f32 %v1398, %v1556
  %v1646 = vmul.f32 %v1402, %v1556
  %v1647 = vmul.f32 %v1406, %v1556
  %v1648 = vmul.f32 %v1410, %v1556
  %v1649 = vmul.f32 %v1414, %v1556
  %v1650 = vmul.f32 %v1418, %v1556
  %v1651 = vmul.f32 %v1422, %v1556
  %v1652 = vmul.f32 %v1426, %v1556
  %v1653 = vmul.f32 %v1430, %v1556
  %v1654 = vmul.f32 %v1434, %v1556
  %v1655 = vmul.f32 %v1438, %v1556
  %v1656 = vmul.f32 %v1442, %v1556
  %v1657 = vmul.f32 %v1446, %v1556
  %v1658 = vmul.f32 %v1450, %v1556
  %v1659 = vmul.f32 %v1454, %v1556
  %v1660 = vmul.f32 %v1458, %v1556
  %v1661 = vmul.f32 %v1462, %v1556
  %v1662 = vmul.f32 %v1466, %v1556
  %v1663 = vmul.f32 %v1470, %v1556
  %v1664 = vmul.f32 %v1474, %v1556
  %v1665 = vmul.f32 %v1478, %v1556
  %v1666 = vmul.f32 %v1482, %v1556
  %v1667 = vmul.f32 %v1486, %v1556
  %v1668 = vmul.f32 %v1490, %v1556
  %v1669 = vmul.f32 %v1494, %v1556
  %v1670 = vmul.f32 %v1498, %v1556
  %v1671 = vmul.f32 %v1502, %v1556
  %v1672 = vmul.f32 %v1506, %v1556
  %v1673 = vmul.f32 %v1510, %v1556
  %v1674 = vmul.f32 %v1514, %v1556
  %v1675 = vmul.f32 %v1518, %v1556
  %v1676 = vmul.f32 %v1522, %v1556
  %v1677 = vmul.f32 %v1526, %v1556
  %v1678 = vmul.f32 %v1530, %v1556
  %v1679 = vmul.f32 %v1534, %v1556
  %v1680 = vmul.f32 %v1538, %v1556
  %v1681 = vmul.f32 %v1542, %v1556
  %v1682 = vmul.f32 %v1546, %v1556
  %v1683 = vmul.f32 %v1550, %v1556
  %v1684 = vmul.f32 %v1554, %v1556
  %v1685 = vadd.f32 %v916, %v1557
  %v1686 = vadd.f32 %v917, %v1558
  %v1687 = vadd.f32 %v918, %v1559
  %v1688 = vadd.f32 %v919, %v1560
  %v1689 = vadd.f32 %v920, %v1561
  %v1690 = vadd.f32 %v921, %v1562
  %v1691 = vadd.f32 %v922, %v1563
  %v1692 = vadd.f32 %v923, %v1564
  %v1693 = vadd.f32 %v924, %v1565
  %v1694 = vadd.f32 %v925, %v1566
  %v1695 = vadd.f32 %v926, %v1567
  %v1696 = vadd.f32 %v927, %v1568
  %v1697 = vadd.f32 %v928, %v1569
  %v1698 = vadd.f32 %v929, %v1570
  %v1699 = vadd.f32 %v930, %v1571
  %v1700 = vadd.f32 %v931, %v1572
  %v1701 = vadd.f32 %v932, %v1573
  %v1702 = vadd.f32 %v933, %v1574
  %v1703 = vadd.f32 %v934, %v1575
  %v1704 = vadd.f32 %v935, %v1576
  %v1705 = vadd.f32 %v936, %v1577
  %v1706 = vadd.f32 %v937, %v1578
  %v1707 = vadd.f32 %v938, %v1579
  %v1708 = vadd.f32 %v939, %v1580
  %v1709 = vadd.f32 %v940, %v1581
  %v1710 = vadd.f32 %v941, %v1582
  %v1711 = vadd.f32 %v942, %v1583
  %v1712 = vadd.f32 %v943, %v1584
  %v1713 = vadd.f32 %v944, %v1585
  %v1714 = vadd.f32 %v945, %v1586
  %v1715 = vadd.f32 %v946, %v1587
  %v1716 = vadd.f32 %v947, %v1588
  %v1717 = vadd.f32 %v948, %v1589
  %v1718 = vadd.f32 %v949, %v1590
  %v1719 = vadd.f32 %v950, %v1591
  %v1720 = vadd.f32 %v951, %v1592
  %v1721 = vadd.f32 %v952, %v1593
  %v1722 = vadd.f32 %v953, %v1594
  %v1723 = vadd.f32 %v954, %v1595
  %v1724 = vadd.f32 %v955, %v1596
  %v1725 = vadd.f32 %v956, %v1597
  %v1726 = vadd.f32 %v957, %v1598
  %v1727 = vadd.f32 %v958, %v1599
  %v1728 = vadd.f32 %v959, %v1600
  %v1729 = vadd.f32 %v960, %v1601
  %v1730 = vadd.f32 %v961, %v1602
  %v1731 = vadd.f32 %v962, %v1603
  %v1732 = vadd.f32 %v963, %v1604
  %v1733 = vadd.f32 %v964, %v1605
  %v1734 = vadd.f32 %v965, %v1606
  %v1735 = vadd.f32 %v966, %v1607
  %v1736 = vadd.f32 %v967, %v1608
  %v1737 = vadd.f32 %v968, %v1609
  %v1738 = vadd.f32 %v969, %v1610
  %v1739 = vadd.f32 %v970, %v1611
  %v1740 = vadd.f32 %v971, %v1612
  %v1741 = vadd.f32 %v972, %v1613
  %v1742 = vadd.f32 %v973, %v1614
  %v1743 = vadd.f32 %v974, %v1615
  %v1744 = vadd.f32 %v975, %v1616
  %v1745 = vadd.f32 %v976, %v1617
  %v1746 = vadd.f32 %v977, %v1618
  %v1747 = vadd.f32 %v978, %v1619
  %v1748 = vadd.f32 %v979, %v1620
  %v1749 = vadd.f32 %v980, %v1621
  %v1750 = vadd.f32 %v981, %v1622
  %v1751 = vadd.f32 %v982, %v1623
  %v1752 = vadd.f32 %v983, %v1624
  %v1753 = vadd.f32 %v984, %v1625
  %v1754 = vadd.f32 %v985, %v1626
  %v1755 = vadd.f32 %v986, %v1627
  %v1756 = vadd.f32 %v987, %v1628
  %v1757 = vadd.f32 %v988, %v1629
  %v1758 = vadd.f32 %v989, %v1630
  %v1759 = vadd.f32 %v990, %v1631
  %v1760 = vadd.f32 %v991, %v1632
  %v1761 = vadd.f32 %v992, %v1633
  %v1762 = vadd.f32 %v993, %v1634
  %v1763 = vadd.f32 %v994, %v1635
  %v1764 = vadd.f32 %v995, %v1636
  %v1765 = vadd.f32 %v996, %v1637
  %v1766 = vadd.f32 %v997, %v1638
  %v1767 = vadd.f32 %v998, %v1639
  %v1768 = vadd.f32 %v999, %v1640
  %v1769 = vadd.f32 %v1000, %v1641
  %v1770 = vadd.f32 %v1001, %v1642
  %v1771 = vadd.f32 %v1002, %v1643
  %v1772 = vadd.f32 %v1003, %v1644
  %v1773 = vadd.f32 %v1004, %v1645
  %v1774 = vadd.f32 %v1005, %v1646
  %v1775 = vadd.f32 %v1006, %v1647
  %v1776 = vadd.f32 %v1007, %v1648
  %v1777 = vadd.f32 %v1008, %v1649
  %v1778 = vadd.f32 %v1009, %v1650
  %v1779 = vadd.f32 %v1010, %v1651
  %v1780 = vadd.f32 %v1011, %v1652
  %v1781 = vadd.f32 %v1012, %v1653
  %v1782 = vadd.f32 %v1013, %v1654
  %v1783 = vadd.f32 %v1014, %v1655
  %v1784 = vadd.f32 %v1015, %v1656
  %v1785 = vadd.f32 %v1016, %v1657
  %v1786 = vadd.f32 %v1017, %v1658
  %v1787 = vadd.f32 %v1018, %v1659
  %v1788 = vadd.f32 %v1019, %v1660
  %v1789 = vadd.f32 %v1020, %v1661
  %v1790 = vadd.f32 %v1021, %v1662
  %v1791 = vadd.f32 %v1022, %v1663
  %v1792 = vadd.f32 %v1023, %v1664
  %v1793 = vadd.f32 %v1024, %v1665
  %v1794 = vadd.f32 %v1025, %v1666
  %v1795 = vadd.f32 %v1026, %v1667
  %v1796 = vadd.f32 %v1027, %v1668
  %v1797 = vadd.f32 %v1028, %v1669
  %v1798 = vadd.f32 %v1029, %v1670
  %v1799 = vadd.f32 %v1030, %v1671
  %v1800 = vadd.f32 %v1031, %v1672
  %v1801 = vadd.f32 %v1032, %v1673
  %v1802 = vadd.f32 %v1033, %v1674
  %v1803 = vadd.f32 %v1034, %v1675
  %v1804 = vadd.f32 %v1035, %v1676
  %v1805 = vadd.f32 %v1036, %v1677
  %v1806 = vadd.f32 %v1037, %v1678
  %v1807 = vadd.f32 %v1038, %v1679
  %v1808 = vadd.f32 %v1039, %v1680
  %v1809 = vadd.f32 %v1040, %v1681
  %v1810 = vadd.f32 %v1041, %v1682
  %v1811 = vadd.f32 %v1042, %v1683
  %v1812 = vadd.f32 %v1043, %v1684
  %1813 = vset.pattern.permute.xlu0 2
  %1814 = vperm.xlu0 %1813, %v14
  %v1815 = vpop.permute.xlu0 %1814
  %1817 = vset.pattern.permute.xlu0 2
  %1818 = vperm.xlu0 %1817, %v15
  %v1819 = vpop.permute.xlu0 %1818
  %1821 = vset.pattern.permute.xlu0 2
  %1822 = vperm.xlu0 %1821, %v16
  %v1823 = vpop.permute.xlu0 %1822
  %1825 = vset.pattern.permute.xlu0 2
  %1826 = vperm.xlu0 %1825, %v17
  %v1827 = vpop.permute.xlu0 %1826
  %1829 = vset.pattern.permute.xlu0 2
  %1830 = vperm.xlu0 %1829, %v18
  %v1831 = vpop.permute.xlu0 %1830
  %1833 = vset.pattern.permute.xlu0 2
  %1834 = vperm.xlu0 %1833, %v19
  %v1835 = vpop.permute.xlu0 %1834
  %1837 = vset.pattern.permute.xlu0 2
  %1838 = vperm.xlu0 %1837, %v20
  %v1839 = vpop.permute.xlu0 %1838
  %1841 = vset.pattern.permute.xlu0 2
  %1842 = vperm.xlu0 %1841, %v21
  %v1843 = vpop.permute.xlu0 %1842
  %1845 = vset.pattern.permute.xlu0 2
  %1846 = vperm.xlu0 %1845, %v22
  %v1847 = vpop.permute.xlu0 %1846
  %1849 = vset.pattern.permute.xlu0 2
  %1850 = vperm.xlu0 %1849, %v23
  %v1851 = vpop.permute.xlu0 %1850
  %1853 = vset.pattern.permute.xlu0 2
  %1854 = vperm.xlu0 %1853, %v24
  %v1855 = vpop.permute.xlu0 %1854
  %1857 = vset.pattern.permute.xlu0 2
  %1858 = vperm.xlu0 %1857, %v25
  %v1859 = vpop.permute.xlu0 %1858
  %1861 = vset.pattern.permute.xlu0 2
  %1862 = vperm.xlu0 %1861, %v26
  %v1863 = vpop.permute.xlu0 %1862
  %1865 = vset.pattern.permute.xlu0 2
  %1866 = vperm.xlu0 %1865, %v27
  %v1867 = vpop.permute.xlu0 %1866
  %1869 = vset.pattern.permute.xlu0 2
  %1870 = vperm.xlu0 %1869, %v28
  %v1871 = vpop.permute.xlu0 %1870
  %1873 = vset.pattern.permute.xlu0 2
  %1874 = vperm.xlu0 %1873, %v29
  %v1875 = vpop.permute.xlu0 %1874
  %1877 = vset.pattern.permute.xlu0 2
  %1878 = vperm.xlu0 %1877, %v30
  %v1879 = vpop.permute.xlu0 %1878
  %1881 = vset.pattern.permute.xlu0 2
  %1882 = vperm.xlu0 %1881, %v31
  %v1883 = vpop.permute.xlu0 %1882
  %1885 = vset.pattern.permute.xlu0 2
  %1886 = vperm.xlu0 %1885, %v32
  %v1887 = vpop.permute.xlu0 %1886
  %1889 = vset.pattern.permute.xlu0 2
  %1890 = vperm.xlu0 %1889, %v33
  %v1891 = vpop.permute.xlu0 %1890
  %1893 = vset.pattern.permute.xlu0 2
  %1894 = vperm.xlu0 %1893, %v34
  %v1895 = vpop.permute.xlu0 %1894
  %1897 = vset.pattern.permute.xlu0 2
  %1898 = vperm.xlu0 %1897, %v35
  %v1899 = vpop.permute.xlu0 %1898
  %1901 = vset.pattern.permute.xlu0 2
  %1902 = vperm.xlu0 %1901, %v36
  %v1903 = vpop.permute.xlu0 %1902
  %1905 = vset.pattern.permute.xlu0 2
  %1906 = vperm.xlu0 %1905, %v37
  %v1907 = vpop.permute.xlu0 %1906
  %1909 = vset.pattern.permute.xlu0 2
  %1910 = vperm.xlu0 %1909, %v38
  %v1911 = vpop.permute.xlu0 %1910
  %1913 = vset.pattern.permute.xlu0 2
  %1914 = vperm.xlu0 %1913, %v39
  %v1915 = vpop.permute.xlu0 %1914
  %1917 = vset.pattern.permute.xlu0 2
  %1918 = vperm.xlu0 %1917, %v40
  %v1919 = vpop.permute.xlu0 %1918
  %1921 = vset.pattern.permute.xlu0 2
  %1922 = vperm.xlu0 %1921, %v41
  %v1923 = vpop.permute.xlu0 %1922
  %1925 = vset.pattern.permute.xlu0 2
  %1926 = vperm.xlu0 %1925, %v42
  %v1927 = vpop.permute.xlu0 %1926
  %1929 = vset.pattern.permute.xlu0 2
  %1930 = vperm.xlu0 %1929, %v43
  %v1931 = vpop.permute.xlu0 %1930
  %1933 = vset.pattern.permute.xlu0 2
  %1934 = vperm.xlu0 %1933, %v44
  %v1935 = vpop.permute.xlu0 %1934
  %1937 = vset.pattern.permute.xlu0 2
  %1938 = vperm.xlu0 %1937, %v45
  %v1939 = vpop.permute.xlu0 %1938
  %1941 = vset.pattern.permute.xlu0 2
  %1942 = vperm.xlu0 %1941, %v46
  %v1943 = vpop.permute.xlu0 %1942
  %1945 = vset.pattern.permute.xlu0 2
  %1946 = vperm.xlu0 %1945, %v47
  %v1947 = vpop.permute.xlu0 %1946
  %1949 = vset.pattern.permute.xlu0 2
  %1950 = vperm.xlu0 %1949, %v48
  %v1951 = vpop.permute.xlu0 %1950
  %1953 = vset.pattern.permute.xlu0 2
  %1954 = vperm.xlu0 %1953, %v49
  %v1955 = vpop.permute.xlu0 %1954
  %1957 = vset.pattern.permute.xlu0 2
  %1958 = vperm.xlu0 %1957, %v50
  %v1959 = vpop.permute.xlu0 %1958
  %1961 = vset.pattern.permute.xlu0 2
  %1962 = vperm.xlu0 %1961, %v51
  %v1963 = vpop.permute.xlu0 %1962
  %1965 = vset.pattern.permute.xlu0 2
  %1966 = vperm.xlu0 %1965, %v52
  %v1967 = vpop.permute.xlu0 %1966
  %1969 = vset.pattern.permute.xlu0 2
  %1970 = vperm.xlu0 %1969, %v53
  %v1971 = vpop.permute.xlu0 %1970
  %1973 = vset.pattern.permute.xlu0 2
  %1974 = vperm.xlu0 %1973, %v54
  %v1975 = vpop.permute.xlu0 %1974
  %1977 = vset.pattern.permute.xlu0 2
  %1978 = vperm.xlu0 %1977, %v55
  %v1979 = vpop.permute.xlu0 %1978
  %1981 = vset.pattern.permute.xlu0 2
  %1982 = vperm.xlu0 %1981, %v56
  %v1983 = vpop.permute.xlu0 %1982
  %1985 = vset.pattern.permute.xlu0 2
  %1986 = vperm.xlu0 %1985, %v57
  %v1987 = vpop.permute.xlu0 %1986
  %1989 = vset.pattern.permute.xlu0 2
  %1990 = vperm.xlu0 %1989, %v58
  %v1991 = vpop.permute.xlu0 %1990
  %1993 = vset.pattern.permute.xlu0 2
  %1994 = vperm.xlu0 %1993, %v59
  %v1995 = vpop.permute.xlu0 %1994
  %1997 = vset.pattern.permute.xlu0 2
  %1998 = vperm.xlu0 %1997, %v60
  %v1999 = vpop.permute.xlu0 %1998
  %2001 = vset.pattern.permute.xlu0 2
  %2002 = vperm.xlu0 %2001, %v61
  %v2003 = vpop.permute.xlu0 %2002
  %2005 = vset.pattern.permute.xlu0 2
  %2006 = vperm.xlu0 %2005, %v62
  %v2007 = vpop.permute.xlu0 %2006
  %2009 = vset.pattern.permute.xlu0 2
  %2010 = vperm.xlu0 %2009, %v63
  %v2011 = vpop.permute.xlu0 %2010
  %2013 = vset.pattern.permute.xlu0 2
  %2014 = vperm.xlu0 %2013, %v64
  %v2015 = vpop.permute.xlu0 %2014
  %2017 = vset.pattern.permute.xlu0 2
  %2018 = vperm.xlu0 %2017, %v65
  %v2019 = vpop.permute.xlu0 %2018
  %2021 = vset.pattern.permute.xlu0 2
  %2022 = vperm.xlu0 %2021, %v66
  %v2023 = vpop.permute.xlu0 %2022
  %2025 = vset.pattern.permute.xlu0 2
  %2026 = vperm.xlu0 %2025, %v67
  %v2027 = vpop.permute.xlu0 %2026
  %2029 = vset.pattern.permute.xlu0 2
  %2030 = vperm.xlu0 %2029, %v68
  %v2031 = vpop.permute.xlu0 %2030
  %2033 = vset.pattern.permute.xlu0 2
  %2034 = vperm.xlu0 %2033, %v69
  %v2035 = vpop.permute.xlu0 %2034
  %2037 = vset.pattern.permute.xlu0 2
  %2038 = vperm.xlu0 %2037, %v70
  %v2039 = vpop.permute.xlu0 %2038
  %2041 = vset.pattern.permute.xlu0 2
  %2042 = vperm.xlu0 %2041, %v71
  %v2043 = vpop.permute.xlu0 %2042
  %2045 = vset.pattern.permute.xlu0 2
  %2046 = vperm.xlu0 %2045, %v72
  %v2047 = vpop.permute.xlu0 %2046
  %2049 = vset.pattern.permute.xlu0 2
  %2050 = vperm.xlu0 %2049, %v73
  %v2051 = vpop.permute.xlu0 %2050
  %2053 = vset.pattern.permute.xlu0 2
  %2054 = vperm.xlu0 %2053, %v74
  %v2055 = vpop.permute.xlu0 %2054
  %2057 = vset.pattern.permute.xlu0 2
  %2058 = vperm.xlu0 %2057, %v75
  %v2059 = vpop.permute.xlu0 %2058
  %2061 = vset.pattern.permute.xlu0 2
  %2062 = vperm.xlu0 %2061, %v76
  %v2063 = vpop.permute.xlu0 %2062
  %2065 = vset.pattern.permute.xlu0 2
  %2066 = vperm.xlu0 %2065, %v77
  %v2067 = vpop.permute.xlu0 %2066
  %2069 = vset.pattern.permute.xlu0 2
  %2070 = vperm.xlu0 %2069, %v78
  %v2071 = vpop.permute.xlu0 %2070
  %2073 = vset.pattern.permute.xlu0 2
  %2074 = vperm.xlu0 %2073, %v79
  %v2075 = vpop.permute.xlu0 %2074
  %2077 = vset.pattern.permute.xlu0 2
  %2078 = vperm.xlu0 %2077, %v80
  %v2079 = vpop.permute.xlu0 %2078
  %2081 = vset.pattern.permute.xlu0 2
  %2082 = vperm.xlu0 %2081, %v81
  %v2083 = vpop.permute.xlu0 %2082
  %2085 = vset.pattern.permute.xlu0 2
  %2086 = vperm.xlu0 %2085, %v82
  %v2087 = vpop.permute.xlu0 %2086
  %2089 = vset.pattern.permute.xlu0 2
  %2090 = vperm.xlu0 %2089, %v83
  %v2091 = vpop.permute.xlu0 %2090
  %2093 = vset.pattern.permute.xlu0 2
  %2094 = vperm.xlu0 %2093, %v84
  %v2095 = vpop.permute.xlu0 %2094
  %2097 = vset.pattern.permute.xlu0 2
  %2098 = vperm.xlu0 %2097, %v85
  %v2099 = vpop.permute.xlu0 %2098
  %2101 = vset.pattern.permute.xlu0 2
  %2102 = vperm.xlu0 %2101, %v86
  %v2103 = vpop.permute.xlu0 %2102
  %2105 = vset.pattern.permute.xlu0 2
  %2106 = vperm.xlu0 %2105, %v87
  %v2107 = vpop.permute.xlu0 %2106
  %2109 = vset.pattern.permute.xlu0 2
  %2110 = vperm.xlu0 %2109, %v88
  %v2111 = vpop.permute.xlu0 %2110
  %2113 = vset.pattern.permute.xlu0 2
  %2114 = vperm.xlu0 %2113, %v89
  %v2115 = vpop.permute.xlu0 %2114
  %2117 = vset.pattern.permute.xlu0 2
  %2118 = vperm.xlu0 %2117, %v90
  %v2119 = vpop.permute.xlu0 %2118
  %2121 = vset.pattern.permute.xlu0 2
  %2122 = vperm.xlu0 %2121, %v91
  %v2123 = vpop.permute.xlu0 %2122
  %2125 = vset.pattern.permute.xlu0 2
  %2126 = vperm.xlu0 %2125, %v92
  %v2127 = vpop.permute.xlu0 %2126
  %2129 = vset.pattern.permute.xlu0 2
  %2130 = vperm.xlu0 %2129, %v93
  %v2131 = vpop.permute.xlu0 %2130
  %2133 = vset.pattern.permute.xlu0 2
  %2134 = vperm.xlu0 %2133, %v94
  %v2135 = vpop.permute.xlu0 %2134
  %2137 = vset.pattern.permute.xlu0 2
  %2138 = vperm.xlu0 %2137, %v95
  %v2139 = vpop.permute.xlu0 %2138
  %2141 = vset.pattern.permute.xlu0 2
  %2142 = vperm.xlu0 %2141, %v96
  %v2143 = vpop.permute.xlu0 %2142
  %2145 = vset.pattern.permute.xlu0 2
  %2146 = vperm.xlu0 %2145, %v97
  %v2147 = vpop.permute.xlu0 %2146
  %2149 = vset.pattern.permute.xlu0 2
  %2150 = vperm.xlu0 %2149, %v98
  %v2151 = vpop.permute.xlu0 %2150
  %2153 = vset.pattern.permute.xlu0 2
  %2154 = vperm.xlu0 %2153, %v99
  %v2155 = vpop.permute.xlu0 %2154
  %2157 = vset.pattern.permute.xlu0 2
  %2158 = vperm.xlu0 %2157, %v100
  %v2159 = vpop.permute.xlu0 %2158
  %2161 = vset.pattern.permute.xlu0 2
  %2162 = vperm.xlu0 %2161, %v101
  %v2163 = vpop.permute.xlu0 %2162
  %2165 = vset.pattern.permute.xlu0 2
  %2166 = vperm.xlu0 %2165, %v102
  %v2167 = vpop.permute.xlu0 %2166
  %2169 = vset.pattern.permute.xlu0 2
  %2170 = vperm.xlu0 %2169, %v103
  %v2171 = vpop.permute.xlu0 %2170
  %2173 = vset.pattern.permute.xlu0 2
  %2174 = vperm.xlu0 %2173, %v104
  %v2175 = vpop.permute.xlu0 %2174
  %2177 = vset.pattern.permute.xlu0 2
  %2178 = vperm.xlu0 %2177, %v105
  %v2179 = vpop.permute.xlu0 %2178
  %2181 = vset.pattern.permute.xlu0 2
  %2182 = vperm.xlu0 %2181, %v106
  %v2183 = vpop.permute.xlu0 %2182
  %2185 = vset.pattern.permute.xlu0 2
  %2186 = vperm.xlu0 %2185, %v107
  %v2187 = vpop.permute.xlu0 %2186
  %2189 = vset.pattern.permute.xlu0 2
  %2190 = vperm.xlu0 %2189, %v108
  %v2191 = vpop.permute.xlu0 %2190
  %2193 = vset.pattern.permute.xlu0 2
  %2194 = vperm.xlu0 %2193, %v109
  %v2195 = vpop.permute.xlu0 %2194
  %2197 = vset.pattern.permute.xlu0 2
  %2198 = vperm.xlu0 %2197, %v110
  %v2199 = vpop.permute.xlu0 %2198
  %2201 = vset.pattern.permute.xlu0 2
  %2202 = vperm.xlu0 %2201, %v111
  %v2203 = vpop.permute.xlu0 %2202
  %2205 = vset.pattern.permute.xlu0 2
  %2206 = vperm.xlu0 %2205, %v112
  %v2207 = vpop.permute.xlu0 %2206
  %2209 = vset.pattern.permute.xlu0 2
  %2210 = vperm.xlu0 %2209, %v113
  %v2211 = vpop.permute.xlu0 %2210
  %2213 = vset.pattern.permute.xlu0 2
  %2214 = vperm.xlu0 %2213, %v114
  %v2215 = vpop.permute.xlu0 %2214
  %2217 = vset.pattern.permute.xlu0 2
  %2218 = vperm.xlu0 %2217, %v115
  %v2219 = vpop.permute.xlu0 %2218
  %2221 = vset.pattern.permute.xlu0 2
  %2222 = vperm.xlu0 %2221, %v116
  %v2223 = vpop.permute.xlu0 %2222
  %2225 = vset.pattern.permute.xlu0 2
  %2226 = vperm.xlu0 %2225, %v117
  %v2227 = vpop.permute.xlu0 %2226
  %2229 = vset.pattern.permute.xlu0 2
  %2230 = vperm.xlu0 %2229, %v118
  %v2231 = vpop.permute.xlu0 %2230
  %2233 = vset.pattern.permute.xlu0 2
  %2234 = vperm.xlu0 %2233, %v119
  %v2235 = vpop.permute.xlu0 %2234
  %2237 = vset.pattern.permute.xlu0 2
  %2238 = vperm.xlu0 %2237, %v120
  %v2239 = vpop.permute.xlu0 %2238
  %2241 = vset.pattern.permute.xlu0 2
  %2242 = vperm.xlu0 %2241, %v121
  %v2243 = vpop.permute.xlu0 %2242
  %2245 = vset.pattern.permute.xlu0 2
  %2246 = vperm.xlu0 %2245, %v122
  %v2247 = vpop.permute.xlu0 %2246
  %2249 = vset.pattern.permute.xlu0 2
  %2250 = vperm.xlu0 %2249, %v123
  %v2251 = vpop.permute.xlu0 %2250
  %2253 = vset.pattern.permute.xlu0 2
  %2254 = vperm.xlu0 %2253, %v124
  %v2255 = vpop.permute.xlu0 %2254
  %2257 = vset.pattern.permute.xlu0 2
  %2258 = vperm.xlu0 %2257, %v125
  %v2259 = vpop.permute.xlu0 %2258
  %2261 = vset.pattern.permute.xlu0 2
  %2262 = vperm.xlu0 %2261, %v126
  %v2263 = vpop.permute.xlu0 %2262
  %2265 = vset.pattern.permute.xlu0 2
  %2266 = vperm.xlu0 %2265, %v127
  %v2267 = vpop.permute.xlu0 %2266
  %2269 = vset.pattern.permute.xlu0 2
  %2270 = vperm.xlu0 %2269, %v128
  %v2271 = vpop.permute.xlu0 %2270
  %2273 = vset.pattern.permute.xlu0 2
  %2274 = vperm.xlu0 %2273, %v129
  %v2275 = vpop.permute.xlu0 %2274
  %2277 = vset.pattern.permute.xlu0 2
  %2278 = vperm.xlu0 %2277, %v130
  %v2279 = vpop.permute.xlu0 %2278
  %2281 = vset.pattern.permute.xlu0 2
  %2282 = vperm.xlu0 %2281, %v131
  %v2283 = vpop.permute.xlu0 %2282
  %2285 = vset.pattern.permute.xlu0 2
  %2286 = vperm.xlu0 %2285, %v132
  %v2287 = vpop.permute.xlu0 %2286
  %2289 = vset.pattern.permute.xlu0 2
  %2290 = vperm.xlu0 %2289, %v133
  %v2291 = vpop.permute.xlu0 %2290
  %2293 = vset.pattern.permute.xlu0 2
  %2294 = vperm.xlu0 %2293, %v134
  %v2295 = vpop.permute.xlu0 %2294
  %2297 = vset.pattern.permute.xlu0 2
  %2298 = vperm.xlu0 %2297, %v135
  %v2299 = vpop.permute.xlu0 %2298
  %2301 = vset.pattern.permute.xlu0 2
  %2302 = vperm.xlu0 %2301, %v136
  %v2303 = vpop.permute.xlu0 %2302
  %2305 = vset.pattern.permute.xlu0 2
  %2306 = vperm.xlu0 %2305, %v137
  %v2307 = vpop.permute.xlu0 %2306
  %2309 = vset.pattern.permute.xlu0 2
  %2310 = vperm.xlu0 %2309, %v138
  %v2311 = vpop.permute.xlu0 %2310
  %2313 = vset.pattern.permute.xlu0 2
  %2314 = vperm.xlu0 %2313, %v139
  %v2315 = vpop.permute.xlu0 %2314
  %2317 = vset.pattern.permute.xlu0 2
  %2318 = vperm.xlu0 %2317, %v140
  %v2319 = vpop.permute.xlu0 %2318
  %2321 = vset.pattern.permute.xlu0 2
  %2322 = vperm.xlu0 %2321, %v141
  %v2323 = vpop.permute.xlu0 %2322
  %v2325 = vperm.slane %v142, 2
  %v2326 = vmul.f32 %v1815, %v2325
  %v2327 = vmul.f32 %v1819, %v2325
  %v2328 = vmul.f32 %v1823, %v2325
  %v2329 = vmul.f32 %v1827, %v2325
  %v2330 = vmul.f32 %v1831, %v2325
  %v2331 = vmul.f32 %v1835, %v2325
  %v2332 = vmul.f32 %v1839, %v2325
  %v2333 = vmul.f32 %v1843, %v2325
  %v2334 = vmul.f32 %v1847, %v2325
  %v2335 = vmul.f32 %v1851, %v2325
  %v2336 = vmul.f32 %v1855, %v2325
  %v2337 = vmul.f32 %v1859, %v2325
  %v2338 = vmul.f32 %v1863, %v2325
  %v2339 = vmul.f32 %v1867, %v2325
  %v2340 = vmul.f32 %v1871, %v2325
  %v2341 = vmul.f32 %v1875, %v2325
  %v2342 = vmul.f32 %v1879, %v2325
  %v2343 = vmul.f32 %v1883, %v2325
  %v2344 = vmul.f32 %v1887, %v2325
  %v2345 = vmul.f32 %v1891, %v2325
  %v2346 = vmul.f32 %v1895, %v2325
  %v2347 = vmul.f32 %v1899, %v2325
  %v2348 = vmul.f32 %v1903, %v2325
  %v2349 = vmul.f32 %v1907, %v2325
  %v2350 = vmul.f32 %v1911, %v2325
  %v2351 = vmul.f32 %v1915, %v2325
  %v2352 = vmul.f32 %v1919, %v2325
  %v2353 = vmul.f32 %v1923, %v2325
  %v2354 = vmul.f32 %v1927, %v2325
  %v2355 = vmul.f32 %v1931, %v2325
  %v2356 = vmul.f32 %v1935, %v2325
  %v2357 = vmul.f32 %v1939, %v2325
  %v2358 = vmul.f32 %v1943, %v2325
  %v2359 = vmul.f32 %v1947, %v2325
  %v2360 = vmul.f32 %v1951, %v2325
  %v2361 = vmul.f32 %v1955, %v2325
  %v2362 = vmul.f32 %v1959, %v2325
  %v2363 = vmul.f32 %v1963, %v2325
  %v2364 = vmul.f32 %v1967, %v2325
  %v2365 = vmul.f32 %v1971, %v2325
  %v2366 = vmul.f32 %v1975, %v2325
  %v2367 = vmul.f32 %v1979, %v2325
  %v2368 = vmul.f32 %v1983, %v2325
  %v2369 = vmul.f32 %v1987, %v2325
  %v2370 = vmul.f32 %v1991, %v2325
  %v2371 = vmul.f32 %v1995, %v2325
  %v2372 = vmul.f32 %v1999, %v2325
  %v2373 = vmul.f32 %v2003, %v2325
  %v2374 = vmul.f32 %v2007, %v2325
  %v2375 = vmul.f32 %v2011, %v2325
  %v2376 = vmul.f32 %v2015, %v2325
  %v2377 = vmul.f32 %v2019, %v2325
  %v2378 = vmul.f32 %v2023, %v2325
  %v2379 = vmul.f32 %v2027, %v2325
  %v2380 = vmul.f32 %v2031, %v2325
  %v2381 = vmul.f32 %v2035, %v2325
  %v2382 = vmul.f32 %v2039, %v2325
  %v2383 = vmul.f32 %v2043, %v2325
  %v2384 = vmul.f32 %v2047, %v2325
  %v2385 = vmul.f32 %v2051, %v2325
  %v2386 = vmul.f32 %v2055, %v2325
  %v2387 = vmul.f32 %v2059, %v2325
  %v2388 = vmul.f32 %v2063, %v2325
  %v2389 = vmul.f32 %v2067, %v2325
  %v2390 = vmul.f32 %v2071, %v2325
  %v2391 = vmul.f32 %v2075, %v2325
  %v2392 = vmul.f32 %v2079, %v2325
  %v2393 = vmul.f32 %v2083, %v2325
  %v2394 = vmul.f32 %v2087, %v2325
  %v2395 = vmul.f32 %v2091, %v2325
  %v2396 = vmul.f32 %v2095, %v2325
  %v2397 = vmul.f32 %v2099, %v2325
  %v2398 = vmul.f32 %v2103, %v2325
  %v2399 = vmul.f32 %v2107, %v2325
  %v2400 = vmul.f32 %v2111, %v2325
  %v2401 = vmul.f32 %v2115, %v2325
  %v2402 = vmul.f32 %v2119, %v2325
  %v2403 = vmul.f32 %v2123, %v2325
  %v2404 = vmul.f32 %v2127, %v2325
  %v2405 = vmul.f32 %v2131, %v2325
  %v2406 = vmul.f32 %v2135, %v2325
  %v2407 = vmul.f32 %v2139, %v2325
  %v2408 = vmul.f32 %v2143, %v2325
  %v2409 = vmul.f32 %v2147, %v2325
  %v2410 = vmul.f32 %v2151, %v2325
  %v2411 = vmul.f32 %v2155, %v2325
  %v2412 = vmul.f32 %v2159, %v2325
  %v2413 = vmul.f32 %v2163, %v2325
  %v2414 = vmul.f32 %v2167, %v2325
  %v2415 = vmul.f32 %v2171, %v2325
  %v2416 = vmul.f32 %v2175, %v2325
  %v2417 = vmul.f32 %v2179, %v2325
  %v2418 = vmul.f32 %v2183, %v2325
  %v2419 = vmul.f32 %v2187, %v2325
  %v2420 = vmul.f32 %v2191, %v2325
  %v2421 = vmul.f32 %v2195, %v2325
  %v2422 = vmul.f32 %v2199, %v2325
  %v2423 = vmul.f32 %v2203, %v2325
  %v2424 = vmul.f32 %v2207, %v2325
  %v2425 = vmul.f32 %v2211, %v2325
  %v2426 = vmul.f32 %v2215, %v2325
  %v2427 = vmul.f32 %v2219, %v2325
  %v2428 = vmul.f32 %v2223, %v2325
  %v2429 = vmul.f32 %v2227, %v2325
  %v2430 = vmul.f32 %v2231, %v2325
  %v2431 = vmul.f32 %v2235, %v2325
  %v2432 = vmul.f32 %v2239, %v2325
  %v2433 = vmul.f32 %v2243, %v2325
  %v2434 = vmul.f32 %v2247, %v2325
  %v2435 = vmul.f32 %v2251, %v2325
  %v2436 = vmul.f32 %v2255, %v2325
  %v2437 = vmul.f32 %v2259, %v2325
  %v2438 = vmul.f32 %v2263, %v2325
  %v2439 = vmul.f32 %v2267, %v2325
  %v2440 = vmul.f32 %v2271, %v2325
  %v2441 = vmul.f32 %v2275, %v2325
  %v2442 = vmul.f32 %v2279, %v2325
  %v2443 = vmul.f32 %v2283, %v2325
  %v2444 = vmul.f32 %v2287, %v2325
  %v2445 = vmul.f32 %v2291, %v2325
  %v2446 = vmul.f32 %v2295, %v2325
  %v2447 = vmul.f32 %v2299, %v2325
  %v2448 = vmul.f32 %v2303, %v2325
  %v2449 = vmul.f32 %v2307, %v2325
  %v2450 = vmul.f32 %v2311, %v2325
  %v2451 = vmul.f32 %v2315, %v2325
  %v2452 = vmul.f32 %v2319, %v2325
  %v2453 = vmul.f32 %v2323, %v2325
  %v2454 = vadd.f32 %v1685, %v2326
  %v2455 = vadd.f32 %v1686, %v2327
  %v2456 = vadd.f32 %v1687, %v2328
  %v2457 = vadd.f32 %v1688, %v2329
  %v2458 = vadd.f32 %v1689, %v2330
  %v2459 = vadd.f32 %v1690, %v2331
  %v2460 = vadd.f32 %v1691, %v2332
  %v2461 = vadd.f32 %v1692, %v2333
  %v2462 = vadd.f32 %v1693, %v2334
  %v2463 = vadd.f32 %v1694, %v2335
  %v2464 = vadd.f32 %v1695, %v2336
  %v2465 = vadd.f32 %v1696, %v2337
  %v2466 = vadd.f32 %v1697, %v2338
  %v2467 = vadd.f32 %v1698, %v2339
  %v2468 = vadd.f32 %v1699, %v2340
  %v2469 = vadd.f32 %v1700, %v2341
  %v2470 = vadd.f32 %v1701, %v2342
  %v2471 = vadd.f32 %v1702, %v2343
  %v2472 = vadd.f32 %v1703, %v2344
  %v2473 = vadd.f32 %v1704, %v2345
  %v2474 = vadd.f32 %v1705, %v2346
  %v2475 = vadd.f32 %v1706, %v2347
  %v2476 = vadd.f32 %v1707, %v2348
  %v2477 = vadd.f32 %v1708, %v2349
  %v2478 = vadd.f32 %v1709, %v2350
  %v2479 = vadd.f32 %v1710, %v2351
  %v2480 = vadd.f32 %v1711, %v2352
  %v2481 = vadd.f32 %v1712, %v2353
  %v2482 = vadd.f32 %v1713, %v2354
  %v2483 = vadd.f32 %v1714, %v2355
  %v2484 = vadd.f32 %v1715, %v2356
  %v2485 = vadd.f32 %v1716, %v2357
  %v2486 = vadd.f32 %v1717, %v2358
  %v2487 = vadd.f32 %v1718, %v2359
  %v2488 = vadd.f32 %v1719, %v2360
  %v2489 = vadd.f32 %v1720, %v2361
  %v2490 = vadd.f32 %v1721, %v2362
  %v2491 = vadd.f32 %v1722, %v2363
  %v2492 = vadd.f32 %v1723, %v2364
  %v2493 = vadd.f32 %v1724, %v2365
  %v2494 = vadd.f32 %v1725, %v2366
  %v2495 = vadd.f32 %v1726, %v2367
  %v2496 = vadd.f32 %v1727, %v2368
  %v2497 = vadd.f32 %v1728, %v2369
  %v2498 = vadd.f32 %v1729, %v2370
  %v2499 = vadd.f32 %v1730, %v2371
  %v2500 = vadd.f32 %v1731, %v2372
  %v2501 = vadd.f32 %v1732, %v2373
  %v2502 = vadd.f32 %v1733, %v2374
  %v2503 = vadd.f32 %v1734, %v2375
  %v2504 = vadd.f32 %v1735, %v2376
  %v2505 = vadd.f32 %v1736, %v2377
  %v2506 = vadd.f32 %v1737, %v2378
  %v2507 = vadd.f32 %v1738, %v2379
  %v2508 = vadd.f32 %v1739, %v2380
  %v2509 = vadd.f32 %v1740, %v2381
  %v2510 = vadd.f32 %v1741, %v2382
  %v2511 = vadd.f32 %v1742, %v2383
  %v2512 = vadd.f32 %v1743, %v2384
  %v2513 = vadd.f32 %v1744, %v2385
  %v2514 = vadd.f32 %v1745, %v2386
  %v2515 = vadd.f32 %v1746, %v2387
  %v2516 = vadd.f32 %v1747, %v2388
  %v2517 = vadd.f32 %v1748, %v2389
  %v2518 = vadd.f32 %v1749, %v2390
  %v2519 = vadd.f32 %v1750, %v2391
  %v2520 = vadd.f32 %v1751, %v2392
  %v2521 = vadd.f32 %v1752, %v2393
  %v2522 = vadd.f32 %v1753, %v2394
  %v2523 = vadd.f32 %v1754, %v2395
  %v2524 = vadd.f32 %v1755, %v2396
  %v2525 = vadd.f32 %v1756, %v2397
  %v2526 = vadd.f32 %v1757, %v2398
  %v2527 = vadd.f32 %v1758, %v2399
  %v2528 = vadd.f32 %v1759, %v2400
  %v2529 = vadd.f32 %v1760, %v2401
  %v2530 = vadd.f32 %v1761, %v2402
  %v2531 = vadd.f32 %v1762, %v2403
  %v2532 = vadd.f32 %v1763, %v2404
  %v2533 = vadd.f32 %v1764, %v2405
  %v2534 = vadd.f32 %v1765, %v2406
  %v2535 = vadd.f32 %v1766, %v2407
  %v2536 = vadd.f32 %v1767, %v2408
  %v2537 = vadd.f32 %v1768, %v2409
  %v2538 = vadd.f32 %v1769, %v2410
  %v2539 = vadd.f32 %v1770, %v2411
  %v2540 = vadd.f32 %v1771, %v2412
  %v2541 = vadd.f32 %v1772, %v2413
  %v2542 = vadd.f32 %v1773, %v2414
  %v2543 = vadd.f32 %v1774, %v2415
  %v2544 = vadd.f32 %v1775, %v2416
  %v2545 = vadd.f32 %v1776, %v2417
  %v2546 = vadd.f32 %v1777, %v2418
  %v2547 = vadd.f32 %v1778, %v2419
  %v2548 = vadd.f32 %v1779, %v2420
  %v2549 = vadd.f32 %v1780, %v2421
  %v2550 = vadd.f32 %v1781, %v2422
  %v2551 = vadd.f32 %v1782, %v2423
  %v2552 = vadd.f32 %v1783, %v2424
  %v2553 = vadd.f32 %v1784, %v2425
  %v2554 = vadd.f32 %v1785, %v2426
  %v2555 = vadd.f32 %v1786, %v2427
  %v2556 = vadd.f32 %v1787, %v2428
  %v2557 = vadd.f32 %v1788, %v2429
  %v2558 = vadd.f32 %v1789, %v2430
  %v2559 = vadd.f32 %v1790, %v2431
  %v2560 = vadd.f32 %v1791, %v2432
  %v2561 = vadd.f32 %v1792, %v2433
  %v2562 = vadd.f32 %v1793, %v2434
  %v2563 = vadd.f32 %v1794, %v2435
  %v2564 = vadd.f32 %v1795, %v2436
  %v2565 = vadd.f32 %v1796, %v2437
  %v2566 = vadd.f32 %v1797, %v2438
  %v2567 = vadd.f32 %v1798, %v2439
  %v2568 = vadd.f32 %v1799, %v2440
  %v2569 = vadd.f32 %v1800, %v2441
  %v2570 = vadd.f32 %v1801, %v2442
  %v2571 = vadd.f32 %v1802, %v2443
  %v2572 = vadd.f32 %v1803, %v2444
  %v2573 = vadd.f32 %v1804, %v2445
  %v2574 = vadd.f32 %v1805, %v2446
  %v2575 = vadd.f32 %v1806, %v2447
  %v2576 = vadd.f32 %v1807, %v2448
  %v2577 = vadd.f32 %v1808, %v2449
  %v2578 = vadd.f32 %v1809, %v2450
  %v2579 = vadd.f32 %v1810, %v2451
  %v2580 = vadd.f32 %v1811, %v2452
  %v2581 = vadd.f32 %v1812, %v2453
  %v2582 = vmax.f32 %v2454, 0.0
  %v2583 = vmax.f32 %v2455, 0.0
  %v2584 = vmax.f32 %v2456, 0.0
  %v2585 = vmax.f32 %v2457, 0.0
  %v2586 = vmax.f32 %v2458, 0.0
  %v2587 = vmax.f32 %v2459, 0.0
  %v2588 = vmax.f32 %v2460, 0.0
  %v2589 = vmax.f32 %v2461, 0.0
  %v2590 = vmax.f32 %v2462, 0.0
  %v2591 = vmax.f32 %v2463, 0.0
  %v2592 = vmax.f32 %v2464, 0.0
  %v2593 = vmax.f32 %v2465, 0.0
  %v2594 = vmax.f32 %v2466, 0.0
  %v2595 = vmax.f32 %v2467, 0.0
  %v2596 = vmax.f32 %v2468, 0.0
  %v2597 = vmax.f32 %v2469, 0.0
  %v2598 = vmax.f32 %v2470, 0.0
  %v2599 = vmax.f32 %v2471, 0.0
  %v2600 = vmax.f32 %v2472, 0.0
  %v2601 = vmax.f32 %v2473, 0.0
  %v2602 = vmax.f32 %v2474, 0.0
  %v2603 = vmax.f32 %v2475, 0.0
  %v2604 = vmax.f32 %v2476, 0.0
  %v2605 = vmax.f32 %v2477, 0.0
  %v2606 = vmax.f32 %v2478, 0.0
  %v2607 = vmax.f32 %v2479, 0.0
  %v2608 = vmax.f32 %v2480, 0.0
  %v2609 = vmax.f32 %v2481, 0.0
  %v2610 = vmax.f32 %v2482, 0.0
  %v2611 = vmax.f32 %v2483, 0.0
  %v2612 = vmax.f32 %v2484, 0.0
  %v2613 = vmax.f32 %v2485, 0.0
  %v2614 = vmax.f32 %v2486, 0.0
  %v2615 = vmax.f32 %v2487, 0.0
  %v2616 = vmax.f32 %v2488, 0.0
  %v2617 = vmax.f32 %v2489, 0.0
  %v2618 = vmax.f32 %v2490, 0.0
  %v2619 = vmax.f32 %v2491, 0.0
  %v2620 = vmax.f32 %v2492, 0.0
  %v2621 = vmax.f32 %v2493, 0.0
  %v2622 = vmax.f32 %v2494, 0.0
  %v2623 = vmax.f32 %v2495, 0.0
  %v2624 = vmax.f32 %v2496, 0.0
  %v2625 = vmax.f32 %v2497, 0.0
  %v2626 = vmax.f32 %v2498, 0.0
  %v2627 = vmax.f32 %v2499, 0.0
  %v2628 = vmax.f32 %v2500, 0.0
  %v2629 = vmax.f32 %v2501, 0.0
  %v2630 = vmax.f32 %v2502, 0.0
  %v2631 = vmax.f32 %v2503, 0.0
  %v2632 = vmax.f32 %v2504, 0.0
  %v2633 = vmax.f32 %v2505, 0.0
  %v2634 = vmax.f32 %v2506, 0.0
  %v2635 = vmax.f32 %v2507, 0.0
  %v2636 = vmax.f32 %v2508, 0.0
  %v2637 = vmax.f32 %v2509, 0.0
  %v2638 = vmax.f32 %v2510, 0.0
  %v2639 = vmax.f32 %v2511, 0.0
  %v2640 = vmax.f32 %v2512, 0.0
  %v2641 = vmax.f32 %v2513, 0.0
  %v2642 = vmax.f32 %v2514, 0.0
  %v2643 = vmax.f32 %v2515, 0.0
  %v2644 = vmax.f32 %v2516, 0.0
  %v2645 = vmax.f32 %v2517, 0.0
  %v2646 = vmax.f32 %v2518, 0.0
  %v2647 = vmax.f32 %v2519, 0.0
  %v2648 = vmax.f32 %v2520, 0.0
  %v2649 = vmax.f32 %v2521, 0.0
  %v2650 = vmax.f32 %v2522, 0.0
  %v2651 = vmax.f32 %v2523, 0.0
  %v2652 = vmax.f32 %v2524, 0.0
  %v2653 = vmax.f32 %v2525, 0.0
  %v2654 = vmax.f32 %v2526, 0.0
  %v2655 = vmax.f32 %v2527, 0.0
  %v2656 = vmax.f32 %v2528, 0.0
  %v2657 = vmax.f32 %v2529, 0.0
  %v2658 = vmax.f32 %v2530, 0.0
  %v2659 = vmax.f32 %v2531, 0.0
  %v2660 = vmax.f32 %v2532, 0.0
  %v2661 = vmax.f32 %v2533, 0.0
  %v2662 = vmax.f32 %v2534, 0.0
  %v2663 = vmax.f32 %v2535, 0.0
  %v2664 = vmax.f32 %v2536, 0.0
  %v2665 = vmax.f32 %v2537, 0.0
  %v2666 = vmax.f32 %v2538, 0.0
  %v2667 = vmax.f32 %v2539, 0.0
  %v2668 = vmax.f32 %v2540, 0.0
  %v2669 = vmax.f32 %v2541, 0.0
  %v2670 = vmax.f32 %v2542, 0.0
  %v2671 = vmax.f32 %v2543, 0.0
  %v2672 = vmax.f32 %v2544, 0.0
  %v2673 = vmax.f32 %v2545, 0.0
  %v2674 = vmax.f32 %v2546, 0.0
  %v2675 = vmax.f32 %v2547, 0.0
  %v2676 = vmax.f32 %v2548, 0.0
  %v2677 = vmax.f32 %v2549, 0.0
  %v2678 = vmax.f32 %v2550, 0.0
  %v2679 = vmax.f32 %v2551, 0.0
  %v2680 = vmax.f32 %v2552, 0.0
  %v2681 = vmax.f32 %v2553, 0.0
  %v2682 = vmax.f32 %v2554, 0.0
  %v2683 = vmax.f32 %v2555, 0.0
  %v2684 = vmax.f32 %v2556, 0.0
  %v2685 = vmax.f32 %v2557, 0.0
  %v2686 = vmax.f32 %v2558, 0.0
  %v2687 = vmax.f32 %v2559, 0.0
  %v2688 = vmax.f32 %v2560, 0.0
  %v2689 = vmax.f32 %v2561, 0.0
  %v2690 = vmax.f32 %v2562, 0.0
  %v2691 = vmax.f32 %v2563, 0.0
  %v2692 = vmax.f32 %v2564, 0.0
  %v2693 = vmax.f32 %v2565, 0.0
  %v2694 = vmax.f32 %v2566, 0.0
  %v2695 = vmax.f32 %v2567, 0.0
  %v2696 = vmax.f32 %v2568, 0.0
  %v2697 = vmax.f32 %v2569, 0.0
  %v2698 = vmax.f32 %v2570, 0.0
  %v2699 = vmax.f32 %v2571, 0.0
  %v2700 = vmax.f32 %v2572, 0.0
  %v2701 = vmax.f32 %v2573, 0.0
  %v2702 = vmax.f32 %v2574, 0.0
  %v2703 = vmax.f32 %v2575, 0.0
  %v2704 = vmax.f32 %v2576, 0.0
  %v2705 = vmax.f32 %v2577, 0.0
  %v2706 = vmax.f32 %v2578, 0.0
  %v2707 = vmax.f32 %v2579, 0.0
  %v2708 = vmax.f32 %v2580, 0.0
  %v2709 = vmax.f32 %v2581, 0.0
  %2710 = vst [vmem:[%s3] sm:$0xff] %v2582
  %2711 = vst [vmem:[%s3 + $0x8] sm:$0xff] %v2583
  %2712 = vst [vmem:[%s3 + $0x10] sm:$0xff] %v2584
  %2713 = vst [vmem:[%s3 + $0x18] sm:$0xff] %v2585
  %2714 = vst [vmem:[%s3 + $0x20] sm:$0xff] %v2586
  %2715 = vst [vmem:[%s3 + $0x28] sm:$0xff] %v2587
  %2716 = vst [vmem:[%s3 + $0x30] sm:$0xff] %v2588
  %2717 = vst [vmem:[%s3 + $0x38] sm:$0xff] %v2589
  %2718 = vst [vmem:[%s3 + $0x40] sm:$0xff] %v2590
  %2719 = vst [vmem:[%s3 + $0x48] sm:$0xff] %v2591
  %2720 = vst [vmem:[%s3 + $0x50] sm:$0xff] %v2592
  %2721 = vst [vmem:[%s3 + $0x58] sm:$0xff] %v2593
  %2722 = vst [vmem:[%s3 + $0x60] sm:$0xff] %v2594
  %2723 = vst [vmem:[%s3 + $0x68] sm:$0xff] %v2595
  %2724 = vst [vmem:[%s3 + $0x70] sm:$0xff] %v2596
  %2725 = vst [vmem:[%s3 + $0x78] sm:$0xff] %v2597
  %2726 = vst [vmem:[%s3 + $0x80] sm:$0xff] %v2598
  %2727 = vst [vmem:[%s3 + $0x88] sm:$0xff] %v2599
  %2728 = vst [vmem:[%s3 + $0x90] sm:$0xff] %v2600
  %2729 = vst [vmem:[%s3 + $0x98] sm:$0xff] %v2601
  %2730 = vst [vmem:[%s3 + $0xa0] sm:$0xff] %v2602
  %2731 = vst [vmem:[%s3 + $0xa8] sm:$0xff] %v2603
  %2732 = vst [vmem:[%s3 + $0xb0] sm:$0xff] %v2604
  %2733 = vst [vmem:[%s3 + $0xb8] sm:$0xff] %v2605
  %2734 = vst [vmem:[%s3 + $0xc0] sm:$0xff] %v2606
  %2735 = vst [vmem:[%s3 + $0xc8] sm:$0xff] %v2607
  %2736 = vst [vmem:[%s3 + $0xd0] sm:$0xff] %v2608
  %2737 = vst [vmem:[%s3 + $0xd8] sm:$0xff] %v2609
  %2738 = vst [vmem:[%s3 + $0xe0] sm:$0xff] %v2610
  %2739 = vst [vmem:[%s3 + $0xe8] sm:$0xff] %v2611
  %2740 = vst [vmem:[%s3 + $0xf0] sm:$0xff] %v2612
  %2741 = vst [vmem:[%s3 + $0xf8] sm:$0xff] %v2613
  %2742 = vst [vmem:[%s3 + $0x100] sm:$0xff] %v2614
  %2743 = vst [vmem:[%s3 + $0x108] sm:$0xff] %v2615
  %2744 = vst [vmem:[%s3 + $0x110] sm:$0xff] %v2616
  %2745 = vst [vmem:[%s3 + $0x118] sm:$0xff] %v2617
  %2746 = vst [vmem:[%s3 + $0x120] sm:$0xff] %v2618
  %2747 = vst [vmem:[%s3 + $0x128] sm:$0xff] %v2619
  %2748 = vst [vmem:[%s3 + $0x130] sm:$0xff] %v2620
  %2749 = vst [vmem:[%s3 + $0x138] sm:$0xff] %v2621
  %2750 = vst [vmem:[%s3 + $0x140] sm:$0xff] %v2622
  %2751 = vst [vmem:[%s3 + $0x148] sm:$0xff] %v2623
  %2752 = vst [vmem:[%s3 + $0x150] sm:$0xff] %v2624
  %2753 = vst [vmem:[%s3 + $0x158] sm:$0xff] %v2625
  %2754 = vst [vmem:[%s3 + $0x160] sm:$0xff] %v2626
  %2755 = vst [vmem:[%s3 + $0x168] sm:$0xff] %v2627
  %2756 = vst [vmem:[%s3 + $0x170] sm:$0xff] %v2628
  %2757 = vst [vmem:[%s3 + $0x178] sm:$0xff] %v2629
  %2758 = vst [vmem:[%s3 + $0x180] sm:$0xff] %v2630
  %2759 = vst [vmem:[%s3 + $0x188] sm:$0xff] %v2631
  %2760 = vst [vmem:[%s3 + $0x190] sm:$0xff] %v2632
  %2761 = vst [vmem:[%s3 + $0x198] sm:$0xff] %v2633
  %2762 = vst [vmem:[%s3 + $0x1a0] sm:$0xff] %v2634
  %2763 = vst [vmem:[%s3 + $0x1a8] sm:$0xff] %v2635
  %2764 = vst [vmem:[%s3 + $0x1b0] sm:$0xff] %v2636
  %2765 = vst [vmem:[%s3 + $0x1b8] sm:$0xff] %v2637
  %2766 = vst [vmem:[%s3 + $0x1c0] sm:$0xff] %v2638
  %2767 = vst [vmem:[%s3 + $0x1c8] sm:$0xff] %v2639
  %2768 = vst [vmem:[%s3 + $0x1d0] sm:$0xff] %v2640
  %2769 = vst [vmem:[%s3 + $0x1d8] sm:$0xff] %v2641
  %2770 = vst [vmem:[%s3 + $0x1e0] sm:$0xff] %v2642
  %2771 = vst [vmem:[%s3 + $0x1e8] sm:$0xff] %v2643
  %2772 = vst [vmem:[%s3 + $0x1f0] sm:$0xff] %v2644
  %2773 = vst [vmem:[%s3 + $0x1f8] sm:$0xff] %v2645
  %2774 = vst [vmem:[%s3 + $0x200] sm:$0xff] %v2646
  %2775 = vst [vmem:[%s3 + $0x208] sm:$0xff] %v2647
  %2776 = vst [vmem:[%s3 + $0x210] sm:$0xff] %v2648
  %2777 = vst [vmem:[%s3 + $0x218] sm:$0xff] %v2649
  %2778 = vst [vmem:[%s3 + $0x220] sm:$0xff] %v2650
  %2779 = vst [vmem:[%s3 + $0x228] sm:$0xff] %v2651
  %2780 = vst [vmem:[%s3 + $0x230] sm:$0xff] %v2652
  %2781 = vst [vmem:[%s3 + $0x238] sm:$0xff] %v2653
  %2782 = vst [vmem:[%s3 + $0x240] sm:$0xff] %v2654
  %2783 = vst [vmem:[%s3 + $0x248] sm:$0xff] %v2655
  %2784 = vst [vmem:[%s3 + $0x250] sm:$0xff] %v2656
  %2785 = vst [vmem:[%s3 + $0x258] sm:$0xff] %v2657
  %2786 = vst [vmem:[%s3 + $0x260] sm:$0xff] %v2658
  %2787 = vst [vmem:[%s3 + $0x268] sm:$0xff] %v2659
  %2788 = vst [vmem:[%s3 + $0x270] sm:$0xff] %v2660
  %2789 = vst [vmem:[%s3 + $0x278] sm:$0xff] %v2661
  %2790 = vst [vmem:[%s3 + $0x280] sm:$0xff] %v2662
  %2791 = vst [vmem:[%s3 + $0x288] sm:$0xff] %v2663
  %2792 = vst [vmem:[%s3 + $0x290] sm:$0xff] %v2664
  %2793 = vst [vmem:[%s3 + $0x298] sm:$0xff] %v2665
  %2794 = vst [vmem:[%s3 + $0x2a0] sm:$0xff] %v2666
  %2795 = vst [vmem:[%s3 + $0x2a8] sm:$0xff] %v2667
  %2796 = vst [vmem:[%s3 + $0x2b0] sm:$0xff] %v2668
  %2797 = vst [vmem:[%s3 + $0x2b8] sm:$0xff] %v2669
  %2798 = vst [vmem:[%s3 + $0x2c0] sm:$0xff] %v2670
  %2799 = vst [vmem:[%s3 + $0x2c8] sm:$0xff] %v2671
  %2800 = vst [vmem:[%s3 + $0x2d0] sm:$0xff] %v2672
  %2801 = vst [vmem:[%s3 + $0x2d8] sm:$0xff] %v2673
  %2802 = vst [vmem:[%s3 + $0x2e0] sm:$0xff] %v2674
  %2803 = vst [vmem:[%s3 + $0x2e8] sm:$0xff] %v2675
  %2804 = vst [vmem:[%s3 + $0x2f0] sm:$0xff] %v2676
  %2805 = vst [vmem:[%s3 + $0x2f8] sm:$0xff] %v2677
  %2806 = vst [vmem:[%s3 + $0x300] sm:$0xff] %v2678
  %2807 = vst [vmem:[%s3 + $0x308] sm:$0xff] %v2679
  %2808 = vst [vmem:[%s3 + $0x310] sm:$0xff] %v2680
  %2809 = vst [vmem:[%s3 + $0x318] sm:$0xff] %v2681
  %2810 = vst [vmem:[%s3 + $0x320] sm:$0xff] %v2682
  %2811 = vst [vmem:[%s3 + $0x328] sm:$0xff] %v2683
  %2812 = vst [vmem:[%s3 + $0x330] sm:$0xff] %v2684
  %2813 = vst [vmem:[%s3 + $0x338] sm:$0xff] %v2685
  %2814 = vst [vmem:[%s3 + $0x340] sm:$0xff] %v2686
  %2815 = vst [vmem:[%s3 + $0x348] sm:$0xff] %v2687
  %2816 = vst [vmem:[%s3 + $0x350] sm:$0xff] %v2688
  %2817 = vst [vmem:[%s3 + $0x358] sm:$0xff] %v2689
  %2818 = vst [vmem:[%s3 + $0x360] sm:$0xff] %v2690
  %2819 = vst [vmem:[%s3 + $0x368] sm:$0xff] %v2691
  %2820 = vst [vmem:[%s3 + $0x370] sm:$0xff] %v2692
  %2821 = vst [vmem:[%s3 + $0x378] sm:$0xff] %v2693
  %2822 = vst [vmem:[%s3 + $0x380] sm:$0xff] %v2694
  %2823 = vst [vmem:[%s3 + $0x388] sm:$0xff] %v2695
  %2824 = vst [vmem:[%s3 + $0x390] sm:$0xff] %v2696
  %2825 = vst [vmem:[%s3 + $0x398] sm:$0xff] %v2697
  %2826 = vst [vmem:[%s3 + $0x3a0] sm:$0xff] %v2698
  %2827 = vst [vmem:[%s3 + $0x3a8] sm:$0xff] %v2699
  %2828 = vst [vmem:[%s3 + $0x3b0] sm:$0xff] %v2700
  %2829 = vst [vmem:[%s3 + $0x3b8] sm:$0xff] %v2701
  %2830 = vst [vmem:[%s3 + $0x3c0] sm:$0xff] %v2702
  %2831 = vst [vmem:[%s3 + $0x3c8] sm:$0xff] %v2703
  %2832 = vst [vmem:[%s3 + $0x3d0] sm:$0xff] %v2704
  %2833 = vst [vmem:[%s3 + $0x3d8] sm:$0xff] %v2705
  %2834 = vst [vmem:[%s3 + $0x3e0] sm:$0xff] %v2706
  %2835 = vst [vmem:[%s3 + $0x3e8] sm:$0xff] %v2707
  %2836 = vst [vmem:[%s3 + $0x3f0] sm:$0xff] %v2708
  %2837 = vst [vmem:[%s3 + $0x3f8] sm:$0xff] %v2709
  // Predicated region
  $region14: #{nemf_forward.2} parent=0 // pred_check
    _
  $region15: #{nemf_forward.2} parent=0 // pred_check_branch
    %2839 = sbr.rel (0) target = $region17
  $region16: #{nemf_forward.2} parent=0 // pred_region
    _
  $region17: #{nemf_forward.2} parent=0 // pred_fallthru
    _
  // Predicated region
  $region18: #{nemf_forward.2} parent=0 // pred_check
    _
  $region19: #{nemf_forward.2} parent=0 // pred_check_branch
    %2841 = sbr.rel (0) target = $region21
  $region20: #{nemf_forward.2} parent=0 // pred_region
    _
  $region21: #{nemf_forward.2} parent=0 // pred_fallthru
    _

// kernel: nemf_forward.3
$region0: #{nemf_forward.3}
  #allocation0 [shape = 'u32[]', space=smem, size = 0x4, offset = 0x4, fixed_abs, tag = 'smem constant byte address 0x4 - core index']
  #allocation1 [shape = 'u32[72,128]{1,0:T(1,128)}', space=vmem, size = 0x9000, scoped, tag = 'internal scratch']
  %s0 = inlined_call_operand.smem [shape: u32[31], index: -1, kind: input, shape index: {}]
  %s1 = sld [smem:[%s0]]
  %s2 = scalar_lea.smem %s0, 1
  %s3 = sld [smem:[%s2]]
  %s4 = scalar_lea.smem %s0, 2
  %s5 = sld [smem:[%s4]]
  %s6 = scalar_lea.smem %s0, 3
  %s7 = sld [smem:[%s6]]
  %s8 = scalar_lea.smem %s0, 4
  %s9 = sld [smem:[%s8]]
  %s10 = scalar_lea.smem %s0, 5
  %s11 = sld [smem:[%s10]]
  %s12 = scalar_lea.smem %s0, 6
  %s13 = sld [smem:[%s12]]
  %s14 = scalar_lea.smem %s0, 7
  %s15 = sld [smem:[%s14]]
  %s16 = scalar_lea.smem %s0, 8
  %s17 = sld [smem:[%s16]]
  %s18 = scalar_lea.smem %s0, 9
  %s19 = sld [smem:[%s18]]
  %s20 = scalar_lea.smem %s0, 10
  %s21 = sld [smem:[%s20]]
  %s22 = scalar_lea.smem %s0, 11
  %s23 = sld [smem:[%s22]]
  %s24 = scalar_lea.smem %s0, 12
  %s25 = sld [smem:[%s24]]
  %s26 = scalar_lea.smem %s0, 13
  %s27 = sld [smem:[%s26]]
  %s28 = scalar_lea.smem %s0, 14
  %s29 = sld [smem:[%s28]]
  %s30 = scalar_lea.smem %s0, 15
  %s31 = sld [smem:[%s30]]
  %s32 = scalar_lea.smem %s0, 16
  %s33 = sld [smem:[%s32]]
  %s34 = scalar_lea.smem %s0, 17
  %s35 = sld [smem:[%s34]]
  %s36 = scalar_lea.smem %s0, 18
  %s37 = sld [smem:[%s36]]
  %s38 = scalar_lea.smem %s0, 19
  %s39 = sld [smem:[%s38]]
  %s40 = scalar_lea.smem %s0, 20
  %s41 = sld [smem:[%s40]]
  %s42 = scalar_lea.smem %s0, 21
  %s43 = sld [smem:[%s42]]
  %s44 = scalar_lea.smem %s0, 22
  %s45 = sld [smem:[%s44]]
  %s46 = scalar_lea.smem %s0, 23
  %s47 = sld [smem:[%s46]]
  %s48 = scalar_lea.smem %s0, 24
  %s49 = sld [smem:[%s48]]
  %s50 = scalar_lea.smem %s0, 25
  %s51 = sld [smem:[%s50]]
  %s52 = scalar_lea.smem %s0, 26
  %s53 = sld [smem:[%s52]]
  %s54 = scalar_lea.smem %s0, 27
  %s55 = sld [smem:[%s54]]
  %s56 = scalar_lea.smem %s0, 28
  %s57 = sld [smem:[%s56]]
  %s58 = scalar_lea.smem %s0, 29
  %s59 = sld [smem:[%s58]]
  %s60 = scalar_lea.smem %s0, 30
  %s61 = sld [smem:[%s60]]
  %s62 = sld [smem:[#allocation0]]
  $region130: #{nemf_forward.3} parent=0
    _
  %s64 = ssub.s32 1, %s62
  %s65 = scalar_select 0, %s64, %s62
  // Predicated region
  $region2: #{nemf_forward.3} parent=0 // pred_check
    _
  $region3: #{nemf_forward.3} parent=0 // pred_check_branch
    %67 = sbr.rel (0) target = $region5
  $region4: #{nemf_forward.3} parent=0 // pred_region
    _
  $region5: #{nemf_forward.3} parent=0 // pred_fallthru
    _
  // Predicated region
  $region6: #{nemf_forward.3} parent=0 // pred_check
    _
  $region7: #{nemf_forward.3} parent=0 // pred_check_branch
    %69 = sbr.rel (0) target = $region9
  $region8: #{nemf_forward.3} parent=0 // pred_region
    _
  $region9: #{nemf_forward.3} parent=0 // pred_fallthru
    _
  // Predicated region
  $region10: #{nemf_forward.3} parent=0 // pred_check
    _
  $region11: #{nemf_forward.3} parent=0 // pred_check_branch
    %71 = sbr.rel (0) target = $region13
  $region12: #{nemf_forward.3} parent=0 // pred_region
    _
  $region13: #{nemf_forward.3} parent=0 // pred_fallthru
    _
  // Predicated region
  $region14: #{nemf_forward.3} parent=0 // pred_check
    _
  $region15: #{nemf_forward.3} parent=0 // pred_check_branch
    %73 = sbr.rel (0) target = $region17
  $region16: #{nemf_forward.3} parent=0 // pred_region
    _
  $region17: #{nemf_forward.3} parent=0 // pred_fallthru
    _
  // Predicated region
  $region18: #{nemf_forward.3} parent=0 // pred_check
    _
  $region19: #{nemf_forward.3} parent=0 // pred_check_branch
    %75 = sbr.rel (0) target = $region21
  $region20: #{nemf_forward.3} parent=0 // pred_region
    _
  $region21: #{nemf_forward.3} parent=0 // pred_fallthru
    _
  // Predicated region
  $region22: #{nemf_forward.3} parent=0 // pred_check
    _
  $region23: #{nemf_forward.3} parent=0 // pred_check_branch
    %77 = sbr.rel (0) target = $region25
  $region24: #{nemf_forward.3} parent=0 // pred_region
    _
  $region25: #{nemf_forward.3} parent=0 // pred_fallthru
    _
  // Predicated region
  $region26: #{nemf_forward.3} parent=0 // pred_check
    _
  $region27: #{nemf_forward.3} parent=0 // pred_check_branch
    %79 = sbr.rel (0) target = $region29
  $region28: #{nemf_forward.3} parent=0 // pred_region
    _
  $region29: #{nemf_forward.3} parent=0 // pred_fallthru
    _
  // Predicated region
  $region30: #{nemf_forward.3} parent=0 // pred_check
    _
  $region31: #{nemf_forward.3} parent=0 // pred_check_branch
    %81 = sbr.rel (0) target = $region33
  $region32: #{nemf_forward.3} parent=0 // pred_region
    _
  $region33: #{nemf_forward.3} parent=0 // pred_fallthru
    _
  // Predicated region
  $region34: #{nemf_forward.3} parent=0 // pred_check
    _
  $region35: #{nemf_forward.3} parent=0 // pred_check_branch
    %83 = sbr.rel (0) target = $region37
  $region36: #{nemf_forward.3} parent=0 // pred_region
    _
  $region37: #{nemf_forward.3} parent=0 // pred_fallthru
    _
  // Predicated region
  $region38: #{nemf_forward.3} parent=0 // pred_check
    _
  $region39: #{nemf_forward.3} parent=0 // pred_check_branch
    %85 = sbr.rel (0) target = $region41
  $region40: #{nemf_forward.3} parent=0 // pred_region
    _
  $region41: #{nemf_forward.3} parent=0 // pred_fallthru
    _
  // Predicated region
  $region42: #{nemf_forward.3} parent=0 // pred_check
    _
  $region43: #{nemf_forward.3} parent=0 // pred_check_branch
    %87 = sbr.rel (0) target = $region45
  $region44: #{nemf_forward.3} parent=0 // pred_region
    _
  $region45: #{nemf_forward.3} parent=0 // pred_fallthru
    _
  // Predicated region
  $region46: #{nemf_forward.3} parent=0 // pred_check
    _
  $region47: #{nemf_forward.3} parent=0 // pred_check_branch
    %89 = sbr.rel (0) target = $region49
  $region48: #{nemf_forward.3} parent=0 // pred_region
    _
  $region49: #{nemf_forward.3} parent=0 // pred_fallthru
    _
  // Predicated region
  $region50: #{nemf_forward.3} parent=0 // pred_check
    _
  $region51: #{nemf_forward.3} parent=0 // pred_check_branch
    %91 = sbr.rel (0) target = $region53
  $region52: #{nemf_forward.3} parent=0 // pred_region
    _
  $region53: #{nemf_forward.3} parent=0 // pred_fallthru
    _
  // Predicated region
  $region54: #{nemf_forward.3} parent=0 // pred_check
    _
  $region55: #{nemf_forward.3} parent=0 // pred_check_branch
    %93 = sbr.rel (0) target = $region57
  $region56: #{nemf_forward.3} parent=0 // pred_region
    _
  $region57: #{nemf_forward.3} parent=0 // pred_fallthru
    _
  // Predicated region
  $region58: #{nemf_forward.3} parent=0 // pred_check
    _
  $region59: #{nemf_forward.3} parent=0 // pred_check_branch
    %95 = sbr.rel (0) target = $region61
  $region60: #{nemf_forward.3} parent=0 // pred_region
    _
  $region61: #{nemf_forward.3} parent=0 // pred_fallthru
    _
  // Predicated region
  $region62: #{nemf_forward.3} parent=0 // pred_check
    _
  $region63: #{nemf_forward.3} parent=0 // pred_check_branch
    %97 = sbr.rel (0) target = $region65
  $region64: #{nemf_forward.3} parent=0 // pred_region
    _
  $region65: #{nemf_forward.3} parent=0 // pred_fallthru
    _
  // Predicated region
  $region66: #{nemf_forward.3} parent=0 // pred_check
    _
  $region67: #{nemf_forward.3} parent=0 // pred_check_branch
    %99 = sbr.rel (0) target = $region69
  $region68: #{nemf_forward.3} parent=0 // pred_region
    _
  $region69: #{nemf_forward.3} parent=0 // pred_fallthru
    _
  // Predicated region
  $region70: #{nemf_forward.3} parent=0 // pred_check
    _
  $region71: #{nemf_forward.3} parent=0 // pred_check_branch
    %101 = sbr.rel (0) target = $region73
  $region72: #{nemf_forward.3} parent=0 // pred_region
    _
  $region73: #{nemf_forward.3} parent=0 // pred_fallthru
    _
  // Predicated region
  $region74: #{nemf_forward.3} parent=0 // pred_check
    _
  $region75: #{nemf_forward.3} parent=0 // pred_check_branch
    %103 = sbr.rel (0) target = $region77
  $region76: #{nemf_forward.3} parent=0 // pred_region
    _
  $region77: #{nemf_forward.3} parent=0 // pred_fallthru
    _
  // Predicated region
  $region78: #{nemf_forward.3} parent=0 // pred_check
    _
  $region79: #{nemf_forward.3} parent=0 // pred_check_branch
    %105 = sbr.rel (0) target = $region81
  $region80: #{nemf_forward.3} parent=0 // pred_region
    _
  $region81: #{nemf_forward.3} parent=0 // pred_fallthru
    _
  // Predicated region
  $region82: #{nemf_forward.3} parent=0 // pred_check
    _
  $region83: #{nemf_forward.3} parent=0 // pred_check_branch
    %107 = sbr.rel (0) target = $region85
  $region84: #{nemf_forward.3} parent=0 // pred_region
    _
  $region85: #{nemf_forward.3} parent=0 // pred_fallthru
    _
  // Predicated region
  $region86: #{nemf_forward.3} parent=0 // pred_check
    _
  $region87: #{nemf_forward.3} parent=0 // pred_check_branch
    %109 = sbr.rel (0) target = $region89
  $region88: #{nemf_forward.3} parent=0 // pred_region
    _
  $region89: #{nemf_forward.3} parent=0 // pred_fallthru
    _
  // Predicated region
  $region90: #{nemf_forward.3} parent=0 // pred_check
    _
  $region91: #{nemf_forward.3} parent=0 // pred_check_branch
    %111 = sbr.rel (0) target = $region93
  $region92: #{nemf_forward.3} parent=0 // pred_region
    _
  $region93: #{nemf_forward.3} parent=0 // pred_fallthru
    _
  // Predicated region
  $region94: #{nemf_forward.3} parent=0 // pred_check
    _
  $region95: #{nemf_forward.3} parent=0 // pred_check_branch
    %113 = sbr.rel (0) target = $region97
  $region96: #{nemf_forward.3} parent=0 // pred_region
    _
  $region97: #{nemf_forward.3} parent=0 // pred_fallthru
    _
  // Predicated region
  $region98: #{nemf_forward.3} parent=0 // pred_check
    _
  $region99: #{nemf_forward.3} parent=0 // pred_check_branch
    %115 = sbr.rel (0) target = $region101
  $region100: #{nemf_forward.3} parent=0 // pred_region
    _
  $region101: #{nemf_forward.3} parent=0 // pred_fallthru
    _
  // Predicated region
  $region102: #{nemf_forward.3} parent=0 // pred_check
    _
  $region103: #{nemf_forward.3} parent=0 // pred_check_branch
    %117 = sbr.rel (0) target = $region105
  $region104: #{nemf_forward.3} parent=0 // pred_region
    _
  $region105: #{nemf_forward.3} parent=0 // pred_fallthru
    _
  // Predicated region
  $region106: #{nemf_forward.3} parent=0 // pred_check
    _
  $region107: #{nemf_forward.3} parent=0 // pred_check_branch
    %119 = sbr.rel (0) target = $region109
  $region108: #{nemf_forward.3} parent=0 // pred_region
    _
  $region109: #{nemf_forward.3} parent=0 // pred_fallthru
    _
  // Predicated region
  $region110: #{nemf_forward.3} parent=0 // pred_check
    _
  $region111: #{nemf_forward.3} parent=0 // pred_check_branch
    %121 = sbr.rel (0) target = $region113
  $region112: #{nemf_forward.3} parent=0 // pred_region
    _
  $region113: #{nemf_forward.3} parent=0 // pred_fallthru
    _
  // Predicated region
  $region114: #{nemf_forward.3} parent=0 // pred_check
    _
  $region115: #{nemf_forward.3} parent=0 // pred_check_branch
    %123 = sbr.rel (0) target = $region117
  $region116: #{nemf_forward.3} parent=0 // pred_region
    _
  $region117: #{nemf_forward.3} parent=0 // pred_fallthru
    _
  // Predicated region
  $region118: #{nemf_forward.3} parent=0 // pred_check
    _
  $region119: #{nemf_forward.3} parent=0 // pred_check_branch
    %125 = sbr.rel (0) target = $region121
  $region120: #{nemf_forward.3} parent=0 // pred_region
    _
  $region121: #{nemf_forward.3} parent=0 // pred_fallthru
    _
  %v126 = vld [vmem:[%s9] sm:$0x7]
  %v127 = vld [vmem:[%s11] sm:$0x1]
  %v128 = vld [vmem:[%s13] sm:$0xff]
  %v129 = vld [vmem:[%s13 + $0x8] sm:$0xff]
  %v130 = vld [vmem:[%s13 + $0x10] sm:$0xff]
  %v131 = vld [vmem:[%s13 + $0x18] sm:$0xff]
  %v132 = vld [vmem:[%s15] sm:$0x1]
  %v133 = vld [vmem:[%s17] sm:$0xff]
  %v134 = vld [vmem:[%s17 + $0x8] sm:$0xff]
  %v135 = vld [vmem:[%s17 + $0x10] sm:$0xff]
  %v136 = vld [vmem:[%s17 + $0x18] sm:$0xff]
  %v137 = vld [vmem:[%s19] sm:$0x7]
  %v138 = vld [vmem:[%s21] sm:$0x1]
  %v139 = vld [vmem:[%s23] sm:$0xff]
  %v140 = vld [vmem:[%s23 + $0x8] sm:$0xff]
  %v141 = vld [vmem:[%s23 + $0x10] sm:$0xff]
  %v142 = vld [vmem:[%s23 + $0x18] sm:$0xff]
  %v143 = vld [vmem:[%s25] sm:$0x1]
  %v144 = vld [vmem:[%s27] sm:$0x7]
  %v145 = vld [vmem:[%s29] sm:$0x1]
  %v146 = vld [vmem:[%s31] sm:$0xff]
  %v147 = vld [vmem:[%s31 + $0x8] sm:$0xff]
  %v148 = vld [vmem:[%s31 + $0x10] sm:$0xff]
  %v149 = vld [vmem:[%s31 + $0x18] sm:$0xff]
  %v150 = vld [vmem:[%s33] sm:$0x1]
  %v151 = vld [vmem:[%s35] sm:$0xff]
  %v152 = vld [vmem:[%s35 + $0x8] sm:$0xff]
  %v153 = vld [vmem:[%s35 + $0x10] sm:$0xff]
  %v154 = vld [vmem:[%s35 + $0x18] sm:$0xff]
  %v155 = vld [vmem:[%s37] sm:$0x7]
  %v156 = vld [vmem:[%s39] sm:$0x1]
  %v157 = vld [vmem:[%s41] sm:$0xff]
  %v158 = vld [vmem:[%s41 + $0x8] sm:$0xff]
  %v159 = vld [vmem:[%s41 + $0x10] sm:$0xff]
  %v160 = vld [vmem:[%s41 + $0x18] sm:$0xff]
  %v161 = vld [vmem:[%s43] sm:$0x1]
  %v162 = vld [vmem:[%s5] sm:$0xff]
  %v163 = vld [vmem:[%s5 + $0x8] sm:$0xff]
  %v164 = vld [vmem:[%s5 + $0x10] sm:$0xff]
  %v165 = vld [vmem:[%s5 + $0x18] sm:$0xff]
  %v166 = vld [vmem:[%s5 + $0x20] sm:$0xff]
  %v167 = vld [vmem:[%s5 + $0x28] sm:$0xff]
  %v168 = vld [vmem:[%s5 + $0x30] sm:$0xff]
  %v169 = vld [vmem:[%s5 + $0x38] sm:$0xff]
  %v171 = vperm.slane %v127, 0
  %vm173 = vcmask 23552
  %v175 = vsel %vm173, %v162, 0
  %v178 = vsel %vm173, %v163, 0
  %v181 = vsel %vm173, %v164, 0
  %v184 = vsel %vm173, %v165, 0
  %v187 = vsel %vm173, %v166, 0
  %v190 = vsel %vm173, %v167, 0
  %v193 = vsel %vm173, %v168, 0
  %v196 = vsel %vm173, %v169, 0
  %vm198 = vcmask 1042432
  %v200 = vsel %vm198, %v126, 0
  %202 = vmatpush.msra.mxu0 0.0
  %203 = vmatpush.msra.mxu0 0.0
  %204 = vmatpush.msra.mxu0 0.0
  %205 = vmatpush.msra.mxu0 0.0
  %206 = vmatpush.msra.mxu0 0.0
  %207 = vmatpush.msra.mxu0 0.0
  %208 = vmatpush.msra.mxu0 0.0
  %209 = vmatpush.msra.mxu0 0.0
  %210 = vmatpush.msra.mxu0 0.0
  %211 = vmatpush.msra.mxu0 0.0
  %212 = vmatpush.msra.mxu0 0.0
  %213 = vmatpush.msra.mxu0 0.0
  %214 = vmatpush.msra.mxu0 0.0
  %215 = vmatpush.msra.mxu0 0.0
  %216 = vmatpush.msra.mxu0 0.0
  %217 = vmatpush.msra.mxu0 %v200
  %218 = vmatmul.f32.gmra.mxu0 %v175
  %v219 = vpop.f32.mrf.mxu0
  %v220 = vadd.f32 %v171, %v219
  %221 = vmatmul.f32.gmra.mxu0 %v178
  %v222 = vpop.f32.mrf.mxu0
  %v223 = vadd.f32 %v171, %v222
  %224 = vmatmul.f32.gmra.mxu0 %v181
  %v225 = vpop.f32.mrf.mxu0
  %v226 = vadd.f32 %v171, %v225
  %227 = vmatmul.f32.gmra.mxu0 %v184
  %v228 = vpop.f32.mrf.mxu0
  %v229 = vadd.f32 %v171, %v228
  %230 = vmatmul.f32.gmra.mxu0 %v187
  %v231 = vpop.f32.mrf.mxu0
  %v232 = vadd.f32 %v171, %v231
  %233 = vmatmul.f32.gmra.mxu0 %v190
  %v234 = vpop.f32.mrf.mxu0
  %v235 = vadd.f32 %v171, %v234
  %236 = vmatmul.f32.gmra.mxu0 %v193
  %v237 = vpop.f32.mrf.mxu0
  %v238 = vadd.f32 %v171, %v237
  %239 = vmatmul.f32.gmra.mxu0 %v196
  %v240 = vpop.f32.mrf.mxu0
  %v241 = vadd.f32 %v171, %v240
  %242 = vdwg.mxu0
  %v243 = vmax.f32 %v220, 0.0
  %v244 = vmax.f32 %v223, 0.0
  %v245 = vmax.f32 %v226, 0.0
  %v246 = vmax.f32 %v229, 0.0
  %v247 = vmax.f32 %v232, 0.0
  %v248 = vmax.f32 %v235, 0.0
  %v249 = vmax.f32 %v238, 0.0
  %v250 = vmax.f32 %v241, 0.0
  %v252 = vperm.slane %v132, 0
  %vm254 = vcmask 261120
  %v256 = vsel %vm254, %v243, 0
  %v259 = vsel %vm254, %v244, 0
  %v262 = vsel %vm254, %v245, 0
  %v265 = vsel %vm254, %v246, 0
  %v268 = vsel %vm254, %v247, 0
  %v271 = vsel %vm254, %v248, 0
  %v274 = vsel %vm254, %v249, 0
  %v277 = vsel %vm254, %v250, 0
  %279 = vmatpush.msra.mxu0 0.0
  %280 = vmatpush.msra.mxu0 0.0
  %281 = vmatpush.msra.mxu0 0.0
  %282 = vmatpush.msra.mxu0 0.0
  %283 = vmatpush.msra.mxu0 0.0
  %284 = vmatpush.msra.mxu0 0.0
  %285 = vmatpush.msra.mxu0 0.0
  %286 = vmatpush.msra.mxu0 0.0
  %287 = vmatpush.msra.mxu0 0.0
  %288 = vmatpush.msra.mxu0 0.0
  %289 = vmatpush.msra.mxu0 0.0
  %290 = vmatpush.msra.mxu0 0.0
  %291 = vmatpush.msra.mxu0 %v131
  %292 = vmatpush.msra.mxu0 %v130
  %293 = vmatpush.msra.mxu0 %v129
  %294 = vmatpush.msra.mxu0 %v128
  %295 = vmatmul.f32.gmra.mxu0 %v256
  %v296 = vpop.f32.mrf.mxu0
  %v297 = vadd.f32 %v252, %v296
  %298 = vmatmul.f32.gmra.mxu0 %v259
  %v299 = vpop.f32.mrf.mxu0
  %v300 = vadd.f32 %v252, %v299
  %301 = vmatmul.f32.gmra.mxu0 %v262
  %v302 = vpop.f32.mrf.mxu0
  %v303 = vadd.f32 %v252, %v302
  %304 = vmatmul.f32.gmra.mxu0 %v265
  %v305 = vpop.f32.mrf.mxu0
  %v306 = vadd.f32 %v252, %v305
  %307 = vmatmul.f32.gmra.mxu0 %v268
  %v308 = vpop.f32.mrf.mxu0
  %v309 = vadd.f32 %v252, %v308
  %310 = vmatmul.f32.gmra.mxu0 %v271
  %v311 = vpop.f32.mrf.mxu0
  %v312 = vadd.f32 %v252, %v311
  %313 = vmatmul.f32.gmra.mxu0 %v274
  %v314 = vpop.f32.mrf.mxu0
  %v315 = vadd.f32 %v252, %v314
  %316 = vmatmul.f32.gmra.mxu0 %v277
  %v317 = vpop.f32.mrf.mxu0
  %v318 = vadd.f32 %v252, %v317
  %319 = vdwg.mxu0
  %v320 = vmax.f32 %v297, 0.0
  %v321 = vmax.f32 %v300, 0.0
  %v322 = vmax.f32 %v303, 0.0
  %v323 = vmax.f32 %v306, 0.0
  %v324 = vmax.f32 %v309, 0.0
  %v325 = vmax.f32 %v312, 0.0
  %v326 = vmax.f32 %v315, 0.0
  %v327 = vmax.f32 %v318, 0.0
  %v329 = vsel %vm198, %v137, 0
  %331 = vmatpush.msra.mxu0 0.0
  %332 = vmatpush.msra.mxu0 0.0
  %333 = vmatpush.msra.mxu0 0.0
  %334 = vmatpush.msra.mxu0 0.0
  %335 = vmatpush.msra.mxu0 0.0
  %336 = vmatpush.msra.mxu0 0.0
  %337 = vmatpush.msra.mxu0 0.0
  %338 = vmatpush.msra.mxu0 0.0
  %339 = vmatpush.msra.mxu0 0.0
  %340 = vmatpush.msra.mxu0 0.0
  %341 = vmatpush.msra.mxu0 0.0
  %342 = vmatpush.msra.mxu0 0.0
  %343 = vmatpush.msra.mxu0 0.0
  %344 = vmatpush.msra.mxu0 0.0
  %345 = vmatpush.msra.mxu0 0.0
  %346 = vmatpush.msra.mxu0 %v329
  %347 = vmatmul.f32.gmra.mxu0 %v175
  %v348 = vpop.f32.mrf.mxu0
  %v349 = vadd.f32 0.0, %v348
  %350 = vmatmul.f32.gmra.mxu0 %v178
  %v351 = vpop.f32.mrf.mxu0
  %v352 = vadd.f32 0.0, %v351
  %353 = vmatmul.f32.gmra.mxu0 %v181
  %v354 = vpop.f32.mrf.mxu0
  %v355 = vadd.f32 0.0, %v354
  %356 = vmatmul.f32.gmra.mxu0 %v184
  %v357 = vpop.f32.mrf.mxu0
  %v358 = vadd.f32 0.0, %v357
  %359 = vmatmul.f32.gmra.mxu0 %v187
  %v360 = vpop.f32.mrf.mxu0
  %v361 = vadd.f32 0.0, %v360
  %362 = vmatmul.f32.gmra.mxu0 %v190
  %v363 = vpop.f32.mrf.mxu0
  %v364 = vadd.f32 0.0, %v363
  %365 = vmatmul.f32.gmra.mxu0 %v193
  %v366 = vpop.f32.mrf.mxu0
  %v367 = vadd.f32 0.0, %v366
  %368 = vmatmul.f32.gmra.mxu0 %v196
  %v369 = vpop.f32.mrf.mxu0
  %v370 = vadd.f32 0.0, %v369
  %371 = vdwg.mxu0
  %v373 = vsel %vm254, %v320, 0
  %v376 = vsel %vm254, %v321, 0
  %v379 = vsel %vm254, %v322, 0
  %v382 = vsel %vm254, %v323, 0
  %v385 = vsel %vm254, %v324, 0
  %v388 = vsel %vm254, %v325, 0
  %v391 = vsel %vm254, %v326, 0
  %v394 = vsel %vm254, %v327, 0
  %396 = vmatpush.msra.mxu0 0.0
  %397 = vmatpush.msra.mxu0 0.0
  %398 = vmatpush.msra.mxu0 0.0
  %399 = vmatpush.msra.mxu0 0.0
  %400 = vmatpush.msra.mxu0 0.0
  %401 = vmatpush.msra.mxu0 0.0
  %402 = vmatpush.msra.mxu0 0.0
  %403 = vmatpush.msra.mxu0 0.0
  %404 = vmatpush.msra.mxu0 0.0
  %405 = vmatpush.msra.mxu0 0.0
  %406 = vmatpush.msra.mxu0 0.0
  %407 = vmatpush.msra.mxu0 0.0
  %408 = vmatpush.msra.mxu0 %v136
  %409 = vmatpush.msra.mxu0 %v135
  %410 = vmatpush.msra.mxu0 %v134
  %411 = vmatpush.msra.mxu0 %v133
  %412 = vmatmul.f32.gmra.mxu0 %v373
  %v413 = vpop.f32.mrf.mxu0
  %v414 = vadd.f32 %v349, %v413
  %415 = vmatmul.f32.gmra.mxu0 %v376
  %v416 = vpop.f32.mrf.mxu0
  %v417 = vadd.f32 %v352, %v416
  %418 = vmatmul.f32.gmra.mxu0 %v379
  %v419 = vpop.f32.mrf.mxu0
  %v420 = vadd.f32 %v355, %v419
  %421 = vmatmul.f32.gmra.mxu0 %v382
  %v422 = vpop.f32.mrf.mxu0
  %v423 = vadd.f32 %v358, %v422
  %424 = vmatmul.f32.gmra.mxu0 %v385
  %v425 = vpop.f32.mrf.mxu0
  %v426 = vadd.f32 %v361, %v425
  %427 = vmatmul.f32.gmra.mxu0 %v388
  %v428 = vpop.f32.mrf.mxu0
  %v429 = vadd.f32 %v364, %v428
  %430 = vmatmul.f32.gmra.mxu0 %v391
  %v431 = vpop.f32.mrf.mxu0
  %v432 = vadd.f32 %v367, %v431
  %433 = vmatmul.f32.gmra.mxu0 %v394
  %v434 = vpop.f32.mrf.mxu0
  %v435 = vadd.f32 %v370, %v434
  %436 = vdwg.mxu0
  %v438 = vperm.slane %v138, 0
  %v440 = vadd.f32 %v414, %v438
  %v441 = vadd.f32 %v417, %v438
  %v442 = vadd.f32 %v420, %v438
  %v443 = vadd.f32 %v423, %v438
  %v444 = vadd.f32 %v426, %v438
  %v445 = vadd.f32 %v429, %v438
  %v446 = vadd.f32 %v432, %v438
  %v447 = vadd.f32 %v435, %v438
  %v448 = vmax.f32 %v440, 0.0
  %v449 = vmax.f32 %v441, 0.0
  %v450 = vmax.f32 %v442, 0.0
  %v451 = vmax.f32 %v443, 0.0
  %v452 = vmax.f32 %v444, 0.0
  %v453 = vmax.f32 %v445, 0.0
  %v454 = vmax.f32 %v446, 0.0
  %v455 = vmax.f32 %v447, 0.0
  %v457 = vperm.slane %v143, 0
  %v460 = vsel %vm254, %v448, 0
  %v463 = vsel %vm254, %v449, 0
  %v466 = vsel %vm254, %v450, 0
  %v469 = vsel %vm254, %v451, 0
  %v472 = vsel %vm254, %v452, 0
  %v475 = vsel %vm254, %v453, 0
  %v478 = vsel %vm254, %v454, 0
  %v481 = vsel %vm254, %v455, 0
  %483 = vmatpush.msra.mxu0 0.0
  %484 = vmatpush.msra.mxu0 0.0
  %485 = vmatpush.msra.mxu0 0.0
  %486 = vmatpush.msra.mxu0 0.0
  %487 = vmatpush.msra.mxu0 0.0
  %488 = vmatpush.msra.mxu0 0.0
  %489 = vmatpush.msra.mxu0 0.0
  %490 = vmatpush.msra.mxu0 0.0
  %491 = vmatpush.msra.mxu0 0.0
  %492 = vmatpush.msra.mxu0 0.0
  %493 = vmatpush.msra.mxu0 0.0
  %494 = vmatpush.msra.mxu0 0.0
  %495 = vmatpush.msra.mxu0 %v142
  %496 = vmatpush.msra.mxu0 %v141
  %497 = vmatpush.msra.mxu0 %v140
  %498 = vmatpush.msra.mxu0 %v139
  %499 = vmatmul.f32.gmra.mxu0 %v460
  %v500 = vpop.f32.mrf.mxu0
  %v501 = vadd.f32 %v457, %v500
  %502 = vmatmul.f32.gmra.mxu0 %v463
  %v503 = vpop.f32.mrf.mxu0
  %v504 = vadd.f32 %v457, %v503
  %505 = vmatmul.f32.gmra.mxu0 %v466
  %v506 = vpop.f32.mrf.mxu0
  %v507 = vadd.f32 %v457, %v506
  %508 = vmatmul.f32.gmra.mxu0 %v469
  %v509 = vpop.f32.mrf.mxu0
  %v510 = vadd.f32 %v457, %v509
  %511 = vmatmul.f32.gmra.mxu0 %v472
  %v512 = vpop.f32.mrf.mxu0
  %v513 = vadd.f32 %v457, %v512
  %514 = vmatmul.f32.gmra.mxu0 %v475
  %v515 = vpop.f32.mrf.mxu0
  %v516 = vadd.f32 %v457, %v515
  %517 = vmatmul.f32.gmra.mxu0 %v478
  %v518 = vpop.f32.mrf.mxu0
  %v519 = vadd.f32 %v457, %v518
  %520 = vmatmul.f32.gmra.mxu0 %v481
  %v521 = vpop.f32.mrf.mxu0
  %v522 = vadd.f32 %v457, %v521
  %523 = vdwg.mxu0
  %v524 = vmax.f32 %v501, 0.0
  %v525 = vmax.f32 %v504, 0.0
  %v526 = vmax.f32 %v507, 0.0
  %v527 = vmax.f32 %v510, 0.0
  %v528 = vmax.f32 %v513, 0.0
  %v529 = vmax.f32 %v516, 0.0
  %v530 = vmax.f32 %v519, 0.0
  %v531 = vmax.f32 %v522, 0.0
  %v532 = vld [vmem:[%s7] sm:$0xff]
  %v533 = vld [vmem:[%s7 + $0x8] sm:$0xff]
  %v534 = vld [vmem:[%s7 + $0x10] sm:$0xff]
  %v535 = vld [vmem:[%s7 + $0x18] sm:$0xff]
  %v536 = vld [vmem:[%s7 + $0x20] sm:$0xff]
  %v537 = vld [vmem:[%s7 + $0x28] sm:$0xff]
  %v538 = vld [vmem:[%s7 + $0x30] sm:$0xff]
  %v539 = vld [vmem:[%s7 + $0x38] sm:$0xff]
  %v540 = vld [vmem:[%s7 + $0x40] sm:$0xff]
  %v541 = vld [vmem:[%s7 + $0x48] sm:$0xff]
  %v542 = vld [vmem:[%s7 + $0x50] sm:$0xff]
  %v543 = vld [vmem:[%s7 + $0x58] sm:$0xff]
  %v544 = vld [vmem:[%s7 + $0x60] sm:$0xff]
  %v545 = vld [vmem:[%s7 + $0x68] sm:$0xff]
  %v546 = vld [vmem:[%s7 + $0x70] sm:$0xff]
  %v547 = vld [vmem:[%s7 + $0x78] sm:$0xff]
  %v548 = vld [vmem:[%s7 + $0x80] sm:$0xff]
  %v549 = vld [vmem:[%s7 + $0x88] sm:$0xff]
  %v550 = vld [vmem:[%s7 + $0x90] sm:$0xff]
  %v551 = vld [vmem:[%s7 + $0x98] sm:$0xff]
  %v552 = vld [vmem:[%s7 + $0xa0] sm:$0xff]
  %v553 = vld [vmem:[%s7 + $0xa8] sm:$0xff]
  %v554 = vld [vmem:[%s7 + $0xb0] sm:$0xff]
  %v555 = vld [vmem:[%s7 + $0xb8] sm:$0xff]
  %v556 = vld [vmem:[%s7 + $0xc0] sm:$0xff]
  %v557 = vld [vmem:[%s7 + $0xc8] sm:$0xff]
  %v558 = vld [vmem:[%s7 + $0xd0] sm:$0xff]
  %v559 = vld [vmem:[%s7 + $0xd8] sm:$0xff]
  %v560 = vld [vmem:[%s7 + $0xe0] sm:$0xff]
  %v561 = vld [vmem:[%s7 + $0xe8] sm:$0xff]
  %v562 = vld [vmem:[%s7 + $0xf0] sm:$0xff]
  %v563 = vld [vmem:[%s7 + $0xf8] sm:$0xff]
  %v565 = vperm.slane %v145, 0
  %v568 = vsel %vm173, %v532, 0
  %v571 = vsel %vm173, %v533, 0
  %v574 = vsel %vm173, %v534, 0
  %v577 = vsel %vm173, %v535, 0
  %v580 = vsel %vm173, %v536, 0
  %v583 = vsel %vm173, %v537, 0
  %v586 = vsel %vm173, %v538, 0
  %v589 = vsel %vm173, %v539, 0
  %v592 = vsel %vm173, %v540, 0
  %v595 = vsel %vm173, %v541, 0
  %v598 = vsel %vm173, %v542, 0
  %v601 = vsel %vm173, %v543, 0
  %v604 = vsel %vm173, %v544, 0
  %v607 = vsel %vm173, %v545, 0
  %v610 = vsel %vm173, %v546, 0
  %v613 = vsel %vm173, %v547, 0
  %v616 = vsel %vm173, %v548, 0
  %v619 = vsel %vm173, %v549, 0
  %v622 = vsel %vm173, %v550, 0
  %v625 = vsel %vm173, %v551, 0
  %v628 = vsel %vm173, %v552, 0
  %v631 = vsel %vm173, %v553, 0
  %v634 = vsel %vm173, %v554, 0
  %v637 = vsel %vm173, %v555, 0
  %v640 = vsel %vm173, %v556, 0
  %v643 = vsel %vm173, %v557, 0
  %v646 = vsel %vm173, %v558, 0
  %v649 = vsel %vm173, %v559, 0
  %v652 = vsel %vm173, %v560, 0
  %v655 = vsel %vm173, %v561, 0
  %v658 = vsel %vm173, %v562, 0
  %v661 = vsel %vm173, %v563, 0
  %v664 = vsel %vm198, %v144, 0
  %666 = vmatpush.msra.mxu0 0.0
  %667 = vmatpush.msra.mxu0 0.0
  %668 = vmatpush.msra.mxu0 0.0
  %669 = vmatpush.msra.mxu0 0.0
  %670 = vmatpush.msra.mxu0 0.0
  %671 = vmatpush.msra.mxu0 0.0
  %672 = vmatpush.msra.mxu0 0.0
  %673 = vmatpush.msra.mxu0 0.0
  %674 = vmatpush.msra.mxu0 0.0
  %675 = vmatpush.msra.mxu0 0.0
  %676 = vmatpush.msra.mxu0 0.0
  %677 = vmatpush.msra.mxu0 0.0
  %678 = vmatpush.msra.mxu0 0.0
  %679 = vmatpush.msra.mxu0 0.0
  %680 = vmatpush.msra.mxu0 0.0
  %681 = vmatpush.msra.mxu0 %v664
  %682 = vmatmul.f32.gmra.mxu0 %v568
  %v683 = vpop.f32.mrf.mxu0
  %v684 = vadd.f32 %v565, %v683
  %685 = vmatmul.f32.gmra.mxu0 %v571
  %v686 = vpop.f32.mrf.mxu0
  %v687 = vadd.f32 %v565, %v686
  %688 = vmatmul.f32.gmra.mxu0 %v574
  %v689 = vpop.f32.mrf.mxu0
  %v690 = vadd.f32 %v565, %v689
  %691 = vmatmul.f32.gmra.mxu0 %v577
  %v692 = vpop.f32.mrf.mxu0
  %v693 = vadd.f32 %v565, %v692
  %694 = vmatmul.f32.gmra.mxu0 %v580
  %v695 = vpop.f32.mrf.mxu0
  %v696 = vadd.f32 %v565, %v695
  %697 = vmatmul.f32.gmra.mxu0 %v583
  %v698 = vpop.f32.mrf.mxu0
  %v699 = vadd.f32 %v565, %v698
  %700 = vmatmul.f32.gmra.mxu0 %v586
  %v701 = vpop.f32.mrf.mxu0
  %v702 = vadd.f32 %v565, %v701
  %703 = vmatmul.f32.gmra.mxu0 %v589
  %v704 = vpop.f32.mrf.mxu0
  %v705 = vadd.f32 %v565, %v704
  %706 = vmatmul.f32.gmra.mxu0 %v592
  %v707 = vpop.f32.mrf.mxu0
  %v708 = vadd.f32 %v565, %v707
  %709 = vmatmul.f32.gmra.mxu0 %v595
  %v710 = vpop.f32.mrf.mxu0
  %v711 = vadd.f32 %v565, %v710
  %712 = vmatmul.f32.gmra.mxu0 %v598
  %v713 = vpop.f32.mrf.mxu0
  %v714 = vadd.f32 %v565, %v713
  %715 = vmatmul.f32.gmra.mxu0 %v601
  %v716 = vpop.f32.mrf.mxu0
  %v717 = vadd.f32 %v565, %v716
  %718 = vmatmul.f32.gmra.mxu0 %v604
  %v719 = vpop.f32.mrf.mxu0
  %v720 = vadd.f32 %v565, %v719
  %721 = vmatmul.f32.gmra.mxu0 %v607
  %v722 = vpop.f32.mrf.mxu0
  %v723 = vadd.f32 %v565, %v722
  %724 = vmatmul.f32.gmra.mxu0 %v610
  %v725 = vpop.f32.mrf.mxu0
  %v726 = vadd.f32 %v565, %v725
  %727 = vmatmul.f32.gmra.mxu0 %v613
  %v728 = vpop.f32.mrf.mxu0
  %v729 = vadd.f32 %v565, %v728
  %730 = vmatmul.f32.gmra.mxu0 %v616
  %v731 = vpop.f32.mrf.mxu0
  %v732 = vadd.f32 %v565, %v731
  %733 = vmatmul.f32.gmra.mxu0 %v619
  %v734 = vpop.f32.mrf.mxu0
  %v735 = vadd.f32 %v565, %v734
  %736 = vmatmul.f32.gmra.mxu0 %v622
  %v737 = vpop.f32.mrf.mxu0
  %v738 = vadd.f32 %v565, %v737
  %739 = vmatmul.f32.gmra.mxu0 %v625
  %v740 = vpop.f32.mrf.mxu0
  %v741 = vadd.f32 %v565, %v740
  %742 = vmatmul.f32.gmra.mxu0 %v628
  %v743 = vpop.f32.mrf.mxu0
  %v744 = vadd.f32 %v565, %v743
  %745 = vmatmul.f32.gmra.mxu0 %v631
  %v746 = vpop.f32.mrf.mxu0
  %v747 = vadd.f32 %v565, %v746
  %748 = vmatmul.f32.gmra.mxu0 %v634
  %v749 = vpop.f32.mrf.mxu0
  %v750 = vadd.f32 %v565, %v749
  %751 = vmatmul.f32.gmra.mxu0 %v637
  %v752 = vpop.f32.mrf.mxu0
  %v753 = vadd.f32 %v565, %v752
  %754 = vmatmul.f32.gmra.mxu0 %v640
  %v755 = vpop.f32.mrf.mxu0
  %v756 = vadd.f32 %v565, %v755
  %757 = vmatmul.f32.gmra.mxu0 %v643
  %v758 = vpop.f32.mrf.mxu0
  %v759 = vadd.f32 %v565, %v758
  %760 = vmatmul.f32.gmra.mxu0 %v646
  %v761 = vpop.f32.mrf.mxu0
  %v762 = vadd.f32 %v565, %v761
  %763 = vmatmul.f32.gmra.mxu0 %v649
  %v764 = vpop.f32.mrf.mxu0
  %v765 = vadd.f32 %v565, %v764
  %766 = vmatmul.f32.gmra.mxu0 %v652
  %v767 = vpop.f32.mrf.mxu0
  %v768 = vadd.f32 %v565, %v767
  %769 = vmatmul.f32.gmra.mxu0 %v655
  %v770 = vpop.f32.mrf.mxu0
  %v771 = vadd.f32 %v565, %v770
  %772 = vmatmul.f32.gmra.mxu0 %v658
  %v773 = vpop.f32.mrf.mxu0
  %v774 = vadd.f32 %v565, %v773
  %775 = vmatmul.f32.gmra.mxu0 %v661
  %v776 = vpop.f32.mrf.mxu0
  %v777 = vadd.f32 %v565, %v776
  %778 = vdwg.mxu0
  %v779 = vmax.f32 %v684, 0.0
  %v780 = vmax.f32 %v687, 0.0
  %v781 = vmax.f32 %v690, 0.0
  %v782 = vmax.f32 %v693, 0.0
  %v783 = vmax.f32 %v696, 0.0
  %v784 = vmax.f32 %v699, 0.0
  %v785 = vmax.f32 %v702, 0.0
  %v786 = vmax.f32 %v705, 0.0
  %v787 = vmax.f32 %v708, 0.0
  %v788 = vmax.f32 %v711, 0.0
  %v789 = vmax.f32 %v714, 0.0
  %v790 = vmax.f32 %v717, 0.0
  %v791 = vmax.f32 %v720, 0.0
  %v792 = vmax.f32 %v723, 0.0
  %v793 = vmax.f32 %v726, 0.0
  %v794 = vmax.f32 %v729, 0.0
  %v795 = vmax.f32 %v732, 0.0
  %v796 = vmax.f32 %v735, 0.0
  %v797 = vmax.f32 %v738, 0.0
  %v798 = vmax.f32 %v741, 0.0
  %v799 = vmax.f32 %v744, 0.0
  %v800 = vmax.f32 %v747, 0.0
  %v801 = vmax.f32 %v750, 0.0
  %v802 = vmax.f32 %v753, 0.0
  %v803 = vmax.f32 %v756, 0.0
  %v804 = vmax.f32 %v759, 0.0
  %v805 = vmax.f32 %v762, 0.0
  %v806 = vmax.f32 %v765, 0.0
  %v807 = vmax.f32 %v768, 0.0
  %v808 = vmax.f32 %v771, 0.0
  %v809 = vmax.f32 %v774, 0.0
  %v810 = vmax.f32 %v777, 0.0
  %v812 = vperm.slane %v150, 0
  %v815 = vsel %vm254, %v779, 0
  %v818 = vsel %vm254, %v780, 0
  %v821 = vsel %vm254, %v781, 0
  %v824 = vsel %vm254, %v782, 0
  %v827 = vsel %vm254, %v783, 0
  %v830 = vsel %vm254, %v784, 0
  %v833 = vsel %vm254, %v785, 0
  %v836 = vsel %vm254, %v786, 0
  %v839 = vsel %vm254, %v787, 0
  %v842 = vsel %vm254, %v788, 0
  %v845 = vsel %vm254, %v789, 0
  %v848 = vsel %vm254, %v790, 0
  %v851 = vsel %vm254, %v791, 0
  %v854 = vsel %vm254, %v792, 0
  %v857 = vsel %vm254, %v793, 0
  %v860 = vsel %vm254, %v794, 0
  %v863 = vsel %vm254, %v795, 0
  %v866 = vsel %vm254, %v796, 0
  %v869 = vsel %vm254, %v797, 0
  %v872 = vsel %vm254, %v798, 0
  %v875 = vsel %vm254, %v799, 0
  %v878 = vsel %vm254, %v800, 0
  %v881 = vsel %vm254, %v801, 0
  %v884 = vsel %vm254, %v802, 0
  %v887 = vsel %vm254, %v803, 0
  %v890 = vsel %vm254, %v804, 0
  %v893 = vsel %vm254, %v805, 0
  %v896 = vsel %vm254, %v806, 0
  %v899 = vsel %vm254, %v807, 0
  %v902 = vsel %vm254, %v808, 0
  %v905 = vsel %vm254, %v809, 0
  %v908 = vsel %vm254, %v810, 0
  %910 = vmatpush.msra.mxu0 0.0
  %911 = vmatpush.msra.mxu0 0.0
  %912 = vmatpush.msra.mxu0 0.0
  %913 = vmatpush.msra.mxu0 0.0
  %914 = vmatpush.msra.mxu0 0.0
  %915 = vmatpush.msra.mxu0 0.0
  %916 = vmatpush.msra.mxu0 0.0
  %917 = vmatpush.msra.mxu0 0.0
  %918 = vmatpush.msra.mxu0 0.0
  %919 = vmatpush.msra.mxu0 0.0
  %920 = vmatpush.msra.mxu0 0.0
  %921 = vmatpush.msra.mxu0 0.0
  %922 = vmatpush.msra.mxu0 %v149
  %923 = vmatpush.msra.mxu0 %v148
  %924 = vmatpush.msra.mxu0 %v147
  %925 = vmatpush.msra.mxu0 %v146
  %926 = vmatmul.f32.gmra.mxu0 %v815
  %v927 = vpop.f32.mrf.mxu0
  %v928 = vadd.f32 %v812, %v927
  %929 = vmatmul.f32.gmra.mxu0 %v818
  %v930 = vpop.f32.mrf.mxu0
  %v931 = vadd.f32 %v812, %v930
  %932 = vmatmul.f32.gmra.mxu0 %v821
  %v933 = vpop.f32.mrf.mxu0
  %v934 = vadd.f32 %v812, %v933
  %935 = vmatmul.f32.gmra.mxu0 %v824
  %v936 = vpop.f32.mrf.mxu0
  %v937 = vadd.f32 %v812, %v936
  %938 = vmatmul.f32.gmra.mxu0 %v827
  %v939 = vpop.f32.mrf.mxu0
  %v940 = vadd.f32 %v812, %v939
  %941 = vmatmul.f32.gmra.mxu0 %v830
  %v942 = vpop.f32.mrf.mxu0
  %v943 = vadd.f32 %v812, %v942
  %944 = vmatmul.f32.gmra.mxu0 %v833
  %v945 = vpop.f32.mrf.mxu0
  %v946 = vadd.f32 %v812, %v945
  %947 = vmatmul.f32.gmra.mxu0 %v836
  %v948 = vpop.f32.mrf.mxu0
  %v949 = vadd.f32 %v812, %v948
  %950 = vmatmul.f32.gmra.mxu0 %v839
  %v951 = vpop.f32.mrf.mxu0
  %v952 = vadd.f32 %v812, %v951
  %953 = vmatmul.f32.gmra.mxu0 %v842
  %v954 = vpop.f32.mrf.mxu0
  %v955 = vadd.f32 %v812, %v954
  %956 = vmatmul.f32.gmra.mxu0 %v845
  %v957 = vpop.f32.mrf.mxu0
  %v958 = vadd.f32 %v812, %v957
  %959 = vmatmul.f32.gmra.mxu0 %v848
  %v960 = vpop.f32.mrf.mxu0
  %v961 = vadd.f32 %v812, %v960
  %962 = vmatmul.f32.gmra.mxu0 %v851
  %v963 = vpop.f32.mrf.mxu0
  %v964 = vadd.f32 %v812, %v963
  %965 = vmatmul.f32.gmra.mxu0 %v854
  %v966 = vpop.f32.mrf.mxu0
  %v967 = vadd.f32 %v812, %v966
  %968 = vmatmul.f32.gmra.mxu0 %v857
  %v969 = vpop.f32.mrf.mxu0
  %v970 = vadd.f32 %v812, %v969
  %971 = vmatmul.f32.gmra.mxu0 %v860
  %v972 = vpop.f32.mrf.mxu0
  %v973 = vadd.f32 %v812, %v972
  %974 = vmatmul.f32.gmra.mxu0 %v863
  %v975 = vpop.f32.mrf.mxu0
  %v976 = vadd.f32 %v812, %v975
  %977 = vmatmul.f32.gmra.mxu0 %v866
  %v978 = vpop.f32.mrf.mxu0
  %v979 = vadd.f32 %v812, %v978
  %980 = vmatmul.f32.gmra.mxu0 %v869
  %v981 = vpop.f32.mrf.mxu0
  %v982 = vadd.f32 %v812, %v981
  %983 = vmatmul.f32.gmra.mxu0 %v872
  %v984 = vpop.f32.mrf.mxu0
  %v985 = vadd.f32 %v812, %v984
  %986 = vmatmul.f32.gmra.mxu0 %v875
  %v987 = vpop.f32.mrf.mxu0
  %v988 = vadd.f32 %v812, %v987
  %989 = vmatmul.f32.gmra.mxu0 %v878
  %v990 = vpop.f32.mrf.mxu0
  %v991 = vadd.f32 %v812, %v990
  %992 = vmatmul.f32.gmra.mxu0 %v881
  %v993 = vpop.f32.mrf.mxu0
  %v994 = vadd.f32 %v812, %v993
  %995 = vmatmul.f32.gmra.mxu0 %v884
  %v996 = vpop.f32.mrf.mxu0
  %v997 = vadd.f32 %v812, %v996
  %998 = vmatmul.f32.gmra.mxu0 %v887
  %v999 = vpop.f32.mrf.mxu0
  %v1000 = vadd.f32 %v812, %v999
  %1001 = vmatmul.f32.gmra.mxu0 %v890
  %v1002 = vpop.f32.mrf.mxu0
  %v1003 = vadd.f32 %v812, %v1002
  %1004 = vmatmul.f32.gmra.mxu0 %v893
  %v1005 = vpop.f32.mrf.mxu0
  %v1006 = vadd.f32 %v812, %v1005
  %1007 = vmatmul.f32.gmra.mxu0 %v896
  %v1008 = vpop.f32.mrf.mxu0
  %v1009 = vadd.f32 %v812, %v1008
  %1010 = vmatmul.f32.gmra.mxu0 %v899
  %v1011 = vpop.f32.mrf.mxu0
  %v1012 = vadd.f32 %v812, %v1011
  %1013 = vmatmul.f32.gmra.mxu0 %v902
  %v1014 = vpop.f32.mrf.mxu0
  %v1015 = vadd.f32 %v812, %v1014
  %1016 = vmatmul.f32.gmra.mxu0 %v905
  %v1017 = vpop.f32.mrf.mxu0
  %v1018 = vadd.f32 %v812, %v1017
  %1019 = vmatmul.f32.gmra.mxu0 %v908
  %v1020 = vpop.f32.mrf.mxu0
  %v1021 = vadd.f32 %v812, %v1020
  %1022 = vdwg.mxu0
  %v1023 = vmax.f32 %v928, 0.0
  %v1024 = vmax.f32 %v931, 0.0
  %v1025 = vmax.f32 %v934, 0.0
  %v1026 = vmax.f32 %v937, 0.0
  %v1027 = vmax.f32 %v940, 0.0
  %v1028 = vmax.f32 %v943, 0.0
  %v1029 = vmax.f32 %v946, 0.0
  %v1030 = vmax.f32 %v949, 0.0
  %v1031 = vmax.f32 %v952, 0.0
  %v1032 = vmax.f32 %v955, 0.0
  %v1033 = vmax.f32 %v958, 0.0
  %v1034 = vmax.f32 %v961, 0.0
  %v1035 = vmax.f32 %v964, 0.0
  %v1036 = vmax.f32 %v967, 0.0
  %v1037 = vmax.f32 %v970, 0.0
  %v1038 = vmax.f32 %v973, 0.0
  %v1039 = vmax.f32 %v976, 0.0
  %v1040 = vmax.f32 %v979, 0.0
  %v1041 = vmax.f32 %v982, 0.0
  %v1042 = vmax.f32 %v985, 0.0
  %v1043 = vmax.f32 %v988, 0.0
  %v1044 = vmax.f32 %v991, 0.0
  %v1045 = vmax.f32 %v994, 0.0
  %v1046 = vmax.f32 %v997, 0.0
  %v1047 = vmax.f32 %v1000, 0.0
  %v1048 = vmax.f32 %v1003, 0.0
  %v1049 = vmax.f32 %v1006, 0.0
  %v1050 = vmax.f32 %v1009, 0.0
  %v1051 = vmax.f32 %v1012, 0.0
  %v1052 = vmax.f32 %v1015, 0.0
  %v1053 = vmax.f32 %v1018, 0.0
  %v1054 = vmax.f32 %v1021, 0.0
  %v1056 = vsel %vm198, %v155, 0
  %1058 = vmatpush.msra.mxu0 0.0
  %1059 = vmatpush.msra.mxu0 0.0
  %1060 = vmatpush.msra.mxu0 0.0
  %1061 = vmatpush.msra.mxu0 0.0
  %1062 = vmatpush.msra.mxu0 0.0
  %1063 = vmatpush.msra.mxu0 0.0
  %1064 = vmatpush.msra.mxu0 0.0
  %1065 = vmatpush.msra.mxu0 0.0
  %1066 = vmatpush.msra.mxu0 0.0
  %1067 = vmatpush.msra.mxu0 0.0
  %1068 = vmatpush.msra.mxu0 0.0
  %1069 = vmatpush.msra.mxu0 0.0
  %1070 = vmatpush.msra.mxu0 0.0
  %1071 = vmatpush.msra.mxu0 0.0
  %1072 = vmatpush.msra.mxu0 0.0
  %1073 = vmatpush.msra.mxu0 %v1056
  %1074 = vmatmul.f32.gmra.mxu0 %v568
  %v1075 = vpop.f32.mrf.mxu0
  %v1076 = vadd.f32 0.0, %v1075
  %1077 = vmatmul.f32.gmra.mxu0 %v571
  %v1078 = vpop.f32.mrf.mxu0
  %v1079 = vadd.f32 0.0, %v1078
  %1080 = vmatmul.f32.gmra.mxu0 %v574
  %v1081 = vpop.f32.mrf.mxu0
  %v1082 = vadd.f32 0.0, %v1081
  %1083 = vmatmul.f32.gmra.mxu0 %v577
  %v1084 = vpop.f32.mrf.mxu0
  %v1085 = vadd.f32 0.0, %v1084
  %1086 = vmatmul.f32.gmra.mxu0 %v580
  %v1087 = vpop.f32.mrf.mxu0
  %v1088 = vadd.f32 0.0, %v1087
  %1089 = vmatmul.f32.gmra.mxu0 %v583
  %v1090 = vpop.f32.mrf.mxu0
  %v1091 = vadd.f32 0.0, %v1090
  %1092 = vmatmul.f32.gmra.mxu0 %v586
  %v1093 = vpop.f32.mrf.mxu0
  %v1094 = vadd.f32 0.0, %v1093
  %1095 = vmatmul.f32.gmra.mxu0 %v589
  %v1096 = vpop.f32.mrf.mxu0
  %v1097 = vadd.f32 0.0, %v1096
  %1098 = vmatmul.f32.gmra.mxu0 %v592
  %v1099 = vpop.f32.mrf.mxu0
  %v1100 = vadd.f32 0.0, %v1099
  %1101 = vmatmul.f32.gmra.mxu0 %v595
  %v1102 = vpop.f32.mrf.mxu0
  %v1103 = vadd.f32 0.0, %v1102
  %1104 = vmatmul.f32.gmra.mxu0 %v598
  %v1105 = vpop.f32.mrf.mxu0
  %v1106 = vadd.f32 0.0, %v1105
  %1107 = vmatmul.f32.gmra.mxu0 %v601
  %v1108 = vpop.f32.mrf.mxu0
  %v1109 = vadd.f32 0.0, %v1108
  %1110 = vmatmul.f32.gmra.mxu0 %v604
  %v1111 = vpop.f32.mrf.mxu0
  %v1112 = vadd.f32 0.0, %v1111
  %1113 = vmatmul.f32.gmra.mxu0 %v607
  %v1114 = vpop.f32.mrf.mxu0
  %v1115 = vadd.f32 0.0, %v1114
  %1116 = vmatmul.f32.gmra.mxu0 %v610
  %v1117 = vpop.f32.mrf.mxu0
  %v1118 = vadd.f32 0.0, %v1117
  %1119 = vmatmul.f32.gmra.mxu0 %v613
  %v1120 = vpop.f32.mrf.mxu0
  %v1121 = vadd.f32 0.0, %v1120
  %1122 = vmatmul.f32.gmra.mxu0 %v616
  %v1123 = vpop.f32.mrf.mxu0
  %v1124 = vadd.f32 0.0, %v1123
  %1125 = vmatmul.f32.gmra.mxu0 %v619
  %v1126 = vpop.f32.mrf.mxu0
  %v1127 = vadd.f32 0.0, %v1126
  %1128 = vmatmul.f32.gmra.mxu0 %v622
  %v1129 = vpop.f32.mrf.mxu0
  %v1130 = vadd.f32 0.0, %v1129
  %1131 = vmatmul.f32.gmra.mxu0 %v625
  %v1132 = vpop.f32.mrf.mxu0
  %v1133 = vadd.f32 0.0, %v1132
  %1134 = vmatmul.f32.gmra.mxu0 %v628
  %v1135 = vpop.f32.mrf.mxu0
  %v1136 = vadd.f32 0.0, %v1135
  %1137 = vmatmul.f32.gmra.mxu0 %v631
  %v1138 = vpop.f32.mrf.mxu0
  %v1139 = vadd.f32 0.0, %v1138
  %1140 = vmatmul.f32.gmra.mxu0 %v634
  %v1141 = vpop.f32.mrf.mxu0
  %v1142 = vadd.f32 0.0, %v1141
  %1143 = vmatmul.f32.gmra.mxu0 %v637
  %v1144 = vpop.f32.mrf.mxu0
  %v1145 = vadd.f32 0.0, %v1144
  %1146 = vmatmul.f32.gmra.mxu0 %v640
  %v1147 = vpop.f32.mrf.mxu0
  %v1148 = vadd.f32 0.0, %v1147
  %1149 = vmatmul.f32.gmra.mxu0 %v643
  %v1150 = vpop.f32.mrf.mxu0
  %v1151 = vadd.f32 0.0, %v1150
  %1152 = vmatmul.f32.gmra.mxu0 %v646
  %v1153 = vpop.f32.mrf.mxu0
  %v1154 = vadd.f32 0.0, %v1153
  %1155 = vmatmul.f32.gmra.mxu0 %v649
  %v1156 = vpop.f32.mrf.mxu0
  %v1157 = vadd.f32 0.0, %v1156
  %1158 = vmatmul.f32.gmra.mxu0 %v652
  %v1159 = vpop.f32.mrf.mxu0
  %v1160 = vadd.f32 0.0, %v1159
  %1161 = vmatmul.f32.gmra.mxu0 %v655
  %v1162 = vpop.f32.mrf.mxu0
  %v1163 = vadd.f32 0.0, %v1162
  %1164 = vmatmul.f32.gmra.mxu0 %v658
  %v1165 = vpop.f32.mrf.mxu0
  %v1166 = vadd.f32 0.0, %v1165
  %1167 = vmatmul.f32.gmra.mxu0 %v661
  %v1168 = vpop.f32.mrf.mxu0
  %v1169 = vadd.f32 0.0, %v1168
  %1170 = vdwg.mxu0
  %v1172 = vsel %vm254, %v1023, 0
  %v1175 = vsel %vm254, %v1024, 0
  %v1178 = vsel %vm254, %v1025, 0
  %v1181 = vsel %vm254, %v1026, 0
  %v1184 = vsel %vm254, %v1027, 0
  %v1187 = vsel %vm254, %v1028, 0
  %v1190 = vsel %vm254, %v1029, 0
  %v1193 = vsel %vm254, %v1030, 0
  %v1196 = vsel %vm254, %v1031, 0
  %v1199 = vsel %vm254, %v1032, 0
  %v1202 = vsel %vm254, %v1033, 0
  %v1205 = vsel %vm254, %v1034, 0
  %v1208 = vsel %vm254, %v1035, 0
  %v1211 = vsel %vm254, %v1036, 0
  %v1214 = vsel %vm254, %v1037, 0
  %v1217 = vsel %vm254, %v1038, 0
  %v1220 = vsel %vm254, %v1039, 0
  %v1223 = vsel %vm254, %v1040, 0
  %v1226 = vsel %vm254, %v1041, 0
  %v1229 = vsel %vm254, %v1042, 0
  %v1232 = vsel %vm254, %v1043, 0
  %v1235 = vsel %vm254, %v1044, 0
  %v1238 = vsel %vm254, %v1045, 0
  %v1241 = vsel %vm254, %v1046, 0
  %v1244 = vsel %vm254, %v1047, 0
  %v1247 = vsel %vm254, %v1048, 0
  %v1250 = vsel %vm254, %v1049, 0
  %v1253 = vsel %vm254, %v1050, 0
  %v1256 = vsel %vm254, %v1051, 0
  %v1259 = vsel %vm254, %v1052, 0
  %v1262 = vsel %vm254, %v1053, 0
  %v1265 = vsel %vm254, %v1054, 0
  %1267 = vmatpush.msra.mxu0 0.0
  %1268 = vmatpush.msra.mxu0 0.0
  %1269 = vmatpush.msra.mxu0 0.0
  %1270 = vmatpush.msra.mxu0 0.0
  %1271 = vmatpush.msra.mxu0 0.0
  %1272 = vmatpush.msra.mxu0 0.0
  %1273 = vmatpush.msra.mxu0 0.0
  %1274 = vmatpush.msra.mxu0 0.0
  %1275 = vmatpush.msra.mxu0 0.0
  %1276 = vmatpush.msra.mxu0 0.0
  %1277 = vmatpush.msra.mxu0 0.0
  %1278 = vmatpush.msra.mxu0 0.0
  %1279 = vmatpush.msra.mxu0 %v154
  %1280 = vmatpush.msra.mxu0 %v153
  %1281 = vmatpush.msra.mxu0 %v152
  %1282 = vmatpush.msra.mxu0 %v151
  %1283 = vmatmul.f32.gmra.mxu0 %v1172
  %v1284 = vpop.f32.mrf.mxu0
  %v1285 = vadd.f32 %v1076, %v1284
  %1286 = vmatmul.f32.gmra.mxu0 %v1175
  %v1287 = vpop.f32.mrf.mxu0
  %v1288 = vadd.f32 %v1079, %v1287
  %1289 = vmatmul.f32.gmra.mxu0 %v1178
  %v1290 = vpop.f32.mrf.mxu0
  %v1291 = vadd.f32 %v1082, %v1290
  %1292 = vmatmul.f32.gmra.mxu0 %v1181
  %v1293 = vpop.f32.mrf.mxu0
  %v1294 = vadd.f32 %v1085, %v1293
  %1295 = vmatmul.f32.gmra.mxu0 %v1184
  %v1296 = vpop.f32.mrf.mxu0
  %v1297 = vadd.f32 %v1088, %v1296
  %1298 = vmatmul.f32.gmra.mxu0 %v1187
  %v1299 = vpop.f32.mrf.mxu0
  %v1300 = vadd.f32 %v1091, %v1299
  %1301 = vmatmul.f32.gmra.mxu0 %v1190
  %v1302 = vpop.f32.mrf.mxu0
  %v1303 = vadd.f32 %v1094, %v1302
  %1304 = vmatmul.f32.gmra.mxu0 %v1193
  %v1305 = vpop.f32.mrf.mxu0
  %v1306 = vadd.f32 %v1097, %v1305
  %1307 = vmatmul.f32.gmra.mxu0 %v1196
  %v1308 = vpop.f32.mrf.mxu0
  %v1309 = vadd.f32 %v1100, %v1308
  %1310 = vmatmul.f32.gmra.mxu0 %v1199
  %v1311 = vpop.f32.mrf.mxu0
  %v1312 = vadd.f32 %v1103, %v1311
  %1313 = vmatmul.f32.gmra.mxu0 %v1202
  %v1314 = vpop.f32.mrf.mxu0
  %v1315 = vadd.f32 %v1106, %v1314
  %1316 = vmatmul.f32.gmra.mxu0 %v1205
  %v1317 = vpop.f32.mrf.mxu0
  %v1318 = vadd.f32 %v1109, %v1317
  %1319 = vmatmul.f32.gmra.mxu0 %v1208
  %v1320 = vpop.f32.mrf.mxu0
  %v1321 = vadd.f32 %v1112, %v1320
  %1322 = vmatmul.f32.gmra.mxu0 %v1211
  %v1323 = vpop.f32.mrf.mxu0
  %v1324 = vadd.f32 %v1115, %v1323
  %1325 = vmatmul.f32.gmra.mxu0 %v1214
  %v1326 = vpop.f32.mrf.mxu0
  %v1327 = vadd.f32 %v1118, %v1326
  %1328 = vmatmul.f32.gmra.mxu0 %v1217
  %v1329 = vpop.f32.mrf.mxu0
  %v1330 = vadd.f32 %v1121, %v1329
  %1331 = vmatmul.f32.gmra.mxu0 %v1220
  %v1332 = vpop.f32.mrf.mxu0
  %v1333 = vadd.f32 %v1124, %v1332
  %1334 = vmatmul.f32.gmra.mxu0 %v1223
  %v1335 = vpop.f32.mrf.mxu0
  %v1336 = vadd.f32 %v1127, %v1335
  %1337 = vmatmul.f32.gmra.mxu0 %v1226
  %v1338 = vpop.f32.mrf.mxu0
  %v1339 = vadd.f32 %v1130, %v1338
  %1340 = vmatmul.f32.gmra.mxu0 %v1229
  %v1341 = vpop.f32.mrf.mxu0
  %v1342 = vadd.f32 %v1133, %v1341
  %1343 = vmatmul.f32.gmra.mxu0 %v1232
  %v1344 = vpop.f32.mrf.mxu0
  %v1345 = vadd.f32 %v1136, %v1344
  %1346 = vmatmul.f32.gmra.mxu0 %v1235
  %v1347 = vpop.f32.mrf.mxu0
  %v1348 = vadd.f32 %v1139, %v1347
  %1349 = vmatmul.f32.gmra.mxu0 %v1238
  %v1350 = vpop.f32.mrf.mxu0
  %v1351 = vadd.f32 %v1142, %v1350
  %1352 = vmatmul.f32.gmra.mxu0 %v1241
  %v1353 = vpop.f32.mrf.mxu0
  %v1354 = vadd.f32 %v1145, %v1353
  %1355 = vmatmul.f32.gmra.mxu0 %v1244
  %v1356 = vpop.f32.mrf.mxu0
  %v1357 = vadd.f32 %v1148, %v1356
  %1358 = vmatmul.f32.gmra.mxu0 %v1247
  %v1359 = vpop.f32.mrf.mxu0
  %v1360 = vadd.f32 %v1151, %v1359
  %1361 = vmatmul.f32.gmra.mxu0 %v1250
  %v1362 = vpop.f32.mrf.mxu0
  %v1363 = vadd.f32 %v1154, %v1362
  %1364 = vmatmul.f32.gmra.mxu0 %v1253
  %v1365 = vpop.f32.mrf.mxu0
  %v1366 = vadd.f32 %v1157, %v1365
  %1367 = vmatmul.f32.gmra.mxu0 %v1256
  %v1368 = vpop.f32.mrf.mxu0
  %v1369 = vadd.f32 %v1160, %v1368
  %1370 = vmatmul.f32.gmra.mxu0 %v1259
  %v1371 = vpop.f32.mrf.mxu0
  %v1372 = vadd.f32 %v1163, %v1371
  %1373 = vmatmul.f32.gmra.mxu0 %v1262
  %v1374 = vpop.f32.mrf.mxu0
  %v1375 = vadd.f32 %v1166, %v1374
  %1376 = vmatmul.f32.gmra.mxu0 %v1265
  %v1377 = vpop.f32.mrf.mxu0
  %v1378 = vadd.f32 %v1169, %v1377
  %1379 = vdwg.mxu0
  %v1381 = vperm.slane %v156, 0
  %v1383 = vadd.f32 %v1285, %v1381
  %v1384 = vadd.f32 %v1288, %v1381
  %v1385 = vadd.f32 %v1291, %v1381
  %v1386 = vadd.f32 %v1294, %v1381
  %v1387 = vadd.f32 %v1297, %v1381
  %v1388 = vadd.f32 %v1300, %v1381
  %v1389 = vadd.f32 %v1303, %v1381
  %v1390 = vadd.f32 %v1306, %v1381
  %v1391 = vadd.f32 %v1309, %v1381
  %v1392 = vadd.f32 %v1312, %v1381
  %v1393 = vadd.f32 %v1315, %v1381
  %v1394 = vadd.f32 %v1318, %v1381
  %v1395 = vadd.f32 %v1321, %v1381
  %v1396 = vadd.f32 %v1324, %v1381
  %v1397 = vadd.f32 %v1327, %v1381
  %v1398 = vadd.f32 %v1330, %v1381
  %v1399 = vadd.f32 %v1333, %v1381
  %v1400 = vadd.f32 %v1336, %v1381
  %v1401 = vadd.f32 %v1339, %v1381
  %v1402 = vadd.f32 %v1342, %v1381
  %v1403 = vadd.f32 %v1345, %v1381
  %v1404 = vadd.f32 %v1348, %v1381
  %v1405 = vadd.f32 %v1351, %v1381
  %v1406 = vadd.f32 %v1354, %v1381
  %v1407 = vadd.f32 %v1357, %v1381
  %v1408 = vadd.f32 %v1360, %v1381
  %v1409 = vadd.f32 %v1363, %v1381
  %v1410 = vadd.f32 %v1366, %v1381
  %v1411 = vadd.f32 %v1369, %v1381
  %v1412 = vadd.f32 %v1372, %v1381
  %v1413 = vadd.f32 %v1375, %v1381
  %v1414 = vadd.f32 %v1378, %v1381
  %v1415 = vmax.f32 %v1383, 0.0
  %v1416 = vmax.f32 %v1384, 0.0
  %v1417 = vmax.f32 %v1385, 0.0
  %v1418 = vmax.f32 %v1386, 0.0
  %v1419 = vmax.f32 %v1387, 0.0
  %v1420 = vmax.f32 %v1388, 0.0
  %v1421 = vmax.f32 %v1389, 0.0
  %v1422 = vmax.f32 %v1390, 0.0
  %v1423 = vmax.f32 %v1391, 0.0
  %v1424 = vmax.f32 %v1392, 0.0
  %v1425 = vmax.f32 %v1393, 0.0
  %v1426 = vmax.f32 %v1394, 0.0
  %v1427 = vmax.f32 %v1395, 0.0
  %v1428 = vmax.f32 %v1396, 0.0
  %v1429 = vmax.f32 %v1397, 0.0
  %v1430 = vmax.f32 %v1398, 0.0
  %v1431 = vmax.f32 %v1399, 0.0
  %v1432 = vmax.f32 %v1400, 0.0
  %v1433 = vmax.f32 %v1401, 0.0
  %v1434 = vmax.f32 %v1402, 0.0
  %v1435 = vmax.f32 %v1403, 0.0
  %v1436 = vmax.f32 %v1404, 0.0
  %v1437 = vmax.f32 %v1405, 0.0
  %v1438 = vmax.f32 %v1406, 0.0
  %v1439 = vmax.f32 %v1407, 0.0
  %v1440 = vmax.f32 %v1408, 0.0
  %v1441 = vmax.f32 %v1409, 0.0
  %v1442 = vmax.f32 %v1410, 0.0
  %v1443 = vmax.f32 %v1411, 0.0
  %v1444 = vmax.f32 %v1412, 0.0
  %v1445 = vmax.f32 %v1413, 0.0
  %v1446 = vmax.f32 %v1414, 0.0
  %v1448 = vperm.slane %v161, 0
  %v1451 = vsel %vm254, %v1415, 0
  %v1454 = vsel %vm254, %v1416, 0
  %v1457 = vsel %vm254, %v1417, 0
  %v1460 = vsel %vm254, %v1418, 0
  %v1463 = vsel %vm254, %v1419, 0
  %v1466 = vsel %vm254, %v1420, 0
  %v1469 = vsel %vm254, %v1421, 0
  %v1472 = vsel %vm254, %v1422, 0
  %v1475 = vsel %vm254, %v1423, 0
  %v1478 = vsel %vm254, %v1424, 0
  %v1481 = vsel %vm254, %v1425, 0
  %v1484 = vsel %vm254, %v1426, 0
  %v1487 = vsel %vm254, %v1427, 0
  %v1490 = vsel %vm254, %v1428, 0
  %v1493 = vsel %vm254, %v1429, 0
  %v1496 = vsel %vm254, %v1430, 0
  %v1499 = vsel %vm254, %v1431, 0
  %v1502 = vsel %vm254, %v1432, 0
  %v1505 = vsel %vm254, %v1433, 0
  %v1508 = vsel %vm254, %v1434, 0
  %v1511 = vsel %vm254, %v1435, 0
  %v1514 = vsel %vm254, %v1436, 0
  %v1517 = vsel %vm254, %v1437, 0
  %v1520 = vsel %vm254, %v1438, 0
  %v1523 = vsel %vm254, %v1439, 0
  %v1526 = vsel %vm254, %v1440, 0
  %v1529 = vsel %vm254, %v1441, 0
  %v1532 = vsel %vm254, %v1442, 0
  %v1535 = vsel %vm254, %v1443, 0
  %v1538 = vsel %vm254, %v1444, 0
  %v1541 = vsel %vm254, %v1445, 0
  %v1544 = vsel %vm254, %v1446, 0
  %1546 = vmatpush.msra.mxu0 0.0
  %1547 = vmatpush.msra.mxu0 0.0
  %1548 = vmatpush.msra.mxu0 0.0
  %1549 = vmatpush.msra.mxu0 0.0
  %1550 = vmatpush.msra.mxu0 0.0
  %1551 = vmatpush.msra.mxu0 0.0
  %1552 = vmatpush.msra.mxu0 0.0
  %1553 = vmatpush.msra.mxu0 0.0
  %1554 = vmatpush.msra.mxu0 0.0
  %1555 = vmatpush.msra.mxu0 0.0
  %1556 = vmatpush.msra.mxu0 0.0
  %1557 = vmatpush.msra.mxu0 0.0
  %1558 = vmatpush.msra.mxu0 %v160
  %1559 = vmatpush.msra.mxu0 %v159
  %1560 = vmatpush.msra.mxu0 %v158
  %1561 = vmatpush.msra.mxu0 %v157
  %1562 = vmatmul.f32.gmra.mxu0 %v1451
  %v1563 = vpop.f32.mrf.mxu0
  %v1564 = vadd.f32 %v1448, %v1563
  %1565 = vmatmul.f32.gmra.mxu0 %v1454
  %v1566 = vpop.f32.mrf.mxu0
  %v1567 = vadd.f32 %v1448, %v1566
  %1568 = vmatmul.f32.gmra.mxu0 %v1457
  %v1569 = vpop.f32.mrf.mxu0
  %v1570 = vadd.f32 %v1448, %v1569
  %1571 = vmatmul.f32.gmra.mxu0 %v1460
  %v1572 = vpop.f32.mrf.mxu0
  %v1573 = vadd.f32 %v1448, %v1572
  %1574 = vmatmul.f32.gmra.mxu0 %v1463
  %v1575 = vpop.f32.mrf.mxu0
  %v1576 = vadd.f32 %v1448, %v1575
  %1577 = vmatmul.f32.gmra.mxu0 %v1466
  %v1578 = vpop.f32.mrf.mxu0
  %v1579 = vadd.f32 %v1448, %v1578
  %1580 = vmatmul.f32.gmra.mxu0 %v1469
  %v1581 = vpop.f32.mrf.mxu0
  %v1582 = vadd.f32 %v1448, %v1581
  %1583 = vmatmul.f32.gmra.mxu0 %v1472
  %v1584 = vpop.f32.mrf.mxu0
  %v1585 = vadd.f32 %v1448, %v1584
  %1586 = vmatmul.f32.gmra.mxu0 %v1475
  %v1587 = vpop.f32.mrf.mxu0
  %v1588 = vadd.f32 %v1448, %v1587
  %1589 = vmatmul.f32.gmra.mxu0 %v1478
  %v1590 = vpop.f32.mrf.mxu0
  %v1591 = vadd.f32 %v1448, %v1590
  %1592 = vmatmul.f32.gmra.mxu0 %v1481
  %v1593 = vpop.f32.mrf.mxu0
  %v1594 = vadd.f32 %v1448, %v1593
  %1595 = vmatmul.f32.gmra.mxu0 %v1484
  %v1596 = vpop.f32.mrf.mxu0
  %v1597 = vadd.f32 %v1448, %v1596
  %1598 = vmatmul.f32.gmra.mxu0 %v1487
  %v1599 = vpop.f32.mrf.mxu0
  %v1600 = vadd.f32 %v1448, %v1599
  %1601 = vmatmul.f32.gmra.mxu0 %v1490
  %v1602 = vpop.f32.mrf.mxu0
  %v1603 = vadd.f32 %v1448, %v1602
  %1604 = vmatmul.f32.gmra.mxu0 %v1493
  %v1605 = vpop.f32.mrf.mxu0
  %v1606 = vadd.f32 %v1448, %v1605
  %1607 = vmatmul.f32.gmra.mxu0 %v1496
  %v1608 = vpop.f32.mrf.mxu0
  %v1609 = vadd.f32 %v1448, %v1608
  %1610 = vmatmul.f32.gmra.mxu0 %v1499
  %v1611 = vpop.f32.mrf.mxu0
  %v1612 = vadd.f32 %v1448, %v1611
  %1613 = vmatmul.f32.gmra.mxu0 %v1502
  %v1614 = vpop.f32.mrf.mxu0
  %v1615 = vadd.f32 %v1448, %v1614
  %1616 = vmatmul.f32.gmra.mxu0 %v1505
  %v1617 = vpop.f32.mrf.mxu0
  %v1618 = vadd.f32 %v1448, %v1617
  %1619 = vmatmul.f32.gmra.mxu0 %v1508
  %v1620 = vpop.f32.mrf.mxu0
  %v1621 = vadd.f32 %v1448, %v1620
  %1622 = vmatmul.f32.gmra.mxu0 %v1511
  %v1623 = vpop.f32.mrf.mxu0
  %v1624 = vadd.f32 %v1448, %v1623
  %1625 = vmatmul.f32.gmra.mxu0 %v1514
  %v1626 = vpop.f32.mrf.mxu0
  %v1627 = vadd.f32 %v1448, %v1626
  %1628 = vmatmul.f32.gmra.mxu0 %v1517
  %v1629 = vpop.f32.mrf.mxu0
  %v1630 = vadd.f32 %v1448, %v1629
  %1631 = vmatmul.f32.gmra.mxu0 %v1520
  %v1632 = vpop.f32.mrf.mxu0
  %v1633 = vadd.f32 %v1448, %v1632
  %1634 = vmatmul.f32.gmra.mxu0 %v1523
  %v1635 = vpop.f32.mrf.mxu0
  %v1636 = vadd.f32 %v1448, %v1635
  %1637 = vmatmul.f32.gmra.mxu0 %v1526
  %v1638 = vpop.f32.mrf.mxu0
  %v1639 = vadd.f32 %v1448, %v1638
  %1640 = vmatmul.f32.gmra.mxu0 %v1529
  %v1641 = vpop.f32.mrf.mxu0
  %v1642 = vadd.f32 %v1448, %v1641
  %1643 = vmatmul.f32.gmra.mxu0 %v1532
  %v1644 = vpop.f32.mrf.mxu0
  %v1645 = vadd.f32 %v1448, %v1644
  %1646 = vmatmul.f32.gmra.mxu0 %v1535
  %v1647 = vpop.f32.mrf.mxu0
  %v1648 = vadd.f32 %v1448, %v1647
  %1649 = vmatmul.f32.gmra.mxu0 %v1538
  %v1650 = vpop.f32.mrf.mxu0
  %v1651 = vadd.f32 %v1448, %v1650
  %1652 = vmatmul.f32.gmra.mxu0 %v1541
  %v1653 = vpop.f32.mrf.mxu0
  %v1654 = vadd.f32 %v1448, %v1653
  %1655 = vmatmul.f32.gmra.mxu0 %v1544
  %v1656 = vpop.f32.mrf.mxu0
  %v1657 = vadd.f32 %v1448, %v1656
  %1658 = vdwg.mxu0
  %v1659 = vmax.f32 %v1564, 0.0
  %v1660 = vmax.f32 %v1567, 0.0
  %v1661 = vmax.f32 %v1570, 0.0
  %v1662 = vmax.f32 %v1573, 0.0
  %v1663 = vmax.f32 %v1576, 0.0
  %v1664 = vmax.f32 %v1579, 0.0
  %v1665 = vmax.f32 %v1582, 0.0
  %v1666 = vmax.f32 %v1585, 0.0
  %v1667 = vmax.f32 %v1588, 0.0
  %v1668 = vmax.f32 %v1591, 0.0
  %v1669 = vmax.f32 %v1594, 0.0
  %v1670 = vmax.f32 %v1597, 0.0
  %v1671 = vmax.f32 %v1600, 0.0
  %v1672 = vmax.f32 %v1603, 0.0
  %v1673 = vmax.f32 %v1606, 0.0
  %v1674 = vmax.f32 %v1609, 0.0
  %v1675 = vmax.f32 %v1612, 0.0
  %v1676 = vmax.f32 %v1615, 0.0
  %v1677 = vmax.f32 %v1618, 0.0
  %v1678 = vmax.f32 %v1621, 0.0
  %v1679 = vmax.f32 %v1624, 0.0
  %v1680 = vmax.f32 %v1627, 0.0
  %v1681 = vmax.f32 %v1630, 0.0
  %v1682 = vmax.f32 %v1633, 0.0
  %v1683 = vmax.f32 %v1636, 0.0
  %v1684 = vmax.f32 %v1639, 0.0
  %v1685 = vmax.f32 %v1642, 0.0
  %v1686 = vmax.f32 %v1645, 0.0
  %v1687 = vmax.f32 %v1648, 0.0
  %v1688 = vmax.f32 %v1651, 0.0
  %v1689 = vmax.f32 %v1654, 0.0
  %v1690 = vmax.f32 %v1657, 0.0
  %v1691 = vld [vmem:[%s51] sm:$0x1]
  %v1692 = vld [vmem:[%s47] sm:$0xff]
  %v1693 = vld [vmem:[%s47 + $0x8] sm:$0xff]
  %v1694 = vld [vmem:[%s47 + $0x10] sm:$0xff]
  %v1695 = vld [vmem:[%s47 + $0x18] sm:$0xff]
  %v1697 = vsel %vm254, %v524, 0
  %v1700 = vsel %vm254, %v525, 0
  %v1703 = vsel %vm254, %v526, 0
  %v1706 = vsel %vm254, %v527, 0
  %v1709 = vsel %vm254, %v528, 0
  %v1712 = vsel %vm254, %v529, 0
  %v1715 = vsel %vm254, %v530, 0
  %v1718 = vsel %vm254, %v531, 0
  %1720 = vmatpush.msra.mxu0 0.0
  %1721 = vmatpush.msra.mxu0 0.0
  %1722 = vmatpush.msra.mxu0 0.0
  %1723 = vmatpush.msra.mxu0 0.0
  %1724 = vmatpush.msra.mxu0 0.0
  %1725 = vmatpush.msra.mxu0 0.0
  %1726 = vmatpush.msra.mxu0 0.0
  %1727 = vmatpush.msra.mxu0 0.0
  %1728 = vmatpush.msra.mxu0 0.0
  %1729 = vmatpush.msra.mxu0 0.0
  %1730 = vmatpush.msra.mxu0 0.0
  %1731 = vmatpush.msra.mxu0 0.0
  %1732 = vmatpush.msra.mxu0 %v1695
  %1733 = vmatpush.msra.mxu0 %v1694
  %1734 = vmatpush.msra.mxu0 %v1693
  %1735 = vmatpush.msra.mxu0 %v1692
  %1736 = vmatmul.f32.gmra.mxu0 %v1697
  %v1737 = vpop.f32.mrf.mxu0
  %v1738 = vadd.f32 0.0, %v1737
  %1739 = vmatmul.f32.gmra.mxu0 %v1700
  %v1740 = vpop.f32.mrf.mxu0
  %v1741 = vadd.f32 0.0, %v1740
  %1742 = vmatmul.f32.gmra.mxu0 %v1703
  %v1743 = vpop.f32.mrf.mxu0
  %v1744 = vadd.f32 0.0, %v1743
  %1745 = vmatmul.f32.gmra.mxu0 %v1706
  %v1746 = vpop.f32.mrf.mxu0
  %v1747 = vadd.f32 0.0, %v1746
  %1748 = vmatmul.f32.gmra.mxu0 %v1709
  %v1749 = vpop.f32.mrf.mxu0
  %v1750 = vadd.f32 0.0, %v1749
  %1751 = vmatmul.f32.gmra.mxu0 %v1712
  %v1752 = vpop.f32.mrf.mxu0
  %v1753 = vadd.f32 0.0, %v1752
  %1754 = vmatmul.f32.gmra.mxu0 %v1715
  %v1755 = vpop.f32.mrf.mxu0
  %v1756 = vadd.f32 0.0, %v1755
  %1757 = vmatmul.f32.gmra.mxu0 %v1718
  %v1758 = vpop.f32.mrf.mxu0
  %v1759 = vadd.f32 0.0, %v1758
  %1760 = vdwg.mxu0
  %v1762 = vperm.slane %v1691, 0
  %v1764 = vadd.f32 %v1762, %v1738
  %v1765 = vadd.f32 %v1762, %v1741
  %v1766 = vadd.f32 %v1762, %v1744
  %v1767 = vadd.f32 %v1762, %v1747
  %v1768 = vadd.f32 %v1762, %v1750
  %v1769 = vadd.f32 %v1762, %v1753
  %v1770 = vadd.f32 %v1762, %v1756
  %v1771 = vadd.f32 %v1762, %v1759
  %v1772 = vld [vmem:[%s3] sm:$0xff]
  %v1773 = vld [vmem:[%s3 + $0x8] sm:$0xff]
  %v1774 = vld [vmem:[%s3 + $0x10] sm:$0xff]
  %v1775 = vld [vmem:[%s3 + $0x18] sm:$0xff]
  %v1776 = vld [vmem:[%s3 + $0x20] sm:$0xff]
  %v1777 = vld [vmem:[%s3 + $0x28] sm:$0xff]
  %v1778 = vld [vmem:[%s3 + $0x30] sm:$0xff]
  %v1779 = vld [vmem:[%s3 + $0x38] sm:$0xff]
  %v1780 = vld [vmem:[%s3 + $0x40] sm:$0xff]
  %v1781 = vld [vmem:[%s3 + $0x48] sm:$0xff]
  %v1782 = vld [vmem:[%s3 + $0x50] sm:$0xff]
  %v1783 = vld [vmem:[%s3 + $0x58] sm:$0xff]
  %v1784 = vld [vmem:[%s3 + $0x60] sm:$0xff]
  %v1785 = vld [vmem:[%s3 + $0x68] sm:$0xff]
  %v1786 = vld [vmem:[%s3 + $0x70] sm:$0xff]
  %v1787 = vld [vmem:[%s3 + $0x78] sm:$0xff]
  %v1788 = vld [vmem:[%s1] sm:$0xff]
  %v1789 = vld [vmem:[%s1 + $0x8] sm:$0xff]
  %v1790 = vld [vmem:[%s1 + $0x10] sm:$0xff]
  %v1791 = vld [vmem:[%s1 + $0x18] sm:$0xff]
  %v1792 = vld [vmem:[%s1 + $0x20] sm:$0xff]
  %v1793 = vld [vmem:[%s1 + $0x28] sm:$0xff]
  %v1794 = vld [vmem:[%s1 + $0x30] sm:$0xff]
  %v1795 = vld [vmem:[%s1 + $0x38] sm:$0xff]
  %v1796 = vld [vmem:[%s1 + $0x40] sm:$0xff]
  %v1797 = vld [vmem:[%s1 + $0x48] sm:$0xff]
  %v1798 = vld [vmem:[%s1 + $0x50] sm:$0xff]
  %v1799 = vld [vmem:[%s1 + $0x58] sm:$0xff]
  %v1800 = vld [vmem:[%s1 + $0x60] sm:$0xff]
  %v1801 = vld [vmem:[%s1 + $0x68] sm:$0xff]
  %v1802 = vld [vmem:[%s1 + $0x70] sm:$0xff]
  %v1803 = vld [vmem:[%s1 + $0x78] sm:$0xff]
  %v1804 = vld [vmem:[%s1 + $0x80] sm:$0xff]
  %v1805 = vld [vmem:[%s1 + $0x88] sm:$0xff]
  %v1806 = vld [vmem:[%s1 + $0x90] sm:$0xff]
  %v1807 = vld [vmem:[%s1 + $0x98] sm:$0xff]
  %v1808 = vld [vmem:[%s1 + $0xa0] sm:$0xff]
  %v1809 = vld [vmem:[%s1 + $0xa8] sm:$0xff]
  %v1810 = vld [vmem:[%s1 + $0xb0] sm:$0xff]
  %v1811 = vld [vmem:[%s1 + $0xb8] sm:$0xff]
  %v1812 = vld [vmem:[%s1 + $0xc0] sm:$0xff]
  %v1813 = vld [vmem:[%s1 + $0xc8] sm:$0xff]
  %v1814 = vld [vmem:[%s1 + $0xd0] sm:$0xff]
  %v1815 = vld [vmem:[%s1 + $0xd8] sm:$0xff]
  %v1816 = vld [vmem:[%s1 + $0xe0] sm:$0xff]
  %v1817 = vld [vmem:[%s1 + $0xe8] sm:$0xff]
  %v1818 = vld [vmem:[%s1 + $0xf0] sm:$0xff]
  %v1819 = vld [vmem:[%s1 + $0xf8] sm:$0xff]
  %1820 = vmatpush.msra.mxu0 %v1803
  %1821 = vmatpush.msra.mxu0 %v1802
  %1822 = vmatpush.msra.mxu0 %v1801
  %1823 = vmatpush.msra.mxu0 %v1800
  %1824 = vmatpush.msra.mxu0 %v1799
  %1825 = vmatpush.msra.mxu0 %v1798
  %1826 = vmatpush.msra.mxu0 %v1797
  %1827 = vmatpush.msra.mxu0 %v1796
  %1828 = vmatpush.msra.mxu0 %v1795
  %1829 = vmatpush.msra.mxu0 %v1794
  %1830 = vmatpush.msra.mxu0 %v1793
  %1831 = vmatpush.msra.mxu0 %v1792
  %1832 = vmatpush.msra.mxu0 %v1791
  %1833 = vmatpush.msra.mxu0 %v1790
  %1834 = vmatpush.msra.mxu0 %v1789
  %1835 = vmatpush.msra.mxu0 %v1788
  %1836 = vmatmul.f32.gmra.mxu0 %v1772
  %v1837 = vpop.f32.mrf.mxu0
  %v1838 = vadd.f32 0.0, %v1837
  %1839 = vmatmul.f32.gmra.mxu0 %v1774
  %v1840 = vpop.f32.mrf.mxu0
  %v1841 = vadd.f32 0.0, %v1840
  %1842 = vmatmul.f32.gmra.mxu0 %v1776
  %v1843 = vpop.f32.mrf.mxu0
  %v1844 = vadd.f32 0.0, %v1843
  %1845 = vmatmul.f32.gmra.mxu0 %v1778
  %v1846 = vpop.f32.mrf.mxu0
  %v1847 = vadd.f32 0.0, %v1846
  %1848 = vmatmul.f32.gmra.mxu0 %v1780
  %v1849 = vpop.f32.mrf.mxu0
  %v1850 = vadd.f32 0.0, %v1849
  %1851 = vmatmul.f32.gmra.mxu0 %v1782
  %v1852 = vpop.f32.mrf.mxu0
  %v1853 = vadd.f32 0.0, %v1852
  %1854 = vmatmul.f32.gmra.mxu0 %v1784
  %v1855 = vpop.f32.mrf.mxu0
  %v1856 = vadd.f32 0.0, %v1855
  %1857 = vmatmul.f32.gmra.mxu0 %v1786
  %v1858 = vpop.f32.mrf.mxu0
  %v1859 = vadd.f32 0.0, %v1858
  %1860 = vdwg.mxu0
  %1861 = vmatpush.msra.mxu0 %v1819
  %1862 = vmatpush.msra.mxu0 %v1818
  %1863 = vmatpush.msra.mxu0 %v1817
  %1864 = vmatpush.msra.mxu0 %v1816
  %1865 = vmatpush.msra.mxu0 %v1815
  %1866 = vmatpush.msra.mxu0 %v1814
  %1867 = vmatpush.msra.mxu0 %v1813
  %1868 = vmatpush.msra.mxu0 %v1812
  %1869 = vmatpush.msra.mxu0 %v1811
  %1870 = vmatpush.msra.mxu0 %v1810
  %1871 = vmatpush.msra.mxu0 %v1809
  %1872 = vmatpush.msra.mxu0 %v1808
  %1873 = vmatpush.msra.mxu0 %v1807
  %1874 = vmatpush.msra.mxu0 %v1806
  %1875 = vmatpush.msra.mxu0 %v1805
  %1876 = vmatpush.msra.mxu0 %v1804
  %1877 = vmatmul.f32.gmra.mxu0 %v1773
  %v1878 = vpop.f32.mrf.mxu0
  %v1879 = vadd.f32 %v1838, %v1878
  %1880 = vmatmul.f32.gmra.mxu0 %v1775
  %v1881 = vpop.f32.mrf.mxu0
  %v1882 = vadd.f32 %v1841, %v1881
  %1883 = vmatmul.f32.gmra.mxu0 %v1777
  %v1884 = vpop.f32.mrf.mxu0
  %v1885 = vadd.f32 %v1844, %v1884
  %1886 = vmatmul.f32.gmra.mxu0 %v1779
  %v1887 = vpop.f32.mrf.mxu0
  %v1888 = vadd.f32 %v1847, %v1887
  %1889 = vmatmul.f32.gmra.mxu0 %v1781
  %v1890 = vpop.f32.mrf.mxu0
  %v1891 = vadd.f32 %v1850, %v1890
  %1892 = vmatmul.f32.gmra.mxu0 %v1783
  %v1893 = vpop.f32.mrf.mxu0
  %v1894 = vadd.f32 %v1853, %v1893
  %1895 = vmatmul.f32.gmra.mxu0 %v1785
  %v1896 = vpop.f32.mrf.mxu0
  %v1897 = vadd.f32 %v1856, %v1896
  %1898 = vmatmul.f32.gmra.mxu0 %v1787
  %v1899 = vpop.f32.mrf.mxu0
  %v1900 = vadd.f32 %v1859, %v1899
  %1901 = vdwg.mxu0
  %v1902 = vld [vmem:[%s45] sm:$0xff]
  %v1903 = vld [vmem:[%s45 + $0x8] sm:$0xff]
  %v1904 = vld [vmem:[%s45 + $0x10] sm:$0xff]
  %v1905 = vld [vmem:[%s45 + $0x18] sm:$0xff]
  %v1906 = vld [vmem:[%s45 + $0x20] sm:$0xff]
  %v1907 = vld [vmem:[%s45 + $0x28] sm:$0xff]
  %v1908 = vld [vmem:[%s45 + $0x30] sm:$0xff]
  %v1909 = vld [vmem:[%s45 + $0x38] sm:$0xff]
  %v1910 = vld [vmem:[%s45 + $0x40] sm:$0xff]
  %v1911 = vld [vmem:[%s45 + $0x48] sm:$0xff]
  %v1912 = vld [vmem:[%s45 + $0x50] sm:$0xff]
  %v1913 = vld [vmem:[%s45 + $0x58] sm:$0xff]
  %v1914 = vld [vmem:[%s45 + $0x60] sm:$0xff]
  %v1915 = vld [vmem:[%s45 + $0x68] sm:$0xff]
  %v1916 = vld [vmem:[%s45 + $0x70] sm:$0xff]
  %v1917 = vld [vmem:[%s45 + $0x78] sm:$0xff]
  %1918 = vmatpush.msra.mxu0 %v1917
  %1919 = vmatpush.msra.mxu0 %v1916
  %1920 = vmatpush.msra.mxu0 %v1915
  %1921 = vmatpush.msra.mxu0 %v1914
  %1922 = vmatpush.msra.mxu0 %v1913
  %1923 = vmatpush.msra.mxu0 %v1912
  %1924 = vmatpush.msra.mxu0 %v1911
  %1925 = vmatpush.msra.mxu0 %v1910
  %1926 = vmatpush.msra.mxu0 %v1909
  %1927 = vmatpush.msra.mxu0 %v1908
  %1928 = vmatpush.msra.mxu0 %v1907
  %1929 = vmatpush.msra.mxu0 %v1906
  %1930 = vmatpush.msra.mxu0 %v1905
  %1931 = vmatpush.msra.mxu0 %v1904
  %1932 = vmatpush.msra.mxu0 %v1903
  %1933 = vmatpush.msra.mxu0 %v1902
  %1934 = vmatmul.f32.gmra.mxu0 %v1879
  %v1935 = vpop.f32.mrf.mxu0
  %v1936 = vadd.f32 0.0, %v1935
  %1937 = vmatmul.f32.gmra.mxu0 %v1882
  %v1938 = vpop.f32.mrf.mxu0
  %v1939 = vadd.f32 0.0, %v1938
  %1940 = vmatmul.f32.gmra.mxu0 %v1885
  %v1941 = vpop.f32.mrf.mxu0
  %v1942 = vadd.f32 0.0, %v1941
  %1943 = vmatmul.f32.gmra.mxu0 %v1888
  %v1944 = vpop.f32.mrf.mxu0
  %v1945 = vadd.f32 0.0, %v1944
  %1946 = vmatmul.f32.gmra.mxu0 %v1891
  %v1947 = vpop.f32.mrf.mxu0
  %v1948 = vadd.f32 0.0, %v1947
  %1949 = vmatmul.f32.gmra.mxu0 %v1894
  %v1950 = vpop.f32.mrf.mxu0
  %v1951 = vadd.f32 0.0, %v1950
  %1952 = vmatmul.f32.gmra.mxu0 %v1897
  %v1953 = vpop.f32.mrf.mxu0
  %v1954 = vadd.f32 0.0, %v1953
  %1955 = vmatmul.f32.gmra.mxu0 %v1900
  %v1956 = vpop.f32.mrf.mxu0
  %v1957 = vadd.f32 0.0, %v1956
  %1958 = vdwg.mxu0
  %v1959 = vadd.f32 %v1764, %v1936
  %v1960 = vadd.f32 %v1765, %v1939
  %v1961 = vadd.f32 %v1766, %v1942
  %v1962 = vadd.f32 %v1767, %v1945
  %v1963 = vadd.f32 %v1768, %v1948
  %v1964 = vadd.f32 %v1769, %v1951
  %v1965 = vadd.f32 %v1770, %v1954
  %v1966 = vadd.f32 %v1771, %v1957
  %v1967 = vld [vmem:[%s49] sm:$0xff]
  %v1968 = vld [vmem:[%s49 + $0x8] sm:$0xff]
  %v1969 = vld [vmem:[%s49 + $0x10] sm:$0xff]
  %v1970 = vld [vmem:[%s49 + $0x18] sm:$0xff]
  %v1972 = vsel %vm254, %v1659, 0
  %v1975 = vsel %vm254, %v1660, 0
  %v1978 = vsel %vm254, %v1661, 0
  %v1981 = vsel %vm254, %v1662, 0
  %v1984 = vsel %vm254, %v1663, 0
  %v1987 = vsel %vm254, %v1664, 0
  %v1990 = vsel %vm254, %v1665, 0
  %v1993 = vsel %vm254, %v1666, 0
  %1995 = vmatpush.msra.mxu0 0.0
  %1996 = vmatpush.msra.mxu0 0.0
  %1997 = vmatpush.msra.mxu0 0.0
  %1998 = vmatpush.msra.mxu0 0.0
  %1999 = vmatpush.msra.mxu0 0.0
  %2000 = vmatpush.msra.mxu0 0.0
  %2001 = vmatpush.msra.mxu0 0.0
  %2002 = vmatpush.msra.mxu0 0.0
  %2003 = vmatpush.msra.mxu0 0.0
  %2004 = vmatpush.msra.mxu0 0.0
  %2005 = vmatpush.msra.mxu0 0.0
  %2006 = vmatpush.msra.mxu0 0.0
  %2007 = vmatpush.msra.mxu0 %v1970
  %2008 = vmatpush.msra.mxu0 %v1969
  %2009 = vmatpush.msra.mxu0 %v1968
  %2010 = vmatpush.msra.mxu0 %v1967
  %2011 = vmatmul.f32.gmra.mxu0 %v1972
  %v2012 = vpop.f32.mrf.mxu0
  %v2013 = vadd.f32 0.0, %v2012
  %2014 = vmatmul.f32.gmra.mxu0 %v1975
  %v2015 = vpop.f32.mrf.mxu0
  %v2016 = vadd.f32 0.0, %v2015
  %2017 = vmatmul.f32.gmra.mxu0 %v1978
  %v2018 = vpop.f32.mrf.mxu0
  %v2019 = vadd.f32 0.0, %v2018
  %2020 = vmatmul.f32.gmra.mxu0 %v1981
  %v2021 = vpop.f32.mrf.mxu0
  %v2022 = vadd.f32 0.0, %v2021
  %2023 = vmatmul.f32.gmra.mxu0 %v1984
  %v2024 = vpop.f32.mrf.mxu0
  %v2025 = vadd.f32 0.0, %v2024
  %2026 = vmatmul.f32.gmra.mxu0 %v1987
  %v2027 = vpop.f32.mrf.mxu0
  %v2028 = vadd.f32 0.0, %v2027
  %2029 = vmatmul.f32.gmra.mxu0 %v1990
  %v2030 = vpop.f32.mrf.mxu0
  %v2031 = vadd.f32 0.0, %v2030
  %2032 = vmatmul.f32.gmra.mxu0 %v1993
  %v2033 = vpop.f32.mrf.mxu0
  %v2034 = vadd.f32 0.0, %v2033
  %2035 = vdwg.mxu0
  %v2036 = vadd.f32 %v1959, %v2013
  %v2037 = vadd.f32 %v1960, %v2016
  %v2038 = vadd.f32 %v1961, %v2019
  %v2039 = vadd.f32 %v1962, %v2022
  %v2040 = vadd.f32 %v1963, %v2025
  %v2041 = vadd.f32 %v1964, %v2028
  %v2042 = vadd.f32 %v1965, %v2031
  %v2043 = vadd.f32 %v1966, %v2034
  %s2044 = scalar_lea.vmem %s3, 128
  %v2045 = vld [vmem:[%s2044] sm:$0xff]
  %v2046 = vld [vmem:[%s2044 + $0x8] sm:$0xff]
  %v2047 = vld [vmem:[%s2044 + $0x10] sm:$0xff]
  %v2048 = vld [vmem:[%s2044 + $0x18] sm:$0xff]
  %v2049 = vld [vmem:[%s2044 + $0x20] sm:$0xff]
  %v2050 = vld [vmem:[%s2044 + $0x28] sm:$0xff]
  %v2051 = vld [vmem:[%s2044 + $0x30] sm:$0xff]
  %v2052 = vld [vmem:[%s2044 + $0x38] sm:$0xff]
  %v2053 = vld [vmem:[%s2044 + $0x40] sm:$0xff]
  %v2054 = vld [vmem:[%s2044 + $0x48] sm:$0xff]
  %v2055 = vld [vmem:[%s2044 + $0x50] sm:$0xff]
  %v2056 = vld [vmem:[%s2044 + $0x58] sm:$0xff]
  %v2057 = vld [vmem:[%s2044 + $0x60] sm:$0xff]
  %v2058 = vld [vmem:[%s2044 + $0x68] sm:$0xff]
  %v2059 = vld [vmem:[%s2044 + $0x70] sm:$0xff]
  %v2060 = vld [vmem:[%s2044 + $0x78] sm:$0xff]
  %s2061 = scalar_lea.vmem %s1, 256
  %v2062 = vld [vmem:[%s2061] sm:$0xff]
  %v2063 = vld [vmem:[%s2061 + $0x8] sm:$0xff]
  %v2064 = vld [vmem:[%s2061 + $0x10] sm:$0xff]
  %v2065 = vld [vmem:[%s2061 + $0x18] sm:$0xff]
  %v2066 = vld [vmem:[%s2061 + $0x20] sm:$0xff]
  %v2067 = vld [vmem:[%s2061 + $0x28] sm:$0xff]
  %v2068 = vld [vmem:[%s2061 + $0x30] sm:$0xff]
  %v2069 = vld [vmem:[%s2061 + $0x38] sm:$0xff]
  %v2070 = vld [vmem:[%s2061 + $0x40] sm:$0xff]
  %v2071 = vld [vmem:[%s2061 + $0x48] sm:$0xff]
  %v2072 = vld [vmem:[%s2061 + $0x50] sm:$0xff]
  %v2073 = vld [vmem:[%s2061 + $0x58] sm:$0xff]
  %v2074 = vld [vmem:[%s2061 + $0x60] sm:$0xff]
  %v2075 = vld [vmem:[%s2061 + $0x68] sm:$0xff]
  %v2076 = vld [vmem:[%s2061 + $0x70] sm:$0xff]
  %v2077 = vld [vmem:[%s2061 + $0x78] sm:$0xff]
  %v2078 = vld [vmem:[%s2061 + $0x80] sm:$0xff]
  %v2079 = vld [vmem:[%s2061 + $0x88] sm:$0xff]
  %v2080 = vld [vmem:[%s2061 + $0x90] sm:$0xff]
  %v2081 = vld [vmem:[%s2061 + $0x98] sm:$0xff]
  %v2082 = vld [vmem:[%s2061 + $0xa0] sm:$0xff]
  %v2083 = vld [vmem:[%s2061 + $0xa8] sm:$0xff]
  %v2084 = vld [vmem:[%s2061 + $0xb0] sm:$0xff]
  %v2085 = vld [vmem:[%s2061 + $0xb8] sm:$0xff]
  %v2086 = vld [vmem:[%s2061 + $0xc0] sm:$0xff]
  %v2087 = vld [vmem:[%s2061 + $0xc8] sm:$0xff]
  %v2088 = vld [vmem:[%s2061 + $0xd0] sm:$0xff]
  %v2089 = vld [vmem:[%s2061 + $0xd8] sm:$0xff]
  %v2090 = vld [vmem:[%s2061 + $0xe0] sm:$0xff]
  %v2091 = vld [vmem:[%s2061 + $0xe8] sm:$0xff]
  %v2092 = vld [vmem:[%s2061 + $0xf0] sm:$0xff]
  %v2093 = vld [vmem:[%s2061 + $0xf8] sm:$0xff]
  %2094 = vmatpush.msra.mxu0 %v2077
  %2095 = vmatpush.msra.mxu0 %v2076
  %2096 = vmatpush.msra.mxu0 %v2075
  %2097 = vmatpush.msra.mxu0 %v2074
  %2098 = vmatpush.msra.mxu0 %v2073
  %2099 = vmatpush.msra.mxu0 %v2072
  %2100 = vmatpush.msra.mxu0 %v2071
  %2101 = vmatpush.msra.mxu0 %v2070
  %2102 = vmatpush.msra.mxu0 %v2069
  %2103 = vmatpush.msra.mxu0 %v2068
  %2104 = vmatpush.msra.mxu0 %v2067
  %2105 = vmatpush.msra.mxu0 %v2066
  %2106 = vmatpush.msra.mxu0 %v2065
  %2107 = vmatpush.msra.mxu0 %v2064
  %2108 = vmatpush.msra.mxu0 %v2063
  %2109 = vmatpush.msra.mxu0 %v2062
  %2110 = vmatmul.f32.gmra.mxu0 %v2045
  %v2111 = vpop.f32.mrf.mxu0
  %v2112 = vadd.f32 0.0, %v2111
  %2113 = vmatmul.f32.gmra.mxu0 %v2047
  %v2114 = vpop.f32.mrf.mxu0
  %v2115 = vadd.f32 0.0, %v2114
  %2116 = vmatmul.f32.gmra.mxu0 %v2049
  %v2117 = vpop.f32.mrf.mxu0
  %v2118 = vadd.f32 0.0, %v2117
  %2119 = vmatmul.f32.gmra.mxu0 %v2051
  %v2120 = vpop.f32.mrf.mxu0
  %v2121 = vadd.f32 0.0, %v2120
  %2122 = vmatmul.f32.gmra.mxu0 %v2053
  %v2123 = vpop.f32.mrf.mxu0
  %v2124 = vadd.f32 0.0, %v2123
  %2125 = vmatmul.f32.gmra.mxu0 %v2055
  %v2126 = vpop.f32.mrf.mxu0
  %v2127 = vadd.f32 0.0, %v2126
  %2128 = vmatmul.f32.gmra.mxu0 %v2057
  %v2129 = vpop.f32.mrf.mxu0
  %v2130 = vadd.f32 0.0, %v2129
  %2131 = vmatmul.f32.gmra.mxu0 %v2059
  %v2132 = vpop.f32.mrf.mxu0
  %v2133 = vadd.f32 0.0, %v2132
  %2134 = vdwg.mxu0
  %2135 = vmatpush.msra.mxu0 %v2093
  %2136 = vmatpush.msra.mxu0 %v2092
  %2137 = vmatpush.msra.mxu0 %v2091
  %2138 = vmatpush.msra.mxu0 %v2090
  %2139 = vmatpush.msra.mxu0 %v2089
  %2140 = vmatpush.msra.mxu0 %v2088
  %2141 = vmatpush.msra.mxu0 %v2087
  %2142 = vmatpush.msra.mxu0 %v2086
  %2143 = vmatpush.msra.mxu0 %v2085
  %2144 = vmatpush.msra.mxu0 %v2084
  %2145 = vmatpush.msra.mxu0 %v2083
  %2146 = vmatpush.msra.mxu0 %v2082
  %2147 = vmatpush.msra.mxu0 %v2081
  %2148 = vmatpush.msra.mxu0 %v2080
  %2149 = vmatpush.msra.mxu0 %v2079
  %2150 = vmatpush.msra.mxu0 %v2078
  %2151 = vmatmul.f32.gmra.mxu0 %v2046
  %v2152 = vpop.f32.mrf.mxu0
  %v2153 = vadd.f32 %v2112, %v2152
  %2154 = vmatmul.f32.gmra.mxu0 %v2048
  %v2155 = vpop.f32.mrf.mxu0
  %v2156 = vadd.f32 %v2115, %v2155
  %2157 = vmatmul.f32.gmra.mxu0 %v2050
  %v2158 = vpop.f32.mrf.mxu0
  %v2159 = vadd.f32 %v2118, %v2158
  %2160 = vmatmul.f32.gmra.mxu0 %v2052
  %v2161 = vpop.f32.mrf.mxu0
  %v2162 = vadd.f32 %v2121, %v2161
  %2163 = vmatmul.f32.gmra.mxu0 %v2054
  %v2164 = vpop.f32.mrf.mxu0
  %v2165 = vadd.f32 %v2124, %v2164
  %2166 = vmatmul.f32.gmra.mxu0 %v2056
  %v2167 = vpop.f32.mrf.mxu0
  %v2168 = vadd.f32 %v2127, %v2167
  %2169 = vmatmul.f32.gmra.mxu0 %v2058
  %v2170 = vpop.f32.mrf.mxu0
  %v2171 = vadd.f32 %v2130, %v2170
  %2172 = vmatmul.f32.gmra.mxu0 %v2060
  %v2173 = vpop.f32.mrf.mxu0
  %v2174 = vadd.f32 %v2133, %v2173
  %2175 = vdwg.mxu0
  %s2176 = scalar_lea.vmem %s45, 128
  %v2177 = vld [vmem:[%s2176] sm:$0xff]
  %v2178 = vld [vmem:[%s2176 + $0x8] sm:$0xff]
  %v2179 = vld [vmem:[%s2176 + $0x10] sm:$0xff]
  %v2180 = vld [vmem:[%s2176 + $0x18] sm:$0xff]
  %v2181 = vld [vmem:[%s2176 + $0x20] sm:$0xff]
  %v2182 = vld [vmem:[%s2176 + $0x28] sm:$0xff]
  %v2183 = vld [vmem:[%s2176 + $0x30] sm:$0xff]
  %v2184 = vld [vmem:[%s2176 + $0x38] sm:$0xff]
  %v2185 = vld [vmem:[%s2176 + $0x40] sm:$0xff]
  %v2186 = vld [vmem:[%s2176 + $0x48] sm:$0xff]
  %v2187 = vld [vmem:[%s2176 + $0x50] sm:$0xff]
  %v2188 = vld [vmem:[%s2176 + $0x58] sm:$0xff]
  %v2189 = vld [vmem:[%s2176 + $0x60] sm:$0xff]
  %v2190 = vld [vmem:[%s2176 + $0x68] sm:$0xff]
  %v2191 = vld [vmem:[%s2176 + $0x70] sm:$0xff]
  %v2192 = vld [vmem:[%s2176 + $0x78] sm:$0xff]
  %2193 = vmatpush.msra.mxu0 %v2192
  %2194 = vmatpush.msra.mxu0 %v2191
  %2195 = vmatpush.msra.mxu0 %v2190
  %2196 = vmatpush.msra.mxu0 %v2189
  %2197 = vmatpush.msra.mxu0 %v2188
  %2198 = vmatpush.msra.mxu0 %v2187
  %2199 = vmatpush.msra.mxu0 %v2186
  %2200 = vmatpush.msra.mxu0 %v2185
  %2201 = vmatpush.msra.mxu0 %v2184
  %2202 = vmatpush.msra.mxu0 %v2183
  %2203 = vmatpush.msra.mxu0 %v2182
  %2204 = vmatpush.msra.mxu0 %v2181
  %2205 = vmatpush.msra.mxu0 %v2180
  %2206 = vmatpush.msra.mxu0 %v2179
  %2207 = vmatpush.msra.mxu0 %v2178
  %2208 = vmatpush.msra.mxu0 %v2177
  %2209 = vmatmul.f32.gmra.mxu0 %v2153
  %v2210 = vpop.f32.mrf.mxu0
  %v2211 = vadd.f32 0.0, %v2210
  %2212 = vmatmul.f32.gmra.mxu0 %v2156
  %v2213 = vpop.f32.mrf.mxu0
  %v2214 = vadd.f32 0.0, %v2213
  %2215 = vmatmul.f32.gmra.mxu0 %v2159
  %v2216 = vpop.f32.mrf.mxu0
  %v2217 = vadd.f32 0.0, %v2216
  %2218 = vmatmul.f32.gmra.mxu0 %v2162
  %v2219 = vpop.f32.mrf.mxu0
  %v2220 = vadd.f32 0.0, %v2219
  %2221 = vmatmul.f32.gmra.mxu0 %v2165
  %v2222 = vpop.f32.mrf.mxu0
  %v2223 = vadd.f32 0.0, %v2222
  %2224 = vmatmul.f32.gmra.mxu0 %v2168
  %v2225 = vpop.f32.mrf.mxu0
  %v2226 = vadd.f32 0.0, %v2225
  %2227 = vmatmul.f32.gmra.mxu0 %v2171
  %v2228 = vpop.f32.mrf.mxu0
  %v2229 = vadd.f32 0.0, %v2228
  %2230 = vmatmul.f32.gmra.mxu0 %v2174
  %v2231 = vpop.f32.mrf.mxu0
  %v2232 = vadd.f32 0.0, %v2231
  %2233 = vdwg.mxu0
  %v2234 = vadd.f32 %v2036, %v2211
  %v2235 = vadd.f32 %v2037, %v2214
  %v2236 = vadd.f32 %v2038, %v2217
  %v2237 = vadd.f32 %v2039, %v2220
  %v2238 = vadd.f32 %v2040, %v2223
  %v2239 = vadd.f32 %v2041, %v2226
  %v2240 = vadd.f32 %v2042, %v2229
  %v2241 = vadd.f32 %v2043, %v2232
  %s2242 = scalar_lea.vmem %s49, 32
  %v2243 = vld [vmem:[%s2242] sm:$0xff]
  %v2244 = vld [vmem:[%s2242 + $0x8] sm:$0xff]
  %v2245 = vld [vmem:[%s2242 + $0x10] sm:$0xff]
  %v2246 = vld [vmem:[%s2242 + $0x18] sm:$0xff]
  %v2248 = vsel %vm254, %v1667, 0
  %v2251 = vsel %vm254, %v1668, 0
  %v2254 = vsel %vm254, %v1669, 0
  %v2257 = vsel %vm254, %v1670, 0
  %v2260 = vsel %vm254, %v1671, 0
  %v2263 = vsel %vm254, %v1672, 0
  %v2266 = vsel %vm254, %v1673, 0
  %v2269 = vsel %vm254, %v1674, 0
  %2271 = vmatpush.msra.mxu0 0.0
  %2272 = vmatpush.msra.mxu0 0.0
  %2273 = vmatpush.msra.mxu0 0.0
  %2274 = vmatpush.msra.mxu0 0.0
  %2275 = vmatpush.msra.mxu0 0.0
  %2276 = vmatpush.msra.mxu0 0.0
  %2277 = vmatpush.msra.mxu0 0.0
  %2278 = vmatpush.msra.mxu0 0.0
  %2279 = vmatpush.msra.mxu0 0.0
  %2280 = vmatpush.msra.mxu0 0.0
  %2281 = vmatpush.msra.mxu0 0.0
  %2282 = vmatpush.msra.mxu0 0.0
  %2283 = vmatpush.msra.mxu0 %v2246
  %2284 = vmatpush.msra.mxu0 %v2245
  %2285 = vmatpush.msra.mxu0 %v2244
  %2286 = vmatpush.msra.mxu0 %v2243
  %2287 = vmatmul.f32.gmra.mxu0 %v2248
  %v2288 = vpop.f32.mrf.mxu0
  %v2289 = vadd.f32 0.0, %v2288
  %2290 = vmatmul.f32.gmra.mxu0 %v2251
  %v2291 = vpop.f32.mrf.mxu0
  %v2292 = vadd.f32 0.0, %v2291
  %2293 = vmatmul.f32.gmra.mxu0 %v2254
  %v2294 = vpop.f32.mrf.mxu0
  %v2295 = vadd.f32 0.0, %v2294
  %2296 = vmatmul.f32.gmra.mxu0 %v2257
  %v2297 = vpop.f32.mrf.mxu0
  %v2298 = vadd.f32 0.0, %v2297
  %2299 = vmatmul.f32.gmra.mxu0 %v2260
  %v2300 = vpop.f32.mrf.mxu0
  %v2301 = vadd.f32 0.0, %v2300
  %2302 = vmatmul.f32.gmra.mxu0 %v2263
  %v2303 = vpop.f32.mrf.mxu0
  %v2304 = vadd.f32 0.0, %v2303
  %2305 = vmatmul.f32.gmra.mxu0 %v2266
  %v2306 = vpop.f32.mrf.mxu0
  %v2307 = vadd.f32 0.0, %v2306
  %2308 = vmatmul.f32.gmra.mxu0 %v2269
  %v2309 = vpop.f32.mrf.mxu0
  %v2310 = vadd.f32 0.0, %v2309
  %2311 = vdwg.mxu0
  %v2312 = vadd.f32 %v2234, %v2289
  %v2313 = vadd.f32 %v2235, %v2292
  %v2314 = vadd.f32 %v2236, %v2295
  %v2315 = vadd.f32 %v2237, %v2298
  %v2316 = vadd.f32 %v2238, %v2301
  %v2317 = vadd.f32 %v2239, %v2304
  %v2318 = vadd.f32 %v2240, %v2307
  %v2319 = vadd.f32 %v2241, %v2310
  %s2320 = scalar_lea.vmem %s3, 256
  %v2321 = vld [vmem:[%s2320] sm:$0xff]
  %v2322 = vld [vmem:[%s2320 + $0x8] sm:$0xff]
  %v2323 = vld [vmem:[%s2320 + $0x10] sm:$0xff]
  %v2324 = vld [vmem:[%s2320 + $0x18] sm:$0xff]
  %v2325 = vld [vmem:[%s2320 + $0x20] sm:$0xff]
  %v2326 = vld [vmem:[%s2320 + $0x28] sm:$0xff]
  %v2327 = vld [vmem:[%s2320 + $0x30] sm:$0xff]
  %v2328 = vld [vmem:[%s2320 + $0x38] sm:$0xff]
  %v2329 = vld [vmem:[%s2320 + $0x40] sm:$0xff]
  %v2330 = vld [vmem:[%s2320 + $0x48] sm:$0xff]
  %v2331 = vld [vmem:[%s2320 + $0x50] sm:$0xff]
  %v2332 = vld [vmem:[%s2320 + $0x58] sm:$0xff]
  %v2333 = vld [vmem:[%s2320 + $0x60] sm:$0xff]
  %v2334 = vld [vmem:[%s2320 + $0x68] sm:$0xff]
  %v2335 = vld [vmem:[%s2320 + $0x70] sm:$0xff]
  %v2336 = vld [vmem:[%s2320 + $0x78] sm:$0xff]
  %s2337 = scalar_lea.vmem %s1, 512
  %v2338 = vld [vmem:[%s2337] sm:$0xff]
  %v2339 = vld [vmem:[%s2337 + $0x8] sm:$0xff]
  %v2340 = vld [vmem:[%s2337 + $0x10] sm:$0xff]
  %v2341 = vld [vmem:[%s2337 + $0x18] sm:$0xff]
  %v2342 = vld [vmem:[%s2337 + $0x20] sm:$0xff]
  %v2343 = vld [vmem:[%s2337 + $0x28] sm:$0xff]
  %v2344 = vld [vmem:[%s2337 + $0x30] sm:$0xff]
  %v2345 = vld [vmem:[%s2337 + $0x38] sm:$0xff]
  %v2346 = vld [vmem:[%s2337 + $0x40] sm:$0xff]
  %v2347 = vld [vmem:[%s2337 + $0x48] sm:$0xff]
  %v2348 = vld [vmem:[%s2337 + $0x50] sm:$0xff]
  %v2349 = vld [vmem:[%s2337 + $0x58] sm:$0xff]
  %v2350 = vld [vmem:[%s2337 + $0x60] sm:$0xff]
  %v2351 = vld [vmem:[%s2337 + $0x68] sm:$0xff]
  %v2352 = vld [vmem:[%s2337 + $0x70] sm:$0xff]
  %v2353 = vld [vmem:[%s2337 + $0x78] sm:$0xff]
  %v2354 = vld [vmem:[%s2337 + $0x80] sm:$0xff]
  %v2355 = vld [vmem:[%s2337 + $0x88] sm:$0xff]
  %v2356 = vld [vmem:[%s2337 + $0x90] sm:$0xff]
  %v2357 = vld [vmem:[%s2337 + $0x98] sm:$0xff]
  %v2358 = vld [vmem:[%s2337 + $0xa0] sm:$0xff]
  %v2359 = vld [vmem:[%s2337 + $0xa8] sm:$0xff]
  %v2360 = vld [vmem:[%s2337 + $0xb0] sm:$0xff]
  %v2361 = vld [vmem:[%s2337 + $0xb8] sm:$0xff]
  %v2362 = vld [vmem:[%s2337 + $0xc0] sm:$0xff]
  %v2363 = vld [vmem:[%s2337 + $0xc8] sm:$0xff]
  %v2364 = vld [vmem:[%s2337 + $0xd0] sm:$0xff]
  %v2365 = vld [vmem:[%s2337 + $0xd8] sm:$0xff]
  %v2366 = vld [vmem:[%s2337 + $0xe0] sm:$0xff]
  %v2367 = vld [vmem:[%s2337 + $0xe8] sm:$0xff]
  %v2368 = vld [vmem:[%s2337 + $0xf0] sm:$0xff]
  %v2369 = vld [vmem:[%s2337 + $0xf8] sm:$0xff]
  %2370 = vmatpush.msra.mxu0 %v2353
  %2371 = vmatpush.msra.mxu0 %v2352
  %2372 = vmatpush.msra.mxu0 %v2351
  %2373 = vmatpush.msra.mxu0 %v2350
  %2374 = vmatpush.msra.mxu0 %v2349
  %2375 = vmatpush.msra.mxu0 %v2348
  %2376 = vmatpush.msra.mxu0 %v2347
  %2377 = vmatpush.msra.mxu0 %v2346
  %2378 = vmatpush.msra.mxu0 %v2345
  %2379 = vmatpush.msra.mxu0 %v2344
  %2380 = vmatpush.msra.mxu0 %v2343
  %2381 = vmatpush.msra.mxu0 %v2342
  %2382 = vmatpush.msra.mxu0 %v2341
  %2383 = vmatpush.msra.mxu0 %v2340
  %2384 = vmatpush.msra.mxu0 %v2339
  %2385 = vmatpush.msra.mxu0 %v2338
  %2386 = vmatmul.f32.gmra.mxu0 %v2321
  %v2387 = vpop.f32.mrf.mxu0
  %v2388 = vadd.f32 0.0, %v2387
  %2389 = vmatmul.f32.gmra.mxu0 %v2323
  %v2390 = vpop.f32.mrf.mxu0
  %v2391 = vadd.f32 0.0, %v2390
  %2392 = vmatmul.f32.gmra.mxu0 %v2325
  %v2393 = vpop.f32.mrf.mxu0
  %v2394 = vadd.f32 0.0, %v2393
  %2395 = vmatmul.f32.gmra.mxu0 %v2327
  %v2396 = vpop.f32.mrf.mxu0
  %v2397 = vadd.f32 0.0, %v2396
  %2398 = vmatmul.f32.gmra.mxu0 %v2329
  %v2399 = vpop.f32.mrf.mxu0
  %v2400 = vadd.f32 0.0, %v2399
  %2401 = vmatmul.f32.gmra.mxu0 %v2331
  %v2402 = vpop.f32.mrf.mxu0
  %v2403 = vadd.f32 0.0, %v2402
  %2404 = vmatmul.f32.gmra.mxu0 %v2333
  %v2405 = vpop.f32.mrf.mxu0
  %v2406 = vadd.f32 0.0, %v2405
  %2407 = vmatmul.f32.gmra.mxu0 %v2335
  %v2408 = vpop.f32.mrf.mxu0
  %v2409 = vadd.f32 0.0, %v2408
  %2410 = vdwg.mxu0
  %2411 = vmatpush.msra.mxu0 %v2369
  %2412 = vmatpush.msra.mxu0 %v2368
  %2413 = vmatpush.msra.mxu0 %v2367
  %2414 = vmatpush.msra.mxu0 %v2366
  %2415 = vmatpush.msra.mxu0 %v2365
  %2416 = vmatpush.msra.mxu0 %v2364
  %2417 = vmatpush.msra.mxu0 %v2363
  %2418 = vmatpush.msra.mxu0 %v2362
  %2419 = vmatpush.msra.mxu0 %v2361
  %2420 = vmatpush.msra.mxu0 %v2360
  %2421 = vmatpush.msra.mxu0 %v2359
  %2422 = vmatpush.msra.mxu0 %v2358
  %2423 = vmatpush.msra.mxu0 %v2357
  %2424 = vmatpush.msra.mxu0 %v2356
  %2425 = vmatpush.msra.mxu0 %v2355
  %2426 = vmatpush.msra.mxu0 %v2354
  %2427 = vmatmul.f32.gmra.mxu0 %v2322
  %v2428 = vpop.f32.mrf.mxu0
  %v2429 = vadd.f32 %v2388, %v2428
  %2430 = vmatmul.f32.gmra.mxu0 %v2324
  %v2431 = vpop.f32.mrf.mxu0
  %v2432 = vadd.f32 %v2391, %v2431
  %2433 = vmatmul.f32.gmra.mxu0 %v2326
  %v2434 = vpop.f32.mrf.mxu0
  %v2435 = vadd.f32 %v2394, %v2434
  %2436 = vmatmul.f32.gmra.mxu0 %v2328
  %v2437 = vpop.f32.mrf.mxu0
  %v2438 = vadd.f32 %v2397, %v2437
  %2439 = vmatmul.f32.gmra.mxu0 %v2330
  %v2440 = vpop.f32.mrf.mxu0
  %v2441 = vadd.f32 %v2400, %v2440
  %2442 = vmatmul.f32.gmra.mxu0 %v2332
  %v2443 = vpop.f32.mrf.mxu0
  %v2444 = vadd.f32 %v2403, %v2443
  %2445 = vmatmul.f32.gmra.mxu0 %v2334
  %v2446 = vpop.f32.mrf.mxu0
  %v2447 = vadd.f32 %v2406, %v2446
  %2448 = vmatmul.f32.gmra.mxu0 %v2336
  %v2449 = vpop.f32.mrf.mxu0
  %v2450 = vadd.f32 %v2409, %v2449
  %2451 = vdwg.mxu0
  %s2452 = scalar_lea.vmem %s45, 256
  %v2453 = vld [vmem:[%s2452] sm:$0xff]
  %v2454 = vld [vmem:[%s2452 + $0x8] sm:$0xff]
  %v2455 = vld [vmem:[%s2452 + $0x10] sm:$0xff]
  %v2456 = vld [vmem:[%s2452 + $0x18] sm:$0xff]
  %v2457 = vld [vmem:[%s2452 + $0x20] sm:$0xff]
  %v2458 = vld [vmem:[%s2452 + $0x28] sm:$0xff]
  %v2459 = vld [vmem:[%s2452 + $0x30] sm:$0xff]
  %v2460 = vld [vmem:[%s2452 + $0x38] sm:$0xff]
  %v2461 = vld [vmem:[%s2452 + $0x40] sm:$0xff]
  %v2462 = vld [vmem:[%s2452 + $0x48] sm:$0xff]
  %v2463 = vld [vmem:[%s2452 + $0x50] sm:$0xff]
  %v2464 = vld [vmem:[%s2452 + $0x58] sm:$0xff]
  %v2465 = vld [vmem:[%s2452 + $0x60] sm:$0xff]
  %v2466 = vld [vmem:[%s2452 + $0x68] sm:$0xff]
  %v2467 = vld [vmem:[%s2452 + $0x70] sm:$0xff]
  %v2468 = vld [vmem:[%s2452 + $0x78] sm:$0xff]
  %2469 = vmatpush.msra.mxu0 %v2468
  %2470 = vmatpush.msra.mxu0 %v2467
  %2471 = vmatpush.msra.mxu0 %v2466
  %2472 = vmatpush.msra.mxu0 %v2465
  %2473 = vmatpush.msra.mxu0 %v2464
  %2474 = vmatpush.msra.mxu0 %v2463
  %2475 = vmatpush.msra.mxu0 %v2462
  %2476 = vmatpush.msra.mxu0 %v2461
  %2477 = vmatpush.msra.mxu0 %v2460
  %2478 = vmatpush.msra.mxu0 %v2459
  %2479 = vmatpush.msra.mxu0 %v2458
  %2480 = vmatpush.msra.mxu0 %v2457
  %2481 = vmatpush.msra.mxu0 %v2456
  %2482 = vmatpush.msra.mxu0 %v2455
  %2483 = vmatpush.msra.mxu0 %v2454
  %2484 = vmatpush.msra.mxu0 %v2453
  %2485 = vmatmul.f32.gmra.mxu0 %v2429
  %v2486 = vpop.f32.mrf.mxu0
  %v2487 = vadd.f32 0.0, %v2486
  %2488 = vmatmul.f32.gmra.mxu0 %v2432
  %v2489 = vpop.f32.mrf.mxu0
  %v2490 = vadd.f32 0.0, %v2489
  %2491 = vmatmul.f32.gmra.mxu0 %v2435
  %v2492 = vpop.f32.mrf.mxu0
  %v2493 = vadd.f32 0.0, %v2492
  %2494 = vmatmul.f32.gmra.mxu0 %v2438
  %v2495 = vpop.f32.mrf.mxu0
  %v2496 = vadd.f32 0.0, %v2495
  %2497 = vmatmul.f32.gmra.mxu0 %v2441
  %v2498 = vpop.f32.mrf.mxu0
  %v2499 = vadd.f32 0.0, %v2498
  %2500 = vmatmul.f32.gmra.mxu0 %v2444
  %v2501 = vpop.f32.mrf.mxu0
  %v2502 = vadd.f32 0.0, %v2501
  %2503 = vmatmul.f32.gmra.mxu0 %v2447
  %v2504 = vpop.f32.mrf.mxu0
  %v2505 = vadd.f32 0.0, %v2504
  %2506 = vmatmul.f32.gmra.mxu0 %v2450
  %v2507 = vpop.f32.mrf.mxu0
  %v2508 = vadd.f32 0.0, %v2507
  %2509 = vdwg.mxu0
  %v2510 = vadd.f32 %v2312, %v2487
  %v2511 = vadd.f32 %v2313, %v2490
  %v2512 = vadd.f32 %v2314, %v2493
  %v2513 = vadd.f32 %v2315, %v2496
  %v2514 = vadd.f32 %v2316, %v2499
  %v2515 = vadd.f32 %v2317, %v2502
  %v2516 = vadd.f32 %v2318, %v2505
  %v2517 = vadd.f32 %v2319, %v2508
  %s2518 = scalar_lea.vmem %s49, 64
  %v2519 = vld [vmem:[%s2518] sm:$0xff]
  %v2520 = vld [vmem:[%s2518 + $0x8] sm:$0xff]
  %v2521 = vld [vmem:[%s2518 + $0x10] sm:$0xff]
  %v2522 = vld [vmem:[%s2518 + $0x18] sm:$0xff]
  %v2524 = vsel %vm254, %v1675, 0
  %v2527 = vsel %vm254, %v1676, 0
  %v2530 = vsel %vm254, %v1677, 0
  %v2533 = vsel %vm254, %v1678, 0
  %v2536 = vsel %vm254, %v1679, 0
  %v2539 = vsel %vm254, %v1680, 0
  %v2542 = vsel %vm254, %v1681, 0
  %v2545 = vsel %vm254, %v1682, 0
  %2547 = vmatpush.msra.mxu0 0.0
  %2548 = vmatpush.msra.mxu0 0.0
  %2549 = vmatpush.msra.mxu0 0.0
  %2550 = vmatpush.msra.mxu0 0.0
  %2551 = vmatpush.msra.mxu0 0.0
  %2552 = vmatpush.msra.mxu0 0.0
  %2553 = vmatpush.msra.mxu0 0.0
  %2554 = vmatpush.msra.mxu0 0.0
  %2555 = vmatpush.msra.mxu0 0.0
  %2556 = vmatpush.msra.mxu0 0.0
  %2557 = vmatpush.msra.mxu0 0.0
  %2558 = vmatpush.msra.mxu0 0.0
  %2559 = vmatpush.msra.mxu0 %v2522
  %2560 = vmatpush.msra.mxu0 %v2521
  %2561 = vmatpush.msra.mxu0 %v2520
  %2562 = vmatpush.msra.mxu0 %v2519
  %2563 = vmatmul.f32.gmra.mxu0 %v2524
  %v2564 = vpop.f32.mrf.mxu0
  %v2565 = vadd.f32 0.0, %v2564
  %2566 = vmatmul.f32.gmra.mxu0 %v2527
  %v2567 = vpop.f32.mrf.mxu0
  %v2568 = vadd.f32 0.0, %v2567
  %2569 = vmatmul.f32.gmra.mxu0 %v2530
  %v2570 = vpop.f32.mrf.mxu0
  %v2571 = vadd.f32 0.0, %v2570
  %2572 = vmatmul.f32.gmra.mxu0 %v2533
  %v2573 = vpop.f32.mrf.mxu0
  %v2574 = vadd.f32 0.0, %v2573
  %2575 = vmatmul.f32.gmra.mxu0 %v2536
  %v2576 = vpop.f32.mrf.mxu0
  %v2577 = vadd.f32 0.0, %v2576
  %2578 = vmatmul.f32.gmra.mxu0 %v2539
  %v2579 = vpop.f32.mrf.mxu0
  %v2580 = vadd.f32 0.0, %v2579
  %2581 = vmatmul.f32.gmra.mxu0 %v2542
  %v2582 = vpop.f32.mrf.mxu0
  %v2583 = vadd.f32 0.0, %v2582
  %2584 = vmatmul.f32.gmra.mxu0 %v2545
  %v2585 = vpop.f32.mrf.mxu0
  %v2586 = vadd.f32 0.0, %v2585
  %2587 = vdwg.mxu0
  %v2588 = vadd.f32 %v2510, %v2565
  %v2589 = vadd.f32 %v2511, %v2568
  %v2590 = vadd.f32 %v2512, %v2571
  %v2591 = vadd.f32 %v2513, %v2574
  %v2592 = vadd.f32 %v2514, %v2577
  %v2593 = vadd.f32 %v2515, %v2580
  %v2594 = vadd.f32 %v2516, %v2583
  %v2595 = vadd.f32 %v2517, %v2586
  %s2596 = scalar_lea.vmem %s3, 384
  %v2597 = vld [vmem:[%s2596] sm:$0xff]
  %v2598 = vld [vmem:[%s2596 + $0x8] sm:$0xff]
  %v2599 = vld [vmem:[%s2596 + $0x10] sm:$0xff]
  %v2600 = vld [vmem:[%s2596 + $0x18] sm:$0xff]
  %v2601 = vld [vmem:[%s2596 + $0x20] sm:$0xff]
  %v2602 = vld [vmem:[%s2596 + $0x28] sm:$0xff]
  %v2603 = vld [vmem:[%s2596 + $0x30] sm:$0xff]
  %v2604 = vld [vmem:[%s2596 + $0x38] sm:$0xff]
  %v2605 = vld [vmem:[%s2596 + $0x40] sm:$0xff]
  %v2606 = vld [vmem:[%s2596 + $0x48] sm:$0xff]
  %v2607 = vld [vmem:[%s2596 + $0x50] sm:$0xff]
  %v2608 = vld [vmem:[%s2596 + $0x58] sm:$0xff]
  %v2609 = vld [vmem:[%s2596 + $0x60] sm:$0xff]
  %v2610 = vld [vmem:[%s2596 + $0x68] sm:$0xff]
  %v2611 = vld [vmem:[%s2596 + $0x70] sm:$0xff]
  %v2612 = vld [vmem:[%s2596 + $0x78] sm:$0xff]
  %s2613 = scalar_lea.vmem %s1, 768
  %v2614 = vld [vmem:[%s2613] sm:$0xff]
  %v2615 = vld [vmem:[%s2613 + $0x8] sm:$0xff]
  %v2616 = vld [vmem:[%s2613 + $0x10] sm:$0xff]
  %v2617 = vld [vmem:[%s2613 + $0x18] sm:$0xff]
  %v2618 = vld [vmem:[%s2613 + $0x20] sm:$0xff]
  %v2619 = vld [vmem:[%s2613 + $0x28] sm:$0xff]
  %v2620 = vld [vmem:[%s2613 + $0x30] sm:$0xff]
  %v2621 = vld [vmem:[%s2613 + $0x38] sm:$0xff]
  %v2622 = vld [vmem:[%s2613 + $0x40] sm:$0xff]
  %v2623 = vld [vmem:[%s2613 + $0x48] sm:$0xff]
  %v2624 = vld [vmem:[%s2613 + $0x50] sm:$0xff]
  %v2625 = vld [vmem:[%s2613 + $0x58] sm:$0xff]
  %v2626 = vld [vmem:[%s2613 + $0x60] sm:$0xff]
  %v2627 = vld [vmem:[%s2613 + $0x68] sm:$0xff]
  %v2628 = vld [vmem:[%s2613 + $0x70] sm:$0xff]
  %v2629 = vld [vmem:[%s2613 + $0x78] sm:$0xff]
  %v2630 = vld [vmem:[%s2613 + $0x80] sm:$0xff]
  %v2631 = vld [vmem:[%s2613 + $0x88] sm:$0xff]
  %v2632 = vld [vmem:[%s2613 + $0x90] sm:$0xff]
  %v2633 = vld [vmem:[%s2613 + $0x98] sm:$0xff]
  %v2634 = vld [vmem:[%s2613 + $0xa0] sm:$0xff]
  %v2635 = vld [vmem:[%s2613 + $0xa8] sm:$0xff]
  %v2636 = vld [vmem:[%s2613 + $0xb0] sm:$0xff]
  %v2637 = vld [vmem:[%s2613 + $0xb8] sm:$0xff]
  %v2638 = vld [vmem:[%s2613 + $0xc0] sm:$0xff]
  %v2639 = vld [vmem:[%s2613 + $0xc8] sm:$0xff]
  %v2640 = vld [vmem:[%s2613 + $0xd0] sm:$0xff]
  %v2641 = vld [vmem:[%s2613 + $0xd8] sm:$0xff]
  %v2642 = vld [vmem:[%s2613 + $0xe0] sm:$0xff]
  %v2643 = vld [vmem:[%s2613 + $0xe8] sm:$0xff]
  %v2644 = vld [vmem:[%s2613 + $0xf0] sm:$0xff]
  %v2645 = vld [vmem:[%s2613 + $0xf8] sm:$0xff]
  %2646 = vmatpush.msra.mxu0 %v2629
  %2647 = vmatpush.msra.mxu0 %v2628
  %2648 = vmatpush.msra.mxu0 %v2627
  %2649 = vmatpush.msra.mxu0 %v2626
  %2650 = vmatpush.msra.mxu0 %v2625
  %2651 = vmatpush.msra.mxu0 %v2624
  %2652 = vmatpush.msra.mxu0 %v2623
  %2653 = vmatpush.msra.mxu0 %v2622
  %2654 = vmatpush.msra.mxu0 %v2621
  %2655 = vmatpush.msra.mxu0 %v2620
  %2656 = vmatpush.msra.mxu0 %v2619
  %2657 = vmatpush.msra.mxu0 %v2618
  %2658 = vmatpush.msra.mxu0 %v2617
  %2659 = vmatpush.msra.mxu0 %v2616
  %2660 = vmatpush.msra.mxu0 %v2615
  %2661 = vmatpush.msra.mxu0 %v2614
  %2662 = vmatmul.f32.gmra.mxu0 %v2597
  %v2663 = vpop.f32.mrf.mxu0
  %v2664 = vadd.f32 0.0, %v2663
  %2665 = vmatmul.f32.gmra.mxu0 %v2599
  %v2666 = vpop.f32.mrf.mxu0
  %v2667 = vadd.f32 0.0, %v2666
  %2668 = vmatmul.f32.gmra.mxu0 %v2601
  %v2669 = vpop.f32.mrf.mxu0
  %v2670 = vadd.f32 0.0, %v2669
  %2671 = vmatmul.f32.gmra.mxu0 %v2603
  %v2672 = vpop.f32.mrf.mxu0
  %v2673 = vadd.f32 0.0, %v2672
  %2674 = vmatmul.f32.gmra.mxu0 %v2605
  %v2675 = vpop.f32.mrf.mxu0
  %v2676 = vadd.f32 0.0, %v2675
  %2677 = vmatmul.f32.gmra.mxu0 %v2607
  %v2678 = vpop.f32.mrf.mxu0
  %v2679 = vadd.f32 0.0, %v2678
  %2680 = vmatmul.f32.gmra.mxu0 %v2609
  %v2681 = vpop.f32.mrf.mxu0
  %v2682 = vadd.f32 0.0, %v2681
  %2683 = vmatmul.f32.gmra.mxu0 %v2611
  %v2684 = vpop.f32.mrf.mxu0
  %v2685 = vadd.f32 0.0, %v2684
  %2686 = vdwg.mxu0
  %2687 = vmatpush.msra.mxu0 %v2645
  %2688 = vmatpush.msra.mxu0 %v2644
  %2689 = vmatpush.msra.mxu0 %v2643
  %2690 = vmatpush.msra.mxu0 %v2642
  %2691 = vmatpush.msra.mxu0 %v2641
  %2692 = vmatpush.msra.mxu0 %v2640
  %2693 = vmatpush.msra.mxu0 %v2639
  %2694 = vmatpush.msra.mxu0 %v2638
  %2695 = vmatpush.msra.mxu0 %v2637
  %2696 = vmatpush.msra.mxu0 %v2636
  %2697 = vmatpush.msra.mxu0 %v2635
  %2698 = vmatpush.msra.mxu0 %v2634
  %2699 = vmatpush.msra.mxu0 %v2633
  %2700 = vmatpush.msra.mxu0 %v2632
  %2701 = vmatpush.msra.mxu0 %v2631
  %2702 = vmatpush.msra.mxu0 %v2630
  %2703 = vmatmul.f32.gmra.mxu0 %v2598
  %v2704 = vpop.f32.mrf.mxu0
  %v2705 = vadd.f32 %v2664, %v2704
  %2706 = vmatmul.f32.gmra.mxu0 %v2600
  %v2707 = vpop.f32.mrf.mxu0
  %v2708 = vadd.f32 %v2667, %v2707
  %2709 = vmatmul.f32.gmra.mxu0 %v2602
  %v2710 = vpop.f32.mrf.mxu0
  %v2711 = vadd.f32 %v2670, %v2710
  %2712 = vmatmul.f32.gmra.mxu0 %v2604
  %v2713 = vpop.f32.mrf.mxu0
  %v2714 = vadd.f32 %v2673, %v2713
  %2715 = vmatmul.f32.gmra.mxu0 %v2606
  %v2716 = vpop.f32.mrf.mxu0
  %v2717 = vadd.f32 %v2676, %v2716
  %2718 = vmatmul.f32.gmra.mxu0 %v2608
  %v2719 = vpop.f32.mrf.mxu0
  %v2720 = vadd.f32 %v2679, %v2719
  %2721 = vmatmul.f32.gmra.mxu0 %v2610
  %v2722 = vpop.f32.mrf.mxu0
  %v2723 = vadd.f32 %v2682, %v2722
  %2724 = vmatmul.f32.gmra.mxu0 %v2612
  %v2725 = vpop.f32.mrf.mxu0
  %v2726 = vadd.f32 %v2685, %v2725
  %2727 = vdwg.mxu0
  %s2728 = scalar_lea.vmem %s45, 384
  %v2729 = vld [vmem:[%s2728] sm:$0xff]
  %v2730 = vld [vmem:[%s2728 + $0x8] sm:$0xff]
  %v2731 = vld [vmem:[%s2728 + $0x10] sm:$0xff]
  %v2732 = vld [vmem:[%s2728 + $0x18] sm:$0xff]
  %v2733 = vld [vmem:[%s2728 + $0x20] sm:$0xff]
  %v2734 = vld [vmem:[%s2728 + $0x28] sm:$0xff]
  %v2735 = vld [vmem:[%s2728 + $0x30] sm:$0xff]
  %v2736 = vld [vmem:[%s2728 + $0x38] sm:$0xff]
  %v2737 = vld [vmem:[%s2728 + $0x40] sm:$0xff]
  %v2738 = vld [vmem:[%s2728 + $0x48] sm:$0xff]
  %v2739 = vld [vmem:[%s2728 + $0x50] sm:$0xff]
  %v2740 = vld [vmem:[%s2728 + $0x58] sm:$0xff]
  %v2741 = vld [vmem:[%s2728 + $0x60] sm:$0xff]
  %v2742 = vld [vmem:[%s2728 + $0x68] sm:$0xff]
  %v2743 = vld [vmem:[%s2728 + $0x70] sm:$0xff]
  %v2744 = vld [vmem:[%s2728 + $0x78] sm:$0xff]
  %2745 = vmatpush.msra.mxu0 %v2744
  %2746 = vmatpush.msra.mxu0 %v2743
  %2747 = vmatpush.msra.mxu0 %v2742
  %2748 = vmatpush.msra.mxu0 %v2741
  %2749 = vmatpush.msra.mxu0 %v2740
  %2750 = vmatpush.msra.mxu0 %v2739
  %2751 = vmatpush.msra.mxu0 %v2738
  %2752 = vmatpush.msra.mxu0 %v2737
  %2753 = vmatpush.msra.mxu0 %v2736
  %2754 = vmatpush.msra.mxu0 %v2735
  %2755 = vmatpush.msra.mxu0 %v2734
  %2756 = vmatpush.msra.mxu0 %v2733
  %2757 = vmatpush.msra.mxu0 %v2732
  %2758 = vmatpush.msra.mxu0 %v2731
  %2759 = vmatpush.msra.mxu0 %v2730
  %2760 = vmatpush.msra.mxu0 %v2729
  %2761 = vmatmul.f32.gmra.mxu0 %v2705
  %v2762 = vpop.f32.mrf.mxu0
  %v2763 = vadd.f32 0.0, %v2762
  %2764 = vmatmul.f32.gmra.mxu0 %v2708
  %v2765 = vpop.f32.mrf.mxu0
  %v2766 = vadd.f32 0.0, %v2765
  %2767 = vmatmul.f32.gmra.mxu0 %v2711
  %v2768 = vpop.f32.mrf.mxu0
  %v2769 = vadd.f32 0.0, %v2768
  %2770 = vmatmul.f32.gmra.mxu0 %v2714
  %v2771 = vpop.f32.mrf.mxu0
  %v2772 = vadd.f32 0.0, %v2771
  %2773 = vmatmul.f32.gmra.mxu0 %v2717
  %v2774 = vpop.f32.mrf.mxu0
  %v2775 = vadd.f32 0.0, %v2774
  %2776 = vmatmul.f32.gmra.mxu0 %v2720
  %v2777 = vpop.f32.mrf.mxu0
  %v2778 = vadd.f32 0.0, %v2777
  %2779 = vmatmul.f32.gmra.mxu0 %v2723
  %v2780 = vpop.f32.mrf.mxu0
  %v2781 = vadd.f32 0.0, %v2780
  %2782 = vmatmul.f32.gmra.mxu0 %v2726
  %v2783 = vpop.f32.mrf.mxu0
  %v2784 = vadd.f32 0.0, %v2783
  %2785 = vdwg.mxu0
  %v2786 = vadd.f32 %v2588, %v2763
  %v2787 = vadd.f32 %v2589, %v2766
  %v2788 = vadd.f32 %v2590, %v2769
  %v2789 = vadd.f32 %v2591, %v2772
  %v2790 = vadd.f32 %v2592, %v2775
  %v2791 = vadd.f32 %v2593, %v2778
  %v2792 = vadd.f32 %v2594, %v2781
  %v2793 = vadd.f32 %v2595, %v2784
  %s2794 = scalar_lea.vmem %s49, 96
  %v2795 = vld [vmem:[%s2794] sm:$0xff]
  %v2796 = vld [vmem:[%s2794 + $0x8] sm:$0xff]
  %v2797 = vld [vmem:[%s2794 + $0x10] sm:$0xff]
  %v2798 = vld [vmem:[%s2794 + $0x18] sm:$0xff]
  %v2800 = vsel %vm254, %v1683, 0
  %v2803 = vsel %vm254, %v1684, 0
  %v2806 = vsel %vm254, %v1685, 0
  %v2809 = vsel %vm254, %v1686, 0
  %v2812 = vsel %vm254, %v1687, 0
  %v2815 = vsel %vm254, %v1688, 0
  %v2818 = vsel %vm254, %v1689, 0
  %v2821 = vsel %vm254, %v1690, 0
  %2823 = vmatpush.msra.mxu0 0.0
  %2824 = vmatpush.msra.mxu0 0.0
  %2825 = vmatpush.msra.mxu0 0.0
  %2826 = vmatpush.msra.mxu0 0.0
  %2827 = vmatpush.msra.mxu0 0.0
  %2828 = vmatpush.msra.mxu0 0.0
  %2829 = vmatpush.msra.mxu0 0.0
  %2830 = vmatpush.msra.mxu0 0.0
  %2831 = vmatpush.msra.mxu0 0.0
  %2832 = vmatpush.msra.mxu0 0.0
  %2833 = vmatpush.msra.mxu0 0.0
  %2834 = vmatpush.msra.mxu0 0.0
  %2835 = vmatpush.msra.mxu0 %v2798
  %2836 = vmatpush.msra.mxu0 %v2797
  %2837 = vmatpush.msra.mxu0 %v2796
  %2838 = vmatpush.msra.mxu0 %v2795
  %2839 = vmatmul.f32.gmra.mxu0 %v2800
  %v2840 = vpop.f32.mrf.mxu0
  %v2841 = vadd.f32 0.0, %v2840
  %2842 = vmatmul.f32.gmra.mxu0 %v2803
  %v2843 = vpop.f32.mrf.mxu0
  %v2844 = vadd.f32 0.0, %v2843
  %2845 = vmatmul.f32.gmra.mxu0 %v2806
  %v2846 = vpop.f32.mrf.mxu0
  %v2847 = vadd.f32 0.0, %v2846
  %2848 = vmatmul.f32.gmra.mxu0 %v2809
  %v2849 = vpop.f32.mrf.mxu0
  %v2850 = vadd.f32 0.0, %v2849
  %2851 = vmatmul.f32.gmra.mxu0 %v2812
  %v2852 = vpop.f32.mrf.mxu0
  %v2853 = vadd.f32 0.0, %v2852
  %2854 = vmatmul.f32.gmra.mxu0 %v2815
  %v2855 = vpop.f32.mrf.mxu0
  %v2856 = vadd.f32 0.0, %v2855
  %2857 = vmatmul.f32.gmra.mxu0 %v2818
  %v2858 = vpop.f32.mrf.mxu0
  %v2859 = vadd.f32 0.0, %v2858
  %2860 = vmatmul.f32.gmra.mxu0 %v2821
  %v2861 = vpop.f32.mrf.mxu0
  %v2862 = vadd.f32 0.0, %v2861
  %2863 = vdwg.mxu0
  %v2864 = vadd.f32 %v2786, %v2841
  %v2865 = vadd.f32 %v2787, %v2844
  %v2866 = vadd.f32 %v2788, %v2847
  %v2867 = vadd.f32 %v2789, %v2850
  %v2868 = vadd.f32 %v2790, %v2853
  %v2869 = vadd.f32 %v2791, %v2856
  %v2870 = vadd.f32 %v2792, %v2859
  %v2871 = vadd.f32 %v2793, %v2862
  %v2872 = vmax.f32 %v2864, 0.0
  %v2873 = vmax.f32 %v2865, 0.0
  %v2874 = vmax.f32 %v2866, 0.0
  %v2875 = vmax.f32 %v2867, 0.0
  %v2876 = vmax.f32 %v2868, 0.0
  %v2877 = vmax.f32 %v2869, 0.0
  %v2878 = vmax.f32 %v2870, 0.0
  %v2879 = vmax.f32 %v2871, 0.0
  %v2880 = vld [vmem:[%s53] sm:$0xff]
  %v2881 = vld [vmem:[%s53 + $0x8] sm:$0xff]
  %v2882 = vld [vmem:[%s53 + $0x10] sm:$0xff]
  %v2883 = vld [vmem:[%s53 + $0x18] sm:$0xff]
  %v2884 = vld [vmem:[%s53 + $0x20] sm:$0xff]
  %v2885 = vld [vmem:[%s53 + $0x28] sm:$0xff]
  %v2886 = vld [vmem:[%s53 + $0x30] sm:$0xff]
  %v2887 = vld [vmem:[%s53 + $0x38] sm:$0xff]
  %v2888 = vld [vmem:[%s55] sm:$0x1]
  %v2890 = vperm.slane %v2888, 0
  %vm2892 = vcmask 523264
  %v2894 = vsel %vm2892, %v2872, 0
  %v2897 = vsel %vm2892, %v2873, 0
  %v2900 = vsel %vm2892, %v2874, 0
  %v2903 = vsel %vm2892, %v2875, 0
  %v2906 = vsel %vm2892, %v2876, 0
  %v2909 = vsel %vm2892, %v2877, 0
  %v2912 = vsel %vm2892, %v2878, 0
  %v2915 = vsel %vm2892, %v2879, 0
  %2917 = vmatpush.msra.mxu0 0.0
  %2918 = vmatpush.msra.mxu0 0.0
  %2919 = vmatpush.msra.mxu0 0.0
  %2920 = vmatpush.msra.mxu0 0.0
  %2921 = vmatpush.msra.mxu0 0.0
  %2922 = vmatpush.msra.mxu0 0.0
  %2923 = vmatpush.msra.mxu0 0.0
  %2924 = vmatpush.msra.mxu0 0.0
  %2925 = vmatpush.msra.mxu0 %v2887
  %2926 = vmatpush.msra.mxu0 %v2886
  %2927 = vmatpush.msra.mxu0 %v2885
  %2928 = vmatpush.msra.mxu0 %v2884
  %2929 = vmatpush.msra.mxu0 %v2883
  %2930 = vmatpush.msra.mxu0 %v2882
  %2931 = vmatpush.msra.mxu0 %v2881
  %2932 = vmatpush.msra.mxu0 %v2880
  %2933 = vmatmul.f32.gmra.mxu0 %v2894
  %v2934 = vpop.f32.mrf.mxu0
  %v2935 = vadd.f32 %v2890, %v2934
  %2936 = vmatmul.f32.gmra.mxu0 %v2897
  %v2937 = vpop.f32.mrf.mxu0
  %v2938 = vadd.f32 %v2890, %v2937
  %2939 = vmatmul.f32.gmra.mxu0 %v2900
  %v2940 = vpop.f32.mrf.mxu0
  %v2941 = vadd.f32 %v2890, %v2940
  %2942 = vmatmul.f32.gmra.mxu0 %v2903
  %v2943 = vpop.f32.mrf.mxu0
  %v2944 = vadd.f32 %v2890, %v2943
  %2945 = vmatmul.f32.gmra.mxu0 %v2906
  %v2946 = vpop.f32.mrf.mxu0
  %v2947 = vadd.f32 %v2890, %v2946
  %2948 = vmatmul.f32.gmra.mxu0 %v2909
  %v2949 = vpop.f32.mrf.mxu0
  %v2950 = vadd.f32 %v2890, %v2949
  %2951 = vmatmul.f32.gmra.mxu0 %v2912
  %v2952 = vpop.f32.mrf.mxu0
  %v2953 = vadd.f32 %v2890, %v2952
  %2954 = vmatmul.f32.gmra.mxu0 %v2915
  %v2955 = vpop.f32.mrf.mxu0
  %v2956 = vadd.f32 %v2890, %v2955
  %2957 = vdwg.mxu0
  %v2958 = vmax.f32 %v2935, 0.0
  %v2959 = vmax.f32 %v2938, 0.0
  %v2960 = vmax.f32 %v2941, 0.0
  %v2961 = vmax.f32 %v2944, 0.0
  %v2962 = vmax.f32 %v2947, 0.0
  %v2963 = vmax.f32 %v2950, 0.0
  %v2964 = vmax.f32 %v2953, 0.0
  %v2965 = vmax.f32 %v2956, 0.0
  %v2966 = vld [vmem:[%s57] sm:$0xff]
  %v2967 = vld [vmem:[%s57 + $0x8] sm:$0xff]
  %v2968 = vld [vmem:[%s57 + $0x10] sm:$0xff]
  %v2969 = vld [vmem:[%s57 + $0x18] sm:$0xff]
  %v2970 = vld [vmem:[%s57 + $0x20] sm:$0xff]
  %v2971 = vld [vmem:[%s57 + $0x28] sm:$0xff]
  %v2972 = vld [vmem:[%s57 + $0x30] sm:$0xff]
  %v2973 = vld [vmem:[%s57 + $0x38] sm:$0xff]
  %v2974 = vld [vmem:[%s59] sm:$0x1]
  %v2976 = vperm.slane %v2974, 0
  %v2979 = vsel %vm2892, %v2958, 0
  %v2982 = vsel %vm2892, %v2959, 0
  %v2985 = vsel %vm2892, %v2960, 0
  %v2988 = vsel %vm2892, %v2961, 0
  %v2991 = vsel %vm2892, %v2962, 0
  %v2994 = vsel %vm2892, %v2963, 0
  %v2997 = vsel %vm2892, %v2964, 0
  %v3000 = vsel %vm2892, %v2965, 0
  %3002 = vmatpush.msra.mxu0 0.0
  %3003 = vmatpush.msra.mxu0 0.0
  %3004 = vmatpush.msra.mxu0 0.0
  %3005 = vmatpush.msra.mxu0 0.0
  %3006 = vmatpush.msra.mxu0 0.0
  %3007 = vmatpush.msra.mxu0 0.0
  %3008 = vmatpush.msra.mxu0 0.0
  %3009 = vmatpush.msra.mxu0 0.0
  %3010 = vmatpush.msra.mxu0 %v2973
  %3011 = vmatpush.msra.mxu0 %v2972
  %3012 = vmatpush.msra.mxu0 %v2971
  %3013 = vmatpush.msra.mxu0 %v2970
  %3014 = vmatpush.msra.mxu0 %v2969
  %3015 = vmatpush.msra.mxu0 %v2968
  %3016 = vmatpush.msra.mxu0 %v2967
  %3017 = vmatpush.msra.mxu0 %v2966
  %3018 = vmatmul.f32.gmra.mxu0 %v2979
  %v3019 = vpop.f32.mrf.mxu0
  %v3020 = vadd.f32 %v2976, %v3019
  %3021 = vmatmul.f32.gmra.mxu0 %v2982
  %v3022 = vpop.f32.mrf.mxu0
  %v3023 = vadd.f32 %v2976, %v3022
  %3024 = vmatmul.f32.gmra.mxu0 %v2985
  %v3025 = vpop.f32.mrf.mxu0
  %v3026 = vadd.f32 %v2976, %v3025
  %3027 = vmatmul.f32.gmra.mxu0 %v2988
  %v3028 = vpop.f32.mrf.mxu0
  %v3029 = vadd.f32 %v2976, %v3028
  %3030 = vmatmul.f32.gmra.mxu0 %v2991
  %v3031 = vpop.f32.mrf.mxu0
  %v3032 = vadd.f32 %v2976, %v3031
  %3033 = vmatmul.f32.gmra.mxu0 %v2994
  %v3034 = vpop.f32.mrf.mxu0
  %v3035 = vadd.f32 %v2976, %v3034
  %3036 = vmatmul.f32.gmra.mxu0 %v2997
  %v3037 = vpop.f32.mrf.mxu0
  %v3038 = vadd.f32 %v2976, %v3037
  %3039 = vmatmul.f32.gmra.mxu0 %v3000
  %v3040 = vpop.f32.mrf.mxu0
  %v3041 = vadd.f32 %v2976, %v3040
  %3042 = vdwg.mxu0
  %3043 = vst [vmem:[%s61] sm:$0xff] %v3020
  %3044 = vst [vmem:[%s61 + $0x8] sm:$0xff] %v3023
  %3045 = vst [vmem:[%s61 + $0x10] sm:$0xff] %v3026
  %3046 = vst [vmem:[%s61 + $0x18] sm:$0xff] %v3029
  %3047 = vst [vmem:[%s61 + $0x20] sm:$0xff] %v3032
  %3048 = vst [vmem:[%s61 + $0x28] sm:$0xff] %v3035
  %3049 = vst [vmem:[%s61 + $0x30] sm:$0xff] %v3038
  %3050 = vst [vmem:[%s61 + $0x38] sm:$0xff] %v3041
  // Predicated region
  $region122: #{nemf_forward.3} parent=0 // pred_check
    _
  $region123: #{nemf_forward.3} parent=0 // pred_check_branch
    %3052 = sbr.rel (0) target = $region125
  $region124: #{nemf_forward.3} parent=0 // pred_region
    _
  $region125: #{nemf_forward.3} parent=0 // pred_fallthru
    _
  // Predicated region
  $region126: #{nemf_forward.3} parent=0 // pred_check
    _
  $region127: #{nemf_forward.3} parent=0 // pred_check_branch
    %3054 = sbr.rel (0) target = $region129
  $region128: #{nemf_forward.3} parent=0 // pred_region
    _
  $region129: #{nemf_forward.3} parent=0 // pred_fallthru
    _

</llo_original>
